<compile_context>
chip_gen: v7x
topology: tpu7x:2x2x1
jax: 0.10.0
libtpu: 0.0.40
codegen_flags: <defaults>
</compile_context>

<pallas_src>
import functools
import math

import jax
import jax.numpy as jnp
from jax.experimental import pallas as pl
from jax.experimental.pallas import tpu as pltpu


ACT_DTYPE = jnp.bfloat16          # storage dtype for activations / weights


def _vmem_limit_bytes():
    """Generation-aware scoped-VMEM budget (leave ~16 MiB headroom, cap at 96 MiB)."""
    try:
        cap = int(pltpu.get_tpu_info().vmem_capacity_bytes)
    except Exception:
        cap = 64 * 1024 * 1024    # conservative fallback (v7x per-TC VMEM)
    return int(min(max(cap - 16 * 1024 * 1024, 32 * 1024 * 1024), 96 * 1024 * 1024))


VMEM_LIMIT = _vmem_limit_bytes()


def _pick_tile(dim, cap, mult):
    """Largest legal tile <= cap: the full dim, or a divisor that is a multiple of
    `mult` (8 for sublanes, 128 for lanes). Raises instead of silently blowing the
    tile cap (VMEM hazard)."""
    if dim <= cap:
        return dim
    start = cap - (cap % mult)
    for d in range(start, 0, -mult):
        if dim % d == 0:
            return d
    raise ValueError(
        f"_pick_tile: no legal tile for dim={dim} (cap={cap}, mult={mult}); "
        "pad the dimension to a multiple of the tile granularity.")


# ----------------------------------------------------------------------------
# Pallas kernels
# ----------------------------------------------------------------------------

def _dense_kernel(x_ref, w_ref, b_ref, o_ref, acc_ref, *, activation):
    """Tiled y = x @ W + b (optionally tanh-GELU), f32 accumulation over K."""
    @pl.when(pl.program_id(2) == 0)
    def _():
        acc_ref[...] = jnp.zeros_like(acc_ref)

    acc_ref[...] += jnp.dot(x_ref[...], w_ref[...],
                            preferred_element_type=jnp.float32)

    @pl.when(pl.program_id(2) == pl.num_programs(2) - 1)
    def _():
        y = acc_ref[...] + b_ref[...].astype(jnp.float32)
        if activation == "gelu_new":
            c = math.sqrt(2.0 / math.pi)
            y = 0.5 * y * (1.0 + jnp.tanh(c * (y + 0.044715 * y * y * y)))
        o_ref[...] = y.astype(o_ref.dtype)


def dense(x, w, b, activation=None, out_dtype=None,
          tm_cap=512, tn_cap=1024, tk_cap=512):
    """x: (M, K), w: (K, N), b: (N,) -> (M, N)."""
    M, K = x.shape
    _, N = w.shape
    out_dtype = out_dtype or x.dtype
    tm = _pick_tile(M, tm_cap, 8)
    tn = _pick_tile(N, tn_cap, 128)
    tk = _pick_tile(K, tk_cap, 128)
    return pl.pallas_call(
        functools.partial(_dense_kernel, activation=activation),
        out_shape=jax.ShapeDtypeStruct((M, N), out_dtype),
        grid_spec=pltpu.PrefetchScalarGridSpec(
            num_scalar_prefetch=0,
            grid=(M // tm, N // tn, K // tk),
            in_specs=[
                pl.BlockSpec((tm, tk), lambda i, j, k: (i, k)),
                pl.BlockSpec((tk, tn), lambda i, j, k: (k, j)),
                pl.BlockSpec((1, tn), lambda i, j, k: (0, j)),
            ],
            out_specs=pl.BlockSpec((tm, tn), lambda i, j, k: (i, j)),
            scratch_shapes=[pltpu.VMEM((tm, tn), jnp.float32)],
        ),
        compiler_params=pltpu.CompilerParams(
            dimension_semantics=("parallel", "parallel", "arbitrary"),
            vmem_limit_bytes=VMEM_LIMIT,
        ),
    )(x, w, b.reshape(1, N))


def _dense_add_ln_kernel(x_ref, w_ref, b_ref, res_ref, g_ref, bln_ref,
                         o_ref, acc_ref, *, eps):
    """Fused: out = LayerNorm(x @ W + b + residual) * gamma + beta."""
    @pl.when(pl.program_id(1) == 0)
    def _():
        acc_ref[...] = jnp.zeros_like(acc_ref)

    acc_ref[...] += jnp.dot(x_ref[...], w_ref[...],
                            preferred_element_type=jnp.float32)

    @pl.when(pl.program_id(1) == pl.num_programs(1) - 1)
    def _():
        y = (acc_ref[...] + b_ref[...].astype(jnp.float32)
             + res_ref[...].astype(jnp.float32))
        mu = jnp.mean(y, axis=-1, keepdims=True)
        var = jnp.mean((y - mu) ** 2, axis=-1, keepdims=True)
        y = (y - mu) * jax.lax.rsqrt(var + eps)
        y = y * g_ref[...].astype(jnp.float32) + bln_ref[...].astype(jnp.float32)
        o_ref[...] = y.astype(o_ref.dtype)


def dense_add_ln(x, w, b, residual, gamma, beta, eps=1e-12,
                 tm_cap=512, tk_cap=512):
    """Matmul + bias + residual + LayerNorm; N (=hidden) kept whole for the LN."""
    M, K = x.shape
    _, N = w.shape
    tm = _pick_tile(M, tm_cap, 8)
    tk = _pick_tile(K, tk_cap, 128)
    return pl.pallas_call(
        functools.partial(_dense_add_ln_kernel, eps=eps),
        out_shape=jax.ShapeDtypeStruct((M, N), residual.dtype),
        grid_spec=pltpu.PrefetchScalarGridSpec(
            num_scalar_prefetch=0,
            grid=(M // tm, K // tk),
            in_specs=[
                pl.BlockSpec((tm, tk), lambda i, k: (i, k)),
                pl.BlockSpec((tk, N), lambda i, k: (k, 0)),
                pl.BlockSpec((1, N), lambda i, k: (0, 0)),
                pl.BlockSpec((tm, N), lambda i, k: (i, 0)),
                pl.BlockSpec((1, N), lambda i, k: (0, 0)),
                pl.BlockSpec((1, N), lambda i, k: (0, 0)),
            ],
            out_specs=pl.BlockSpec((tm, N), lambda i, k: (i, 0)),
            scratch_shapes=[pltpu.VMEM((tm, N), jnp.float32)],
        ),
        compiler_params=pltpu.CompilerParams(
            dimension_semantics=("parallel", "arbitrary"),
            vmem_limit_bytes=VMEM_LIMIT,
        ),
    )(x, w, b.reshape(1, N), residual, gamma.reshape(1, N), beta.reshape(1, N))


def _dense_add_ln_head_kernel(x_ref, w_ref, b_ref, res_ref, g_ref, bln_ref,
                              hw_ref, hb_ref, o_ref, logits_ref, acc_ref, *, eps):
    """Final-layer epilogue: LN(x@W + b + res) -> o_ref, plus QA head logits = LN_out @ Wh + bh."""
    @pl.when(pl.program_id(1) == 0)
    def _():
        acc_ref[...] = jnp.zeros_like(acc_ref)

    acc_ref[...] += jnp.dot(x_ref[...], w_ref[...],
                            preferred_element_type=jnp.float32)

    @pl.when(pl.program_id(1) == pl.num_programs(1) - 1)
    def _():
        y = (acc_ref[...] + b_ref[...].astype(jnp.float32)
             + res_ref[...].astype(jnp.float32))
        mu = jnp.mean(y, axis=-1, keepdims=True)
        var = jnp.mean((y - mu) ** 2, axis=-1, keepdims=True)
        y = (y - mu) * jax.lax.rsqrt(var + eps)
        y = y * g_ref[...].astype(jnp.float32) + bln_ref[...].astype(jnp.float32)
        o_ref[...] = y.astype(o_ref.dtype)
        # QA head fused into the epilogue: bf16 MXU operands, f32 accumulate.
        logits_ref[...] = (jnp.dot(y.astype(hw_ref.dtype), hw_ref[...],
                                   preferred_element_type=jnp.float32)
                           + hb_ref[...].astype(jnp.float32))


def dense_add_ln_head(x, w, b, residual, gamma, beta, head_w, head_b,
                      eps=1e-12, tm_cap=512, tk_cap=512):
    """Like dense_add_ln but also emits QA-head logits (head output lanes padded to 128)."""
    M, K = x.shape
    _, N = w.shape
    P = head_w.shape[1]
    tm = _pick_tile(M, tm_cap, 8)
    tk = _pick_tile(K, tk_cap, 128)
    return pl.pallas_call(
        functools.partial(_dense_add_ln_head_kernel, eps=eps),
        out_shape=(jax.ShapeDtypeStruct((M, N), residual.dtype),
                   jax.ShapeDtypeStruct((M, P), jnp.float32)),
        grid_spec=pltpu.PrefetchScalarGridSpec(
            num_scalar_prefetch=0,
            grid=(M // tm, K // tk),
            in_specs=[
                pl.BlockSpec((tm, tk), lambda i, k: (i, k)),
                pl.BlockSpec((tk, N), lambda i, k: (k, 0)),
                pl.BlockSpec((1, N), lambda i, k: (0, 0)),
                pl.BlockSpec((tm, N), lambda i, k: (i, 0)),
                pl.BlockSpec((1, N), lambda i, k: (0, 0)),
                pl.BlockSpec((1, N), lambda i, k: (0, 0)),
                pl.BlockSpec((N, P), lambda i, k: (0, 0)),
                pl.BlockSpec((1, P), lambda i, k: (0, 0)),
            ],
            out_specs=[
                pl.BlockSpec((tm, N), lambda i, k: (i, 0)),
                pl.BlockSpec((tm, P), lambda i, k: (i, 0)),
            ],
            scratch_shapes=[pltpu.VMEM((tm, N), jnp.float32)],
        ),
        compiler_params=pltpu.CompilerParams(
            dimension_semantics=("parallel", "arbitrary"),
            vmem_limit_bytes=VMEM_LIMIT,
        ),
    )(x, w, b.reshape(1, N), residual, gamma.reshape(1, N), beta.reshape(1, N),
      head_w, head_b.reshape(1, P))


def _embed_ln_kernel(w_ref, p_ref, t_ref, g_ref, b_ref, o_ref, *, eps):
    """Fused embeddings: LayerNorm(word + pos + type) -- no f32 HBM round-trip."""
    x = (w_ref[0].astype(jnp.float32) + p_ref[...].astype(jnp.float32)
         + t_ref[0].astype(jnp.float32))
    mu = jnp.mean(x, axis=-1, keepdims=True)
    var = jnp.mean((x - mu) ** 2, axis=-1, keepdims=True)
    y = (x - mu) * jax.lax.rsqrt(var + eps)
    y = y * g_ref[...].astype(jnp.float32) + b_ref[...].astype(jnp.float32)
    o_ref[0] = y.astype(o_ref.dtype)


def embed_add_ln(word_e, pos_e, type_e, gamma, beta, eps=1e-12, out_dtype=ACT_DTYPE):
    """word_e/type_e: (B, S, H) bf16 gathers; pos_e: (S, H) bf16. Returns (B, S, H) bf16."""
    B, S, H = word_e.shape
    return pl.pallas_call(
        functools.partial(_embed_ln_kernel, eps=eps),
        out_shape=jax.ShapeDtypeStruct((B, S, H), out_dtype),
        grid_spec=pltpu.PrefetchScalarGridSpec(
            num_scalar_prefetch=0,
            grid=(B,),
            in_specs=[
                pl.BlockSpec((1, S, H), lambda b: (b, 0, 0)),
                pl.BlockSpec((S, H), lambda b: (0, 0)),
                pl.BlockSpec((1, S, H), lambda b: (b, 0, 0)),
                pl.BlockSpec((1, H), lambda b: (0, 0)),
                pl.BlockSpec((1, H), lambda b: (0, 0)),
            ],
            out_specs=pl.BlockSpec((1, S, H), lambda b: (b, 0, 0)),
        ),
        compiler_params=pltpu.CompilerParams(
            dimension_semantics=("parallel",),
            vmem_limit_bytes=VMEM_LIMIT,
        ),
    )(word_e, pos_e, type_e, gamma.reshape(1, H), beta.reshape(1, H))


def _attn_kernel(qkv_ref, bias_ref, o_ref, acc_ref, *, num_heads, hidden, scale):
    """Per batch element: all heads, softmax(q k^T * scale + mask_bias) @ v.

    bf16 MXU operands, f32 accumulation; per-head results written straight into
    a VMEM (S, H) f32 scratch (bounds live ranges), then one lane-dense store.
    """
    qkv = qkv_ref[0]                             # (S, 3H) bf16 -- single contiguous DMA
    bias = bias_ref[0].astype(jnp.float32)       # (1, S) -> broadcasts over queries
    dh = hidden // num_heads
    contract_last = (((1,), (1,)), ((), ()))     # contract last dims (no k.T copy)

    # TODO(synk): flash-style key tiling + online softmax for long sequences (S >= 512).
    for h in range(num_heads):                   # static head loop; scratch bounds liveness
        q = qkv[:, h * dh:(h + 1) * dh] * scale                          # (S, dh) bf16
        k = qkv[:, hidden + h * dh: hidden + (h + 1) * dh]               # (S, dh) bf16
        v = qkv[:, 2 * hidden + h * dh: 2 * hidden + (h + 1) * dh]       # (S, dh) bf16
        s = jax.lax.dot_general(q, k, contract_last,
                                preferred_element_type=jnp.float32)      # (S, S) f32
        s = s + bias
        s = s - jnp.max(s, axis=-1, keepdims=True)
        p = jnp.exp(s)
        p = p * pl.reciprocal(jnp.sum(p, axis=-1, keepdims=True), approx=True)
        acc_ref[:, h * dh:(h + 1) * dh] = jnp.dot(
            p.astype(qkv.dtype), v, preferred_element_type=jnp.float32)

    o_ref[0] = acc_ref[...].astype(o_ref.dtype)  # single lane-dense (S, H) store


def multihead_attention(qkv, mask_bias, num_heads, hidden):
    """qkv: (B, S, 3*H) fused projections; mask_bias: (B, 1, S). Returns (B, S, H)."""
    B, S, H3 = qkv.shape
    dh = hidden // num_heads
    scale = 1.0 / math.sqrt(dh)
    return pl.pallas_call(
        functools.partial(_attn_kernel, num_heads=num_heads, hidden=hidden, scale=scale),
        out_shape=jax.ShapeDtypeStruct((B, S, hidden), qkv.dtype),
        grid_spec=pltpu.PrefetchScalarGridSpec(
            num_scalar_prefetch=0,
            grid=(B,),
            in_specs=[
                pl.BlockSpec((1, S, H3), lambda b: (b, 0, 0)),   # one qkv DMA per step
                pl.BlockSpec((1, 1, S), lambda b: (b, 0, 0)),    # additive mask
            ],
            out_specs=pl.BlockSpec((1, S, hidden), lambda b: (b, 0, 0)),
            scratch_shapes=[pltpu.VMEM((S, hidden), jnp.float32)],
        ),
        compiler_params=pltpu.CompilerParams(
            dimension_semantics=("parallel",),
            vmem_limit_bytes=VMEM_LIMIT,
        ),
    )(qkv, mask_bias)


# ----------------------------------------------------------------------------
# BERT-for-QA forward (per-layer weights, BERT-style)
# ----------------------------------------------------------------------------

def init_params(key, cfg):
    H, I = cfg["hidden"], cfg["intermediate"]
    wdt = ACT_DTYPE
    keys = iter(jax.random.split(key, 4 + 6 * cfg["num_layers"]))
    n = lambda k, shape: (0.02 * jax.random.normal(k, shape)).astype(wdt)

    params = {
        "word_emb": n(next(keys), (cfg["vocab"], H)),
        "pos_emb": n(next(keys), (cfg["max_pos"], H)),
        "type_emb": n(next(keys), (cfg["type_vocab"], H)),
        "emb_ln_g": jnp.ones((H,), jnp.float32),
        "emb_ln_b": jnp.zeros((H,), jnp.float32),
        "layers": [],
    }
    for _ in range(cfg["num_layers"]):
        qw, kw, vw = (n(next(keys), (H, H)) for _ in range(3))
        layer = {
            "qkv_w": jnp.concatenate([qw, kw, vw], axis=1),   # (H, 3H) fused QKV
            "qkv_b": jnp.zeros((3 * H,), wdt),
            "attn_o_w": n(next(keys), (H, H)),
            "attn_o_b": jnp.zeros((H,), wdt),
            "attn_ln_g": jnp.ones((H,), jnp.float32),
            "attn_ln_b": jnp.zeros((H,), jnp.float32),
            "ffn_w": n(next(keys), (H, I)),
            "ffn_b": jnp.zeros((I,), wdt),
            "ffn_o_w": n(next(keys), (I, H)),
            "ffn_o_b": jnp.zeros((H,), wdt),
            "ffn_ln_g": jnp.ones((H,), jnp.float32),
            "ffn_ln_b": jnp.zeros((H,), jnp.float32),
        }
        params["layers"].append(layer)

    # QA head nn.Linear(hidden, 2), padded to 128 output lanes for lane-dense stores.
    # Padding columns MUST stay zero (bias too) so lanes 2..127 never leak into logits.
    fc_w = n(next(keys), (H, 2))
    params["fc_w_pad"] = jnp.zeros((H, 128), ACT_DTYPE).at[:, :2].set(fc_w)
    params["fc_b_pad"] = jnp.zeros((128,), jnp.float32)
    return params


def bert_for_qa(params, input_ids, attention_mask, token_type_ids, cfg):
    B, S = input_ids.shape
    H = cfg["hidden"]
    nh = cfg["heads"]

    # --- embeddings: gathers are XLA glue (bf16); add + LayerNorm fused in Pallas ---
    word_e = params["word_emb"][input_ids]            # (B, S, H) bf16
    type_e = params["type_emb"][token_type_ids]       # (B, S, H) bf16
    pos_e = params["pos_emb"][:S]                      # (S, H)   bf16
    x = embed_add_ln(word_e, pos_e, type_e,
                     params["emb_ln_g"], params["emb_ln_b"]).reshape(B * S, H)

    # additive attention-mask bias, HF-style: (1 - mask) * -10000, broadcast over queries
    mask_bias = ((1.0 - attention_mask.astype(jnp.float32)) * -10000.0).reshape(B, 1, S)

    # --- encoder layers (per-layer weights, BERT-style) ---
    n_layers = len(params["layers"])
    logits = None
    for li, layer in enumerate(params["layers"]):
        qkv = dense(x, layer["qkv_w"], layer["qkv_b"])                  # (B*S, 3H)
        ctx = multihead_attention(qkv.reshape(B, S, 3 * H), mask_bias, nh, H)
        x = dense_add_ln(ctx.reshape(B * S, H),
                         layer["attn_o_w"], layer["attn_o_b"],
                         x, layer["attn_ln_g"], layer["attn_ln_b"])
        h1 = dense(x, layer["ffn_w"], layer["ffn_b"], activation="gelu_new")
        if li == n_layers - 1:
            # Final layer: QA head fused into the dense+residual+LN epilogue.
            # (dropout is identity at inference)
            x, logits = dense_add_ln_head(
                h1, layer["ffn_o_w"], layer["ffn_o_b"],
                x, layer["ffn_ln_g"], layer["ffn_ln_b"],
                params["fc_w_pad"], params["fc_b_pad"])
        else:
            x = dense_add_ln(h1, layer["ffn_o_w"], layer["ffn_o_b"],
                             x, layer["ffn_ln_g"], layer["ffn_ln_b"])

    logits = logits[:, :2].reshape(B, S, 2)
    start_logits = logits[..., 0]   # split(1, dim=-1) -> squeeze(-1)
    end_logits = logits[..., 1]
    return start_logits, end_logits


# ----------------------------------------------------------------------------
# main
# ----------------------------------------------------------------------------

if __name__ == "__main__":
    cfg = dict(vocab=100, type_vocab=2, max_pos=64,
               hidden=128, intermediate=512,
               heads=4, num_layers=2)

    B, S = 2, 16
    key = jax.random.PRNGKey(0)
    k_param, k_ids, k_types = jax.random.split(key, 3)

    params = init_params(k_param, cfg)
    input_ids = jax.random.randint(k_ids, (B, S), 0, cfg["vocab"], dtype=jnp.int32)
    token_type_ids = jax.random.randint(k_types, (B, S), 0, cfg["type_vocab"], dtype=jnp.int32)
    # mask out the tail of the second example to exercise the attention masking
    lengths = jnp.array([S, S - 4], dtype=jnp.int32)
    attention_mask = (jnp.arange(S)[None, :] < lengths[:, None]).astype(jnp.int32)

    start_logits, end_logits = jax.jit(
        functools.partial(bert_for_qa, cfg=cfg)
    )(params, input_ids, attention_mask, token_type_ids)

    jax.block_until_ready((start_logits, end_logits))
    assert start_logits.shape == (B, S) and end_logits.shape == (B, S)
    assert jnp.all(jnp.isfinite(start_logits)) and jnp.all(jnp.isfinite(end_logits))
    print("KERNEL_OK")
</pallas_src>

<mosaic_0001>
module attributes {stable_mosaic.version = 11 : i64} {
  func.func @_attn_kernel(%arg0: i32, %arg1: memref<1x16x384xbf16, #tpu.memory_space<vmem>>, %arg2: memref<1x1x16xf32, #tpu.memory_space<vmem>>, %arg3: memref<1x16x128xbf16, #tpu.memory_space<vmem>>, %arg4: memref<16x128xf32, #tpu.memory_space<vmem>>) attributes {dimension_semantics = [#tpu.dimension_semantics<parallel>], iteration_bounds = array<i64: 2>, scalar_prefetch = 0 : i64, scratch_operands = 1 : i64, tpu.core_type = #tpu.core_type<tc>, window_params = [{transform_indices = @transform_0, window_bounds = array<i64: 1, 16, 384>}, {transform_indices = @transform_1, window_bounds = array<i64: 1, 1, 16>}, {transform_indices = @transform_2, window_bounds = array<i64: 1, 16, 128>}]} {
    %c0 = arith.constant 0 : index
    %c0_0 = arith.constant 0 : index
    %c0_1 = arith.constant 0 : index
    %0 = vector.load %arg1[%c0, %c0_0, %c0_1] : memref<1x16x384xbf16, #tpu.memory_space<vmem>>, vector<1x16x384xbf16>
    %1 = vector.shape_cast %0 : vector<1x16x384xbf16> to vector<16x384xbf16>
    %c0_2 = arith.constant 0 : index
    %c0_3 = arith.constant 0 : index
    %c0_4 = arith.constant 0 : index
    %2 = vector.load %arg2[%c0_2, %c0_3, %c0_4] : memref<1x1x16xf32, #tpu.memory_space<vmem>>, vector<1x1x16xf32>
    %3 = vector.shape_cast %2 : vector<1x1x16xf32> to vector<1x16xf32>
    %4 = vector.extract_strided_slice %1 {offsets = [0, 0], sizes = [16, 32], strides = [1, 1]} : vector<16x384xbf16> to vector<16x32xbf16>
    %cst = arith.constant 1.767580e-01 : bf16
    %5 = vector.broadcast %cst : bf16 to vector<16x32xbf16>
    %6 = arith.mulf %4, %5 : vector<16x32xbf16>
    %7 = vector.extract_strided_slice %1 {offsets = [0, 128], sizes = [16, 32], strides = [1, 1]} : vector<16x384xbf16> to vector<16x32xbf16>
    %8 = vector.extract_strided_slice %1 {offsets = [0, 256], sizes = [16, 32], strides = [1, 1]} : vector<16x384xbf16> to vector<16x32xbf16>
    %cst_5 = arith.constant dense<0.000000e+00> : vector<16x16xf32>
    %9 = tpu.matmul %6, %7, %cst_5 {dimension_numbers = #tpu.dot_dimension_numbers<[1], [1], [0], [0], [0, 0, 1, 0], [], []>} : vector<16x32xbf16>, vector<16x32xbf16>, vector<16x16xf32> -> vector<16x16xf32>
    %10 = vector.broadcast %3 : vector<1x16xf32> to vector<16x16xf32>
    %11 = arith.addf %9, %10 : vector<16x16xf32>
    %cst_6 = arith.constant dense<0xFF800000> : vector<16xf32>
    %12 = vector.multi_reduction <maximumf>, %11, %cst_6 [1] : vector<16x16xf32> to vector<16xf32>
    %13 = vector.shape_cast %12 : vector<16xf32> to vector<16x1xf32>
    %14 = vector.broadcast %13 : vector<16x1xf32> to vector<16x16xf32>
    %15 = arith.subf %11, %14 : vector<16x16xf32>
    %16 = math.exp %15 : vector<16x16xf32>
    %cst_7 = arith.constant dense<0.000000e+00> : vector<16xf32>
    %17 = vector.multi_reduction <add>, %16, %cst_7 [1] : vector<16x16xf32> to vector<16xf32>
    %18 = vector.shape_cast %17 : vector<16xf32> to vector<16x1xf32>
    %19 = tpu.reciprocal %18 {approx = true} : vector<16x1xf32> -> vector<16x1xf32>
    %20 = vector.broadcast %19 : vector<16x1xf32> to vector<16x16xf32>
    %21 = arith.mulf %16, %20 : vector<16x16xf32>
    %22 = arith.truncf %21 : vector<16x16xf32> to vector<16x16xbf16>
    %cst_8 = arith.constant dense<0.000000e+00> : vector<16x32xf32>
    %23 = tpu.matmul %22, %8, %cst_8 {dimension_numbers = #tpu.dot_dimension_numbers<[1], [0], [0], [1], [0, 0, 1, 1], [], []>} : vector<16x16xbf16>, vector<16x32xbf16>, vector<16x32xf32> -> vector<16x32xf32>
    %c0_9 = arith.constant 0 : index
    %c0_10 = arith.constant 0 : index
    %24 = vector.load %arg4[%c0_9, %c0_10] : memref<16x128xf32, #tpu.memory_space<vmem>>, vector<16x32xf32>
    tpu.vector_store %arg4[%c0_9, %c0_10], %23 {strides = array<i32>} : memref<16x128xf32, #tpu.memory_space<vmem>>, vector<16x32xf32>,
    %25 = vector.extract_strided_slice %1 {offsets = [0, 32], sizes = [16, 32], strides = [1, 1]} : vector<16x384xbf16> to vector<16x32xbf16>
    %cst_11 = arith.constant 1.767580e-01 : bf16
    %26 = vector.broadcast %cst_11 : bf16 to vector<16x32xbf16>
    %27 = arith.mulf %25, %26 : vector<16x32xbf16>
    %28 = vector.extract_strided_slice %1 {offsets = [0, 160], sizes = [16, 32], strides = [1, 1]} : vector<16x384xbf16> to vector<16x32xbf16>
    %29 = vector.extract_strided_slice %1 {offsets = [0, 288], sizes = [16, 32], strides = [1, 1]} : vector<16x384xbf16> to vector<16x32xbf16>
    %cst_12 = arith.constant dense<0.000000e+00> : vector<16x16xf32>
    %30 = tpu.matmul %27, %28, %cst_12 {dimension_numbers = #tpu.dot_dimension_numbers<[1], [1], [0], [0], [0, 0, 1, 0], [], []>} : vector<16x32xbf16>, vector<16x32xbf16>, vector<16x16xf32> -> vector<16x16xf32>
    %31 = vector.broadcast %3 : vector<1x16xf32> to vector<16x16xf32>
    %32 = arith.addf %30, %31 : vector<16x16xf32>
    %cst_13 = arith.constant dense<0xFF800000> : vector<16xf32>
    %33 = vector.multi_reduction <maximumf>, %32, %cst_13 [1] : vector<16x16xf32> to vector<16xf32>
    %34 = vector.shape_cast %33 : vector<16xf32> to vector<16x1xf32>
    %35 = vector.broadcast %34 : vector<16x1xf32> to vector<16x16xf32>
    %36 = arith.subf %32, %35 : vector<16x16xf32>
    %37 = math.exp %36 : vector<16x16xf32>
    %cst_14 = arith.constant dense<0.000000e+00> : vector<16xf32>
    %38 = vector.multi_reduction <add>, %37, %cst_14 [1] : vector<16x16xf32> to vector<16xf32>
    %39 = vector.shape_cast %38 : vector<16xf32> to vector<16x1xf32>
    %40 = tpu.reciprocal %39 {approx = true} : vector<16x1xf32> -> vector<16x1xf32>
    %41 = vector.broadcast %40 : vector<16x1xf32> to vector<16x16xf32>
    %42 = arith.mulf %37, %41 : vector<16x16xf32>
    %43 = arith.truncf %42 : vector<16x16xf32> to vector<16x16xbf16>
    %cst_15 = arith.constant dense<0.000000e+00> : vector<16x32xf32>
    %44 = tpu.matmul %43, %29, %cst_15 {dimension_numbers = #tpu.dot_dimension_numbers<[1], [0], [0], [1], [0, 0, 1, 1], [], []>} : vector<16x16xbf16>, vector<16x32xbf16>, vector<16x32xf32> -> vector<16x32xf32>
    %c0_16 = arith.constant 0 : index
    %c32 = arith.constant 32 : index
    %45 = vector.load %arg4[%c0_16, %c32] : memref<16x128xf32, #tpu.memory_space<vmem>>, vector<16x32xf32>
    tpu.vector_store %arg4[%c0_16, %c32], %44 {strides = array<i32>} : memref<16x128xf32, #tpu.memory_space<vmem>>, vector<16x32xf32>,
    %46 = vector.extract_strided_slice %1 {offsets = [0, 64], sizes = [16, 32], strides = [1, 1]} : vector<16x384xbf16> to vector<16x32xbf16>
    %cst_17 = arith.constant 1.767580e-01 : bf16
    %47 = vector.broadcast %cst_17 : bf16 to vector<16x32xbf16>
    %48 = arith.mulf %46, %47 : vector<16x32xbf16>
    %49 = vector.extract_strided_slice %1 {offsets = [0, 192], sizes = [16, 32], strides = [1, 1]} : vector<16x384xbf16> to vector<16x32xbf16>
    %50 = vector.extract_strided_slice %1 {offsets = [0, 320], sizes = [16, 32], strides = [1, 1]} : vector<16x384xbf16> to vector<16x32xbf16>
    %cst_18 = arith.constant dense<0.000000e+00> : vector<16x16xf32>
    %51 = tpu.matmul %48, %49, %cst_18 {dimension_numbers = #tpu.dot_dimension_numbers<[1], [1], [0], [0], [0, 0, 1, 0], [], []>} : vector<16x32xbf16>, vector<16x32xbf16>, vector<16x16xf32> -> vector<16x16xf32>
    %52 = vector.broadcast %3 : vector<1x16xf32> to vector<16x16xf32>
    %53 = arith.addf %51, %52 : vector<16x16xf32>
    %cst_19 = arith.constant dense<0xFF800000> : vector<16xf32>
    %54 = vector.multi_reduction <maximumf>, %53, %cst_19 [1] : vector<16x16xf32> to vector<16xf32>
    %55 = vector.shape_cast %54 : vector<16xf32> to vector<16x1xf32>
    %56 = vector.broadcast %55 : vector<16x1xf32> to vector<16x16xf32>
    %57 = arith.subf %53, %56 : vector<16x16xf32>
    %58 = math.exp %57 : vector<16x16xf32>
    %cst_20 = arith.constant dense<0.000000e+00> : vector<16xf32>
    %59 = vector.multi_reduction <add>, %58, %cst_20 [1] : vector<16x16xf32> to vector<16xf32>
    %60 = vector.shape_cast %59 : vector<16xf32> to vector<16x1xf32>
    %61 = tpu.reciprocal %60 {approx = true} : vector<16x1xf32> -> vector<16x1xf32>
    %62 = vector.broadcast %61 : vector<16x1xf32> to vector<16x16xf32>
    %63 = arith.mulf %58, %62 : vector<16x16xf32>
    %64 = arith.truncf %63 : vector<16x16xf32> to vector<16x16xbf16>
    %cst_21 = arith.constant dense<0.000000e+00> : vector<16x32xf32>
    %65 = tpu.matmul %64, %50, %cst_21 {dimension_numbers = #tpu.dot_dimension_numbers<[1], [0], [0], [1], [0, 0, 1, 1], [], []>} : vector<16x16xbf16>, vector<16x32xbf16>, vector<16x32xf32> -> vector<16x32xf32>
    %c0_22 = arith.constant 0 : index
    %c64 = arith.constant 64 : index
    %66 = vector.load %arg4[%c0_22, %c64] : memref<16x128xf32, #tpu.memory_space<vmem>>, vector<16x32xf32>
    tpu.vector_store %arg4[%c0_22, %c64], %65 {strides = array<i32>} : memref<16x128xf32, #tpu.memory_space<vmem>>, vector<16x32xf32>,
    %67 = vector.extract_strided_slice %1 {offsets = [0, 96], sizes = [16, 32], strides = [1, 1]} : vector<16x384xbf16> to vector<16x32xbf16>
    %cst_23 = arith.constant 1.767580e-01 : bf16
    %68 = vector.broadcast %cst_23 : bf16 to vector<16x32xbf16>
    %69 = arith.mulf %67, %68 : vector<16x32xbf16>
    %70 = vector.extract_strided_slice %1 {offsets = [0, 224], sizes = [16, 32], strides = [1, 1]} : vector<16x384xbf16> to vector<16x32xbf16>
    %71 = vector.extract_strided_slice %1 {offsets = [0, 352], sizes = [16, 32], strides = [1, 1]} : vector<16x384xbf16> to vector<16x32xbf16>
    %cst_24 = arith.constant dense<0.000000e+00> : vector<16x16xf32>
    %72 = tpu.matmul %69, %70, %cst_24 {dimension_numbers = #tpu.dot_dimension_numbers<[1], [1], [0], [0], [0, 0, 1, 0], [], []>} : vector<16x32xbf16>, vector<16x32xbf16>, vector<16x16xf32> -> vector<16x16xf32>
    %73 = vector.broadcast %3 : vector<1x16xf32> to vector<16x16xf32>
    %74 = arith.addf %72, %73 : vector<16x16xf32>
    %cst_25 = arith.constant dense<0xFF800000> : vector<16xf32>
    %75 = vector.multi_reduction <maximumf>, %74, %cst_25 [1] : vector<16x16xf32> to vector<16xf32>
    %76 = vector.shape_cast %75 : vector<16xf32> to vector<16x1xf32>
    %77 = vector.broadcast %76 : vector<16x1xf32> to vector<16x16xf32>
    %78 = arith.subf %74, %77 : vector<16x16xf32>
    %79 = math.exp %78 : vector<16x16xf32>
    %cst_26 = arith.constant dense<0.000000e+00> : vector<16xf32>
    %80 = vector.multi_reduction <add>, %79, %cst_26 [1] : vector<16x16xf32> to vector<16xf32>
    %81 = vector.shape_cast %80 : vector<16xf32> to vector<16x1xf32>
    %82 = tpu.reciprocal %81 {approx = true} : vector<16x1xf32> -> vector<16x1xf32>
    %83 = vector.broadcast %82 : vector<16x1xf32> to vector<16x16xf32>
    %84 = arith.mulf %79, %83 : vector<16x16xf32>
    %85 = arith.truncf %84 : vector<16x16xf32> to vector<16x16xbf16>
    %cst_27 = arith.constant dense<0.000000e+00> : vector<16x32xf32>
    %86 = tpu.matmul %85, %71, %cst_27 {dimension_numbers = #tpu.dot_dimension_numbers<[1], [0], [0], [1], [0, 0, 1, 1], [], []>} : vector<16x16xbf16>, vector<16x32xbf16>, vector<16x32xf32> -> vector<16x32xf32>
    %c0_28 = arith.constant 0 : index
    %c96 = arith.constant 96 : index
    %87 = vector.load %arg4[%c0_28, %c96] : memref<16x128xf32, #tpu.memory_space<vmem>>, vector<16x32xf32>
    tpu.vector_store %arg4[%c0_28, %c96], %86 {strides = array<i32>} : memref<16x128xf32, #tpu.memory_space<vmem>>, vector<16x32xf32>,
    %c0_29 = arith.constant 0 : index
    %c0_30 = arith.constant 0 : index
    %88 = vector.load %arg4[%c0_29, %c0_30] : memref<16x128xf32, #tpu.memory_space<vmem>>, vector<16x128xf32>
    %89 = arith.truncf %88 : vector<16x128xf32> to vector<16x128xbf16>
    %c0_31 = arith.constant 0 : index
    %c0_32 = arith.constant 0 : index
    %c0_33 = arith.constant 0 : index
    %90 = vector.load %arg3[%c0_31, %c0_32, %c0_33] : memref<1x16x128xbf16, #tpu.memory_space<vmem>>, vector<1x16x128xbf16>
    %91 = vector.shape_cast %90 : vector<1x16x128xbf16> to vector<16x128xbf16>
    %92 = vector.shape_cast %89 : vector<16x128xbf16> to vector<1x16x128xbf16>
    tpu.vector_store %arg3[%c0_31, %c0_32, %c0_33], %92 {strides = array<i32>} : memref<1x16x128xbf16, #tpu.memory_space<vmem>>, vector<1x16x128xbf16>,
    return
  }
  func.func @transform_0(%arg0: i32) -> (i32, i32, i32) {
    %c0_i32 = arith.constant 0 : i32
    %c0_i32_0 = arith.constant 0 : i32
    %c0_i32_1 = arith.constant 0 : i32
    return %arg0, %c0_i32, %c0_i32_0 : i32, i32, i32
  }
  func.func @transform_1(%arg0: i32) -> (i32, i32, i32) {
    %c0_i32 = arith.constant 0 : i32
    %c0_i32_0 = arith.constant 0 : i32
    %c0_i32_1 = arith.constant 0 : i32
    return %arg0, %c0_i32, %c0_i32_0 : i32, i32, i32
  }
  func.func @transform_2(%arg0: i32) -> (i32, i32, i32) {
    %c0_i32 = arith.constant 0 : i32
    %c0_i32_0 = arith.constant 0 : i32
    %c0_i32_1 = arith.constant 0 : i32
    return %arg0, %c0_i32, %c0_i32_0 : i32, i32, i32
  }
}

module attributes {stable_mosaic.version = 11 : i64} {
  func.func @_dense_kernel(%arg0: i32, %arg1: i32, %arg2: i32, %arg3: memref<32x128xbf16, #tpu.memory_space<vmem>>, %arg4: memref<128x384xbf16, #tpu.memory_space<vmem>>, %arg5: memref<1x384xbf16, #tpu.memory_space<vmem>>, %arg6: memref<32x384xbf16, #tpu.memory_space<vmem>>, %arg7: memref<32x384xf32, #tpu.memory_space<vmem>>) attributes {dimension_semantics = [#tpu.dimension_semantics<parallel>, #tpu.dimension_semantics<parallel>, #tpu.dimension_semantics<arbitrary>], iteration_bounds = array<i64: 1, 1, 1>, scalar_prefetch = 0 : i64, scratch_operands = 1 : i64, tpu.core_type = #tpu.core_type<tc>, window_params = [{transform_indices = @transform_0, window_bounds = array<i64: 32, 128>}, {transform_indices = @transform_1, window_bounds = array<i64: 128, 384>}, {transform_indices = @transform_2, window_bounds = array<i64: 1, 384>}, {transform_indices = @transform_3, window_bounds = array<i64: 32, 384>}]} {
    %c0_i32 = arith.constant 0 : i32
    %0 = arith.cmpi eq, %arg2, %c0_i32 : i32
    %1 = arith.extui %0 : i1 to i32
    %c0_i32_0 = arith.constant 0 : i32
    %2 = arith.cmpi ne, %1, %c0_i32_0 : i32
    scf.if %2 {
      %cst_10 = arith.constant 0.000000e+00 : f32
      %12 = vector.broadcast %cst_10 : f32 to vector<32x384xf32>
      %c0_11 = arith.constant 0 : index
      %c0_12 = arith.constant 0 : index
      %13 = vector.load %arg7[%c0_11, %c0_12] : memref<32x384xf32, #tpu.memory_space<vmem>>, vector<32x384xf32>
      tpu.vector_store %arg7[%c0_11, %c0_12], %12 {strides = array<i32>} : memref<32x384xf32, #tpu.memory_space<vmem>>, vector<32x384xf32>,
    } else {
    }
    %c0 = arith.constant 0 : index
    %c0_1 = arith.constant 0 : index
    %3 = vector.load %arg7[%c0, %c0_1] : memref<32x384xf32, #tpu.memory_space<vmem>>, vector<32x384xf32>
    %c0_2 = arith.constant 0 : index
    %c0_3 = arith.constant 0 : index
    %4 = vector.load %arg3[%c0_2, %c0_3] : memref<32x128xbf16, #tpu.memory_space<vmem>>, vector<32x128xbf16>
    %c0_4 = arith.constant 0 : index
    %c0_5 = arith.constant 0 : index
    %5 = vector.load %arg4[%c0_4, %c0_5] : memref<128x384xbf16, #tpu.memory_space<vmem>>, vector<128x384xbf16>
    %cst = arith.constant dense<0.000000e+00> : vector<32x384xf32>
    %6 = tpu.matmul %4, %5, %cst {dimension_numbers = #tpu.dot_dimension_numbers<[1], [0], [0], [1], [0, 0, 1, 1], [], []>} : vector<32x128xbf16>, vector<128x384xbf16>, vector<32x384xf32> -> vector<32x384xf32>
    %7 = arith.addf %3, %6 : vector<32x384xf32>
    %c0_6 = arith.constant 0 : index
    %c0_7 = arith.constant 0 : index
    %8 = vector.load %arg7[%c0_6, %c0_7] : memref<32x384xf32, #tpu.memory_space<vmem>>, vector<32x384xf32>
    tpu.vector_store %arg7[%c0_6, %c0_7], %7 {strides = array<i32>} : memref<32x384xf32, #tpu.memory_space<vmem>>, vector<32x384xf32>,
    %c0_i32_8 = arith.constant 0 : i32
    %9 = arith.cmpi eq, %arg2, %c0_i32_8 : i32
    %10 = arith.extui %9 : i1 to i32
    %c0_i32_9 = arith.constant 0 : i32
    %11 = arith.cmpi ne, %10, %c0_i32_9 : i32
    scf.if %11 {
      %c0_10 = arith.constant 0 : index
      %c0_11 = arith.constant 0 : index
      %12 = vector.load %arg7[%c0_10, %c0_11] : memref<32x384xf32, #tpu.memory_space<vmem>>, vector<32x384xf32>
      %c0_12 = arith.constant 0 : index
      %c0_13 = arith.constant 0 : index
      %13 = vector.load %arg5[%c0_12, %c0_13] : memref<1x384xbf16, #tpu.memory_space<vmem>>, vector<1x384xbf16>
      %14 = arith.extf %13 : vector<1x384xbf16> to vector<1x384xf32>
      %15 = vector.broadcast %14 : vector<1x384xf32> to vector<32x384xf32>
      %16 = arith.addf %12, %15 : vector<32x384xf32>
      %17 = arith.truncf %16 : vector<32x384xf32> to vector<32x384xbf16>
      %c0_14 = arith.constant 0 : index
      %c0_15 = arith.constant 0 : index
      %18 = vector.load %arg6[%c0_14, %c0_15] : memref<32x384xbf16, #tpu.memory_space<vmem>>, vector<32x384xbf16>
      tpu.vector_store %arg6[%c0_14, %c0_15], %17 {strides = array<i32>} : memref<32x384xbf16, #tpu.memory_space<vmem>>, vector<32x384xbf16>,
    } else {
    }
    return
  }
  func.func @transform_0(%arg0: i32, %arg1: i32, %arg2: i32) -> (i32, i32) {
    %c0_i32 = arith.constant 0 : i32
    return %arg0, %arg2 : i32, i32
  }
  func.func @transform_1(%arg0: i32, %arg1: i32, %arg2: i32) -> (i32, i32) {
    %c0_i32 = arith.constant 0 : i32
    return %arg2, %arg1 : i32, i32
  }
  func.func @transform_2(%arg0: i32, %arg1: i32, %arg2: i32) -> (i32, i32) {
    %c0_i32 = arith.constant 0 : i32
    %c0_i32_0 = arith.constant 0 : i32
    return %c0_i32, %arg1 : i32, i32
  }
  func.func @transform_3(%arg0: i32, %arg1: i32, %arg2: i32) -> (i32, i32) {
    %c0_i32 = arith.constant 0 : i32
    return %arg0, %arg1 : i32, i32
  }
}

module attributes {stable_mosaic.version = 11 : i64} {
  func.func @_embed_ln_kernel(%arg0: i32, %arg1: memref<1x16x128xbf16, #tpu.memory_space<vmem>>, %arg2: memref<16x128xbf16, #tpu.memory_space<vmem>>, %arg3: memref<1x16x128xbf16, #tpu.memory_space<vmem>>, %arg4: memref<1x128xf32, #tpu.memory_space<vmem>>, %arg5: memref<1x128xf32, #tpu.memory_space<vmem>>, %arg6: memref<1x16x128xbf16, #tpu.memory_space<vmem>>) attributes {dimension_semantics = [#tpu.dimension_semantics<parallel>], iteration_bounds = array<i64: 2>, scalar_prefetch = 0 : i64, scratch_operands = 0 : i64, tpu.core_type = #tpu.core_type<tc>, window_params = [{transform_indices = @transform_0, window_bounds = array<i64: 1, 16, 128>}, {pipeline_mode = #tpu.pipeline_mode<synchronous>, transform_indices = @transform_1, window_bounds = array<i64: 16, 128>}, {transform_indices = @transform_2, window_bounds = array<i64: 1, 16, 128>}, {pipeline_mode = #tpu.pipeline_mode<synchronous>, transform_indices = @transform_3, window_bounds = array<i64: 1, 128>}, {pipeline_mode = #tpu.pipeline_mode<synchronous>, transform_indices = @transform_4, window_bounds = array<i64: 1, 128>}, {transform_indices = @transform_5, window_bounds = array<i64: 1, 16, 128>}]} {
    %c0 = arith.constant 0 : index
    %c0_0 = arith.constant 0 : index
    %c0_1 = arith.constant 0 : index
    %0 = vector.load %arg1[%c0, %c0_0, %c0_1] : memref<1x16x128xbf16, #tpu.memory_space<vmem>>, vector<1x16x128xbf16>
    %1 = vector.shape_cast %0 : vector<1x16x128xbf16> to vector<16x128xbf16>
    %2 = arith.extf %1 : vector<16x128xbf16> to vector<16x128xf32>
    %c0_2 = arith.constant 0 : index
    %c0_3 = arith.constant 0 : index
    %3 = vector.load %arg2[%c0_2, %c0_3] : memref<16x128xbf16, #tpu.memory_space<vmem>>, vector<16x128xbf16>
    %4 = arith.extf %3 : vector<16x128xbf16> to vector<16x128xf32>
    %5 = arith.addf %2, %4 : vector<16x128xf32>
    %c0_4 = arith.constant 0 : index
    %c0_5 = arith.constant 0 : index
    %c0_6 = arith.constant 0 : index
    %6 = vector.load %arg3[%c0_4, %c0_5, %c0_6] : memref<1x16x128xbf16, #tpu.memory_space<vmem>>, vector<1x16x128xbf16>
    %7 = vector.shape_cast %6 : vector<1x16x128xbf16> to vector<16x128xbf16>
    %8 = arith.extf %7 : vector<16x128xbf16> to vector<16x128xf32>
    %9 = arith.addf %5, %8 : vector<16x128xf32>
    %cst = arith.constant dense<0.000000e+00> : vector<16xf32>
    %10 = vector.multi_reduction <add>, %9, %cst [1] : vector<16x128xf32> to vector<16xf32>
    %11 = vector.shape_cast %10 : vector<16xf32> to vector<16x1xf32>
    %cst_7 = arith.constant 1.280000e+02 : f32
    %12 = vector.broadcast %cst_7 : f32 to vector<16x1xf32>
    %13 = arith.divf %11, %12 : vector<16x1xf32>
    %14 = vector.broadcast %13 : vector<16x1xf32> to vector<16x128xf32>
    %15 = arith.subf %9, %14 : vector<16x128xf32>
    %16 = arith.mulf %15, %15 : vector<16x128xf32>
    %cst_8 = arith.constant dense<0.000000e+00> : vector<16xf32>
    %17 = vector.multi_reduction <add>, %16, %cst_8 [1] : vector<16x128xf32> to vector<16xf32>
    %18 = vector.shape_cast %17 : vector<16xf32> to vector<16x1xf32>
    %cst_9 = arith.constant 1.280000e+02 : f32
    %19 = vector.broadcast %cst_9 : f32 to vector<16x1xf32>
    %20 = arith.divf %18, %19 : vector<16x1xf32>
    %21 = vector.broadcast %13 : vector<16x1xf32> to vector<16x128xf32>
    %22 = arith.subf %9, %21 : vector<16x128xf32>
    %cst_10 = arith.constant 9.99999996E-13 : f32
    %23 = vector.broadcast %cst_10 : f32 to vector<16x1xf32>
    %24 = arith.addf %20, %23 : vector<16x1xf32>
    %25 = math.rsqrt %24 : vector<16x1xf32>
    %26 = vector.broadcast %25 : vector<16x1xf32> to vector<16x128xf32>
    %27 = arith.mulf %22, %26 : vector<16x128xf32>
    %c0_11 = arith.constant 0 : index
    %c0_12 = arith.constant 0 : index
    %28 = vector.load %arg4[%c0_11, %c0_12] : memref<1x128xf32, #tpu.memory_space<vmem>>, vector<1x128xf32>
    %29 = vector.broadcast %28 : vector<1x128xf32> to vector<16x128xf32>
    %30 = arith.mulf %27, %29 : vector<16x128xf32>
    %c0_13 = arith.constant 0 : index
    %c0_14 = arith.constant 0 : index
    %31 = vector.load %arg5[%c0_13, %c0_14] : memref<1x128xf32, #tpu.memory_space<vmem>>, vector<1x128xf32>
    %32 = vector.broadcast %31 : vector<1x128xf32> to vector<16x128xf32>
    %33 = arith.addf %30, %32 : vector<16x128xf32>
    %34 = arith.truncf %33 : vector<16x128xf32> to vector<16x128xbf16>
    %c0_15 = arith.constant 0 : index
    %c0_16 = arith.constant 0 : index
    %c0_17 = arith.constant 0 : index
    %35 = vector.load %arg6[%c0_15, %c0_16, %c0_17] : memref<1x16x128xbf16, #tpu.memory_space<vmem>>, vector<1x16x128xbf16>
    %36 = vector.shape_cast %35 : vector<1x16x128xbf16> to vector<16x128xbf16>
    %37 = vector.shape_cast %34 : vector<16x128xbf16> to vector<1x16x128xbf16>
    tpu.vector_store %arg6[%c0_15, %c0_16, %c0_17], %37 {strides = array<i32>} : memref<1x16x128xbf16, #tpu.memory_space<vmem>>, vector<1x16x128xbf16>,
    return
  }
  func.func @transform_0(%arg0: i32) -> (i32, i32, i32) {
    %c0_i32 = arith.constant 0 : i32
    %c0_i32_0 = arith.constant 0 : i32
    %c0_i32_1 = arith.constant 0 : i32
    return %arg0, %c0_i32, %c0_i32_0 : i32, i32, i32
  }
  func.func @transform_1(%arg0: i32) -> (i32, i32) {
    %c0_i32 = arith.constant 0 : i32
    %c0_i32_0 = arith.constant 0 : i32
    %c0_i32_1 = arith.constant 0 : i32
    return %c0_i32, %c0_i32_0 : i32, i32
  }
  func.func @transform_2(%arg0: i32) -> (i32, i32, i32) {
    %c0_i32 = arith.constant 0 : i32
    %c0_i32_0 = arith.constant 0 : i32
    %c0_i32_1 = arith.constant 0 : i32
    return %arg0, %c0_i32, %c0_i32_0 : i32, i32, i32
  }
  func.func @transform_3(%arg0: i32) -> (i32, i32) {
    %c0_i32 = arith.constant 0 : i32
    %c0_i32_0 = arith.constant 0 : i32
    %c0_i32_1 = arith.constant 0 : i32
    return %c0_i32, %c0_i32_0 : i32, i32
  }
  func.func @transform_4(%arg0: i32) -> (i32, i32) {
    %c0_i32 = arith.constant 0 : i32
    %c0_i32_0 = arith.constant 0 : i32
    %c0_i32_1 = arith.constant 0 : i32
    return %c0_i32, %c0_i32_0 : i32, i32
  }
  func.func @transform_5(%arg0: i32) -> (i32, i32, i32) {
    %c0_i32 = arith.constant 0 : i32
    %c0_i32_0 = arith.constant 0 : i32
    %c0_i32_1 = arith.constant 0 : i32
    return %arg0, %c0_i32, %c0_i32_0 : i32, i32, i32
  }
}

module attributes {stable_mosaic.version = 11 : i64} {
  func.func @_dense_add_ln_kernel(%arg0: i32, %arg1: i32, %arg2: memref<32x128xbf16, #tpu.memory_space<vmem>>, %arg3: memref<128x128xbf16, #tpu.memory_space<vmem>>, %arg4: memref<1x128xbf16, #tpu.memory_space<vmem>>, %arg5: memref<32x128xbf16, #tpu.memory_space<vmem>>, %arg6: memref<1x128xf32, #tpu.memory_space<vmem>>, %arg7: memref<1x128xf32, #tpu.memory_space<vmem>>, %arg8: memref<32x128xbf16, #tpu.memory_space<vmem>>, %arg9: memref<32x128xf32, #tpu.memory_space<vmem>>) attributes {dimension_semantics = [#tpu.dimension_semantics<parallel>, #tpu.dimension_semantics<arbitrary>], iteration_bounds = array<i64: 1, 1>, scalar_prefetch = 0 : i64, scratch_operands = 1 : i64, tpu.core_type = #tpu.core_type<tc>, window_params = [{transform_indices = @transform_0, window_bounds = array<i64: 32, 128>}, {transform_indices = @transform_1, window_bounds = array<i64: 128, 128>}, {pipeline_mode = #tpu.pipeline_mode<synchronous>, transform_indices = @transform_2, window_bounds = array<i64: 1, 128>}, {transform_indices = @transform_3, window_bounds = array<i64: 32, 128>}, {pipeline_mode = #tpu.pipeline_mode<synchronous>, transform_indices = @transform_4, window_bounds = array<i64: 1, 128>}, {pipeline_mode = #tpu.pipeline_mode<synchronous>, transform_indices = @transform_5, window_bounds = array<i64: 1, 128>}, {transform_indices = @transform_6, window_bounds = array<i64: 32, 128>}]} {
    %c0_i32 = arith.constant 0 : i32
    %0 = arith.cmpi eq, %arg1, %c0_i32 : i32
    %1 = arith.extui %0 : i1 to i32
    %c0_i32_0 = arith.constant 0 : i32
    %2 = arith.cmpi ne, %1, %c0_i32_0 : i32
    scf.if %2 {
      %cst_10 = arith.constant 0.000000e+00 : f32
      %12 = vector.broadcast %cst_10 : f32 to vector<32x128xf32>
      %c0_11 = arith.constant 0 : index
      %c0_12 = arith.constant 0 : index
      %13 = vector.load %arg9[%c0_11, %c0_12] : memref<32x128xf32, #tpu.memory_space<vmem>>, vector<32x128xf32>
      tpu.vector_store %arg9[%c0_11, %c0_12], %12 {strides = array<i32>} : memref<32x128xf32, #tpu.memory_space<vmem>>, vector<32x128xf32>,
    } else {
    }
    %c0 = arith.constant 0 : index
    %c0_1 = arith.constant 0 : index
    %3 = vector.load %arg9[%c0, %c0_1] : memref<32x128xf32, #tpu.memory_space<vmem>>, vector<32x128xf32>
    %c0_2 = arith.constant 0 : index
    %c0_3 = arith.constant 0 : index
    %4 = vector.load %arg2[%c0_2, %c0_3] : memref<32x128xbf16, #tpu.memory_space<vmem>>, vector<32x128xbf16>
    %c0_4 = arith.constant 0 : index
    %c0_5 = arith.constant 0 : index
    %5 = vector.load %arg3[%c0_4, %c0_5] : memref<128x128xbf16, #tpu.memory_space<vmem>>, vector<128x128xbf16>
    %cst = arith.constant dense<0.000000e+00> : vector<32x128xf32>
    %6 = tpu.matmul %4, %5, %cst {dimension_numbers = #tpu.dot_dimension_numbers<[1], [0], [0], [1], [0, 0, 1, 1], [], []>} : vector<32x128xbf16>, vector<128x128xbf16>, vector<32x128xf32> -> vector<32x128xf32>
    %7 = arith.addf %3, %6 : vector<32x128xf32>
    %c0_6 = arith.constant 0 : index
    %c0_7 = arith.constant 0 : index
    %8 = vector.load %arg9[%c0_6, %c0_7] : memref<32x128xf32, #tpu.memory_space<vmem>>, vector<32x128xf32>
    tpu.vector_store %arg9[%c0_6, %c0_7], %7 {strides = array<i32>} : memref<32x128xf32, #tpu.memory_space<vmem>>, vector<32x128xf32>,
    %c0_i32_8 = arith.constant 0 : i32
    %9 = arith.cmpi eq, %arg1, %c0_i32_8 : i32
    %10 = arith.extui %9 : i1 to i32
    %c0_i32_9 = arith.constant 0 : i32
    %11 = arith.cmpi ne, %10, %c0_i32_9 : i32
    scf.if %11 {
      %c0_10 = arith.constant 0 : index
      %c0_11 = arith.constant 0 : index
      %12 = vector.load %arg9[%c0_10, %c0_11] : memref<32x128xf32, #tpu.memory_space<vmem>>, vector<32x128xf32>
      %c0_12 = arith.constant 0 : index
      %c0_13 = arith.constant 0 : index
      %13 = vector.load %arg4[%c0_12, %c0_13] : memref<1x128xbf16, #tpu.memory_space<vmem>>, vector<1x128xbf16>
      %14 = arith.extf %13 : vector<1x128xbf16> to vector<1x128xf32>
      %15 = vector.broadcast %14 : vector<1x128xf32> to vector<32x128xf32>
      %16 = arith.addf %12, %15 : vector<32x128xf32>
      %c0_14 = arith.constant 0 : index
      %c0_15 = arith.constant 0 : index
      %17 = vector.load %arg5[%c0_14, %c0_15] : memref<32x128xbf16, #tpu.memory_space<vmem>>, vector<32x128xbf16>
      %18 = arith.extf %17 : vector<32x128xbf16> to vector<32x128xf32>
      %19 = arith.addf %16, %18 : vector<32x128xf32>
      %cst_16 = arith.constant dense<0.000000e+00> : vector<32xf32>
      %20 = vector.multi_reduction <add>, %19, %cst_16 [1] : vector<32x128xf32> to vector<32xf32>
      %21 = vector.shape_cast %20 : vector<32xf32> to vector<32x1xf32>
      %cst_17 = arith.constant 1.280000e+02 : f32
      %22 = vector.broadcast %cst_17 : f32 to vector<32x1xf32>
      %23 = arith.divf %21, %22 : vector<32x1xf32>
      %24 = vector.broadcast %23 : vector<32x1xf32> to vector<32x128xf32>
      %25 = arith.subf %19, %24 : vector<32x128xf32>
      %26 = arith.mulf %25, %25 : vector<32x128xf32>
      %cst_18 = arith.constant dense<0.000000e+00> : vector<32xf32>
      %27 = vector.multi_reduction <add>, %26, %cst_18 [1] : vector<32x128xf32> to vector<32xf32>
      %28 = vector.shape_cast %27 : vector<32xf32> to vector<32x1xf32>
      %cst_19 = arith.constant 1.280000e+02 : f32
      %29 = vector.broadcast %cst_19 : f32 to vector<32x1xf32>
      %30 = arith.divf %28, %29 : vector<32x1xf32>
      %31 = vector.broadcast %23 : vector<32x1xf32> to vector<32x128xf32>
      %32 = arith.subf %19, %31 : vector<32x128xf32>
      %cst_20 = arith.constant 9.99999996E-13 : f32
      %33 = vector.broadcast %cst_20 : f32 to vector<32x1xf32>
      %34 = arith.addf %30, %33 : vector<32x1xf32>
      %35 = math.rsqrt %34 : vector<32x1xf32>
      %36 = vector.broadcast %35 : vector<32x1xf32> to vector<32x128xf32>
      %37 = arith.mulf %32, %36 : vector<32x128xf32>
      %c0_21 = arith.constant 0 : index
      %c0_22 = arith.constant 0 : index
      %38 = vector.load %arg6[%c0_21, %c0_22] : memref<1x128xf32, #tpu.memory_space<vmem>>, vector<1x128xf32>
      %39 = vector.broadcast %38 : vector<1x128xf32> to vector<32x128xf32>
      %40 = arith.mulf %37, %39 : vector<32x128xf32>
      %c0_23 = arith.constant 0 : index
      %c0_24 = arith.constant 0 : index
      %41 = vector.load %arg7[%c0_23, %c0_24] : memref<1x128xf32, #tpu.memory_space<vmem>>, vector<1x128xf32>
      %42 = vector.broadcast %41 : vector<1x128xf32> to vector<32x128xf32>
      %43 = arith.addf %40, %42 : vector<32x128xf32>
      %44 = arith.truncf %43 : vector<32x128xf32> to vector<32x128xbf16>
      %c0_25 = arith.constant 0 : index
      %c0_26 = arith.constant 0 : index
      %45 = vector.load %arg8[%c0_25, %c0_26] : memref<32x128xbf16, #tpu.memory_space<vmem>>, vector<32x128xbf16>
      tpu.vector_store %arg8[%c0_25, %c0_26], %44 {strides = array<i32>} : memref<32x128xbf16, #tpu.memory_space<vmem>>, vector<32x128xbf16>,
    } else {
    }
    return
  }
  func.func @transform_0(%arg0: i32, %arg1: i32) -> (i32, i32) {
    %c0_i32 = arith.constant 0 : i32
    return %arg0, %arg1 : i32, i32
  }
  func.func @transform_1(%arg0: i32, %arg1: i32) -> (i32, i32) {
    %c0_i32 = arith.constant 0 : i32
    %c0_i32_0 = arith.constant 0 : i32
    return %arg1, %c0_i32 : i32, i32
  }
  func.func @transform_2(%arg0: i32, %arg1: i32) -> (i32, i32) {
    %c0_i32 = arith.constant 0 : i32
    %c0_i32_0 = arith.constant 0 : i32
    %c0_i32_1 = arith.constant 0 : i32
    return %c0_i32, %c0_i32_0 : i32, i32
  }
  func.func @transform_3(%arg0: i32, %arg1: i32) -> (i32, i32) {
    %c0_i32 = arith.constant 0 : i32
    %c0_i32_0 = arith.constant 0 : i32
    return %arg0, %c0_i32 : i32, i32
  }
  func.func @transform_4(%arg0: i32, %arg1: i32) -> (i32, i32) {
    %c0_i32 = arith.constant 0 : i32
    %c0_i32_0 = arith.constant 0 : i32
    %c0_i32_1 = arith.constant 0 : i32
    return %c0_i32, %c0_i32_0 : i32, i32
  }
  func.func @transform_5(%arg0: i32, %arg1: i32) -> (i32, i32) {
    %c0_i32 = arith.constant 0 : i32
    %c0_i32_0 = arith.constant 0 : i32
    %c0_i32_1 = arith.constant 0 : i32
    return %c0_i32, %c0_i32_0 : i32, i32
  }
  func.func @transform_6(%arg0: i32, %arg1: i32) -> (i32, i32) {
    %c0_i32 = arith.constant 0 : i32
    %c0_i32_0 = arith.constant 0 : i32
    return %arg0, %c0_i32 : i32, i32
  }
}

module attributes {stable_mosaic.version = 11 : i64} {
  func.func @_dense_add_ln_kernel(%arg0: i32, %arg1: i32, %arg2: memref<32x512xbf16, #tpu.memory_space<vmem>>, %arg3: memref<512x128xbf16, #tpu.memory_space<vmem>>, %arg4: memref<1x128xbf16, #tpu.memory_space<vmem>>, %arg5: memref<32x128xbf16, #tpu.memory_space<vmem>>, %arg6: memref<1x128xf32, #tpu.memory_space<vmem>>, %arg7: memref<1x128xf32, #tpu.memory_space<vmem>>, %arg8: memref<32x128xbf16, #tpu.memory_space<vmem>>, %arg9: memref<32x128xf32, #tpu.memory_space<vmem>>) attributes {dimension_semantics = [#tpu.dimension_semantics<parallel>, #tpu.dimension_semantics<arbitrary>], iteration_bounds = array<i64: 1, 1>, scalar_prefetch = 0 : i64, scratch_operands = 1 : i64, tpu.core_type = #tpu.core_type<tc>, window_params = [{transform_indices = @transform_0, window_bounds = array<i64: 32, 512>}, {transform_indices = @transform_1, window_bounds = array<i64: 512, 128>}, {pipeline_mode = #tpu.pipeline_mode<synchronous>, transform_indices = @transform_2, window_bounds = array<i64: 1, 128>}, {transform_indices = @transform_3, window_bounds = array<i64: 32, 128>}, {pipeline_mode = #tpu.pipeline_mode<synchronous>, transform_indices = @transform_4, window_bounds = array<i64: 1, 128>}, {pipeline_mode = #tpu.pipeline_mode<synchronous>, transform_indices = @transform_5, window_bounds = array<i64: 1, 128>}, {transform_indices = @transform_6, window_bounds = array<i64: 32, 128>}]} {
    %c0_i32 = arith.constant 0 : i32
    %0 = arith.cmpi eq, %arg1, %c0_i32 : i32
    %1 = arith.extui %0 : i1 to i32
    %c0_i32_0 = arith.constant 0 : i32
    %2 = arith.cmpi ne, %1, %c0_i32_0 : i32
    scf.if %2 {
      %cst_10 = arith.constant 0.000000e+00 : f32
      %12 = vector.broadcast %cst_10 : f32 to vector<32x128xf32>
      %c0_11 = arith.constant 0 : index
      %c0_12 = arith.constant 0 : index
      %13 = vector.load %arg9[%c0_11, %c0_12] : memref<32x128xf32, #tpu.memory_space<vmem>>, vector<32x128xf32>
      tpu.vector_store %arg9[%c0_11, %c0_12], %12 {strides = array<i32>} : memref<32x128xf32, #tpu.memory_space<vmem>>, vector<32x128xf32>,
    } else {
    }
    %c0 = arith.constant 0 : index
    %c0_1 = arith.constant 0 : index
    %3 = vector.load %arg9[%c0, %c0_1] : memref<32x128xf32, #tpu.memory_space<vmem>>, vector<32x128xf32>
    %c0_2 = arith.constant 0 : index
    %c0_3 = arith.constant 0 : index
    %4 = vector.load %arg2[%c0_2, %c0_3] : memref<32x512xbf16, #tpu.memory_space<vmem>>, vector<32x512xbf16>
    %c0_4 = arith.constant 0 : index
    %c0_5 = arith.constant 0 : index
    %5 = vector.load %arg3[%c0_4, %c0_5] : memref<512x128xbf16, #tpu.memory_space<vmem>>, vector<512x128xbf16>
    %cst = arith.constant dense<0.000000e+00> : vector<32x128xf32>
    %6 = tpu.matmul %4, %5, %cst {dimension_numbers = #tpu.dot_dimension_numbers<[1], [0], [0], [1], [0, 0, 1, 1], [], []>} : vector<32x512xbf16>, vector<512x128xbf16>, vector<32x128xf32> -> vector<32x128xf32>
    %7 = arith.addf %3, %6 : vector<32x128xf32>
    %c0_6 = arith.constant 0 : index
    %c0_7 = arith.constant 0 : index
    %8 = vector.load %arg9[%c0_6, %c0_7] : memref<32x128xf32, #tpu.memory_space<vmem>>, vector<32x128xf32>
    tpu.vector_store %arg9[%c0_6, %c0_7], %7 {strides = array<i32>} : memref<32x128xf32, #tpu.memory_space<vmem>>, vector<32x128xf32>,
    %c0_i32_8 = arith.constant 0 : i32
    %9 = arith.cmpi eq, %arg1, %c0_i32_8 : i32
    %10 = arith.extui %9 : i1 to i32
    %c0_i32_9 = arith.constant 0 : i32
    %11 = arith.cmpi ne, %10, %c0_i32_9 : i32
    scf.if %11 {
      %c0_10 = arith.constant 0 : index
      %c0_11 = arith.constant 0 : index
      %12 = vector.load %arg9[%c0_10, %c0_11] : memref<32x128xf32, #tpu.memory_space<vmem>>, vector<32x128xf32>
      %c0_12 = arith.constant 0 : index
      %c0_13 = arith.constant 0 : index
      %13 = vector.load %arg4[%c0_12, %c0_13] : memref<1x128xbf16, #tpu.memory_space<vmem>>, vector<1x128xbf16>
      %14 = arith.extf %13 : vector<1x128xbf16> to vector<1x128xf32>
      %15 = vector.broadcast %14 : vector<1x128xf32> to vector<32x128xf32>
      %16 = arith.addf %12, %15 : vector<32x128xf32>
      %c0_14 = arith.constant 0 : index
      %c0_15 = arith.constant 0 : index
      %17 = vector.load %arg5[%c0_14, %c0_15] : memref<32x128xbf16, #tpu.memory_space<vmem>>, vector<32x128xbf16>
      %18 = arith.extf %17 : vector<32x128xbf16> to vector<32x128xf32>
      %19 = arith.addf %16, %18 : vector<32x128xf32>
      %cst_16 = arith.constant dense<0.000000e+00> : vector<32xf32>
      %20 = vector.multi_reduction <add>, %19, %cst_16 [1] : vector<32x128xf32> to vector<32xf32>
      %21 = vector.shape_cast %20 : vector<32xf32> to vector<32x1xf32>
      %cst_17 = arith.constant 1.280000e+02 : f32
      %22 = vector.broadcast %cst_17 : f32 to vector<32x1xf32>
      %23 = arith.divf %21, %22 : vector<32x1xf32>
      %24 = vector.broadcast %23 : vector<32x1xf32> to vector<32x128xf32>
      %25 = arith.subf %19, %24 : vector<32x128xf32>
      %26 = arith.mulf %25, %25 : vector<32x128xf32>
      %cst_18 = arith.constant dense<0.000000e+00> : vector<32xf32>
      %27 = vector.multi_reduction <add>, %26, %cst_18 [1] : vector<32x128xf32> to vector<32xf32>
      %28 = vector.shape_cast %27 : vector<32xf32> to vector<32x1xf32>
      %cst_19 = arith.constant 1.280000e+02 : f32
      %29 = vector.broadcast %cst_19 : f32 to vector<32x1xf32>
      %30 = arith.divf %28, %29 : vector<32x1xf32>
      %31 = vector.broadcast %23 : vector<32x1xf32> to vector<32x128xf32>
      %32 = arith.subf %19, %31 : vector<32x128xf32>
      %cst_20 = arith.constant 9.99999996E-13 : f32
      %33 = vector.broadcast %cst_20 : f32 to vector<32x1xf32>
      %34 = arith.addf %30, %33 : vector<32x1xf32>
      %35 = math.rsqrt %34 : vector<32x1xf32>
      %36 = vector.broadcast %35 : vector<32x1xf32> to vector<32x128xf32>
      %37 = arith.mulf %32, %36 : vector<32x128xf32>
      %c0_21 = arith.constant 0 : index
      %c0_22 = arith.constant 0 : index
      %38 = vector.load %arg6[%c0_21, %c0_22] : memref<1x128xf32, #tpu.memory_space<vmem>>, vector<1x128xf32>
      %39 = vector.broadcast %38 : vector<1x128xf32> to vector<32x128xf32>
      %40 = arith.mulf %37, %39 : vector<32x128xf32>
      %c0_23 = arith.constant 0 : index
      %c0_24 = arith.constant 0 : index
      %41 = vector.load %arg7[%c0_23, %c0_24] : memref<1x128xf32, #tpu.memory_space<vmem>>, vector<1x128xf32>
      %42 = vector.broadcast %41 : vector<1x128xf32> to vector<32x128xf32>
      %43 = arith.addf %40, %42 : vector<32x128xf32>
      %44 = arith.truncf %43 : vector<32x128xf32> to vector<32x128xbf16>
      %c0_25 = arith.constant 0 : index
      %c0_26 = arith.constant 0 : index
      %45 = vector.load %arg8[%c0_25, %c0_26] : memref<32x128xbf16, #tpu.memory_space<vmem>>, vector<32x128xbf16>
      tpu.vector_store %arg8[%c0_25, %c0_26], %44 {strides = array<i32>} : memref<32x128xbf16, #tpu.memory_space<vmem>>, vector<32x128xbf16>,
    } else {
    }
    return
  }
  func.func @transform_0(%arg0: i32, %arg1: i32) -> (i32, i32) {
    %c0_i32 = arith.constant 0 : i32
    return %arg0, %arg1 : i32, i32
  }
  func.func @transform_1(%arg0: i32, %arg1: i32) -> (i32, i32) {
    %c0_i32 = arith.constant 0 : i32
    %c0_i32_0 = arith.constant 0 : i32
    return %arg1, %c0_i32 : i32, i32
  }
  func.func @transform_2(%arg0: i32, %arg1: i32) -> (i32, i32) {
    %c0_i32 = arith.constant 0 : i32
    %c0_i32_0 = arith.constant 0 : i32
    %c0_i32_1 = arith.constant 0 : i32
    return %c0_i32, %c0_i32_0 : i32, i32
  }
  func.func @transform_3(%arg0: i32, %arg1: i32) -> (i32, i32) {
    %c0_i32 = arith.constant 0 : i32
    %c0_i32_0 = arith.constant 0 : i32
    return %arg0, %c0_i32 : i32, i32
  }
  func.func @transform_4(%arg0: i32, %arg1: i32) -> (i32, i32) {
    %c0_i32 = arith.constant 0 : i32
    %c0_i32_0 = arith.constant 0 : i32
    %c0_i32_1 = arith.constant 0 : i32
    return %c0_i32, %c0_i32_0 : i32, i32
  }
  func.func @transform_5(%arg0: i32, %arg1: i32) -> (i32, i32) {
    %c0_i32 = arith.constant 0 : i32
    %c0_i32_0 = arith.constant 0 : i32
    %c0_i32_1 = arith.constant 0 : i32
    return %c0_i32, %c0_i32_0 : i32, i32
  }
  func.func @transform_6(%arg0: i32, %arg1: i32) -> (i32, i32) {
    %c0_i32 = arith.constant 0 : i32
    %c0_i32_0 = arith.constant 0 : i32
    return %arg0, %c0_i32 : i32, i32
  }
}

module attributes {stable_mosaic.version = 11 : i64} {
  func.func @_dense_add_ln_head_kernel(%arg0: i32, %arg1: i32, %arg2: memref<32x512xbf16, #tpu.memory_space<vmem>>, %arg3: memref<512x128xbf16, #tpu.memory_space<vmem>>, %arg4: memref<1x128xbf16, #tpu.memory_space<vmem>>, %arg5: memref<32x128xbf16, #tpu.memory_space<vmem>>, %arg6: memref<1x128xf32, #tpu.memory_space<vmem>>, %arg7: memref<1x128xf32, #tpu.memory_space<vmem>>, %arg8: memref<128x128xbf16, #tpu.memory_space<vmem>>, %arg9: memref<1x128xf32, #tpu.memory_space<vmem>>, %arg10: memref<32x128xbf16, #tpu.memory_space<vmem>>, %arg11: memref<32x128xf32, #tpu.memory_space<vmem>>, %arg12: memref<32x128xf32, #tpu.memory_space<vmem>>) attributes {dimension_semantics = [#tpu.dimension_semantics<parallel>, #tpu.dimension_semantics<arbitrary>], iteration_bounds = array<i64: 1, 1>, scalar_prefetch = 0 : i64, scratch_operands = 1 : i64, tpu.core_type = #tpu.core_type<tc>, window_params = [{transform_indices = @transform_0, window_bounds = array<i64: 32, 512>}, {transform_indices = @transform_1, window_bounds = array<i64: 512, 128>}, {pipeline_mode = #tpu.pipeline_mode<synchronous>, transform_indices = @transform_2, window_bounds = array<i64: 1, 128>}, {transform_indices = @transform_3, window_bounds = array<i64: 32, 128>}, {pipeline_mode = #tpu.pipeline_mode<synchronous>, transform_indices = @transform_4, window_bounds = array<i64: 1, 128>}, {pipeline_mode = #tpu.pipeline_mode<synchronous>, transform_indices = @transform_5, window_bounds = array<i64: 1, 128>}, {pipeline_mode = #tpu.pipeline_mode<synchronous>, transform_indices = @transform_6, window_bounds = array<i64: 128, 128>}, {pipeline_mode = #tpu.pipeline_mode<synchronous>, transform_indices = @transform_7, window_bounds = array<i64: 1, 128>}, {transform_indices = @transform_8, window_bounds = array<i64: 32, 128>}, {transform_indices = @transform_9, window_bounds = array<i64: 32, 128>}]} {
    %c0_i32 = arith.constant 0 : i32
    %0 = arith.cmpi eq, %arg1, %c0_i32 : i32
    %1 = arith.extui %0 : i1 to i32
    %c0_i32_0 = arith.constant 0 : i32
    %2 = arith.cmpi ne, %1, %c0_i32_0 : i32
    scf.if %2 {
      %cst_10 = arith.constant 0.000000e+00 : f32
      %12 = vector.broadcast %cst_10 : f32 to vector<32x128xf32>
      %c0_11 = arith.constant 0 : index
      %c0_12 = arith.constant 0 : index
      %13 = vector.load %arg12[%c0_11, %c0_12] : memref<32x128xf32, #tpu.memory_space<vmem>>, vector<32x128xf32>
      tpu.vector_store %arg12[%c0_11, %c0_12], %12 {strides = array<i32>} : memref<32x128xf32, #tpu.memory_space<vmem>>, vector<32x128xf32>,
    } else {
    }
    %c0 = arith.constant 0 : index
    %c0_1 = arith.constant 0 : index
    %3 = vector.load %arg12[%c0, %c0_1] : memref<32x128xf32, #tpu.memory_space<vmem>>, vector<32x128xf32>
    %c0_2 = arith.constant 0 : index
    %c0_3 = arith.constant 0 : index
    %4 = vector.load %arg2[%c0_2, %c0_3] : memref<32x512xbf16, #tpu.memory_space<vmem>>, vector<32x512xbf16>
    %c0_4 = arith.constant 0 : index
    %c0_5 = arith.constant 0 : index
    %5 = vector.load %arg3[%c0_4, %c0_5] : memref<512x128xbf16, #tpu.memory_space<vmem>>, vector<512x128xbf16>
    %cst = arith.constant dense<0.000000e+00> : vector<32x128xf32>
    %6 = tpu.matmul %4, %5, %cst {dimension_numbers = #tpu.dot_dimension_numbers<[1], [0], [0], [1], [0, 0, 1, 1], [], []>} : vector<32x512xbf16>, vector<512x128xbf16>, vector<32x128xf32> -> vector<32x128xf32>
    %7 = arith.addf %3, %6 : vector<32x128xf32>
    %c0_6 = arith.constant 0 : index
    %c0_7 = arith.constant 0 : index
    %8 = vector.load %arg12[%c0_6, %c0_7] : memref<32x128xf32, #tpu.memory_space<vmem>>, vector<32x128xf32>
    tpu.vector_store %arg12[%c0_6, %c0_7], %7 {strides = array<i32>} : memref<32x128xf32, #tpu.memory_space<vmem>>, vector<32x128xf32>,
    %c0_i32_8 = arith.constant 0 : i32
    %9 = arith.cmpi eq, %arg1, %c0_i32_8 : i32
    %10 = arith.extui %9 : i1 to i32
    %c0_i32_9 = arith.constant 0 : i32
    %11 = arith.cmpi ne, %10, %c0_i32_9 : i32
    scf.if %11 {
      %c0_10 = arith.constant 0 : index
      %c0_11 = arith.constant 0 : index
      %12 = vector.load %arg12[%c0_10, %c0_11] : memref<32x128xf32, #tpu.memory_space<vmem>>, vector<32x128xf32>
      %c0_12 = arith.constant 0 : index
      %c0_13 = arith.constant 0 : index
      %13 = vector.load %arg4[%c0_12, %c0_13] : memref<1x128xbf16, #tpu.memory_space<vmem>>, vector<1x128xbf16>
      %14 = arith.extf %13 : vector<1x128xbf16> to vector<1x128xf32>
      %15 = vector.broadcast %14 : vector<1x128xf32> to vector<32x128xf32>
      %16 = arith.addf %12, %15 : vector<32x128xf32>
      %c0_14 = arith.constant 0 : index
      %c0_15 = arith.constant 0 : index
      %17 = vector.load %arg5[%c0_14, %c0_15] : memref<32x128xbf16, #tpu.memory_space<vmem>>, vector<32x128xbf16>
      %18 = arith.extf %17 : vector<32x128xbf16> to vector<32x128xf32>
      %19 = arith.addf %16, %18 : vector<32x128xf32>
      %cst_16 = arith.constant dense<0.000000e+00> : vector<32xf32>
      %20 = vector.multi_reduction <add>, %19, %cst_16 [1] : vector<32x128xf32> to vector<32xf32>
      %21 = vector.shape_cast %20 : vector<32xf32> to vector<32x1xf32>
      %cst_17 = arith.constant 1.280000e+02 : f32
      %22 = vector.broadcast %cst_17 : f32 to vector<32x1xf32>
      %23 = arith.divf %21, %22 : vector<32x1xf32>
      %24 = vector.broadcast %23 : vector<32x1xf32> to vector<32x128xf32>
      %25 = arith.subf %19, %24 : vector<32x128xf32>
      %26 = arith.mulf %25, %25 : vector<32x128xf32>
      %cst_18 = arith.constant dense<0.000000e+00> : vector<32xf32>
      %27 = vector.multi_reduction <add>, %26, %cst_18 [1] : vector<32x128xf32> to vector<32xf32>
      %28 = vector.shape_cast %27 : vector<32xf32> to vector<32x1xf32>
      %cst_19 = arith.constant 1.280000e+02 : f32
      %29 = vector.broadcast %cst_19 : f32 to vector<32x1xf32>
      %30 = arith.divf %28, %29 : vector<32x1xf32>
      %31 = vector.broadcast %23 : vector<32x1xf32> to vector<32x128xf32>
      %32 = arith.subf %19, %31 : vector<32x128xf32>
      %cst_20 = arith.constant 9.99999996E-13 : f32
      %33 = vector.broadcast %cst_20 : f32 to vector<32x1xf32>
      %34 = arith.addf %30, %33 : vector<32x1xf32>
      %35 = math.rsqrt %34 : vector<32x1xf32>
      %36 = vector.broadcast %35 : vector<32x1xf32> to vector<32x128xf32>
      %37 = arith.mulf %32, %36 : vector<32x128xf32>
      %c0_21 = arith.constant 0 : index
      %c0_22 = arith.constant 0 : index
      %38 = vector.load %arg6[%c0_21, %c0_22] : memref<1x128xf32, #tpu.memory_space<vmem>>, vector<1x128xf32>
      %39 = vector.broadcast %38 : vector<1x128xf32> to vector<32x128xf32>
      %40 = arith.mulf %37, %39 : vector<32x128xf32>
      %c0_23 = arith.constant 0 : index
      %c0_24 = arith.constant 0 : index
      %41 = vector.load %arg7[%c0_23, %c0_24] : memref<1x128xf32, #tpu.memory_space<vmem>>, vector<1x128xf32>
      %42 = vector.broadcast %41 : vector<1x128xf32> to vector<32x128xf32>
      %43 = arith.addf %40, %42 : vector<32x128xf32>
      %44 = arith.truncf %43 : vector<32x128xf32> to vector<32x128xbf16>
      %c0_25 = arith.constant 0 : index
      %c0_26 = arith.constant 0 : index
      %45 = vector.load %arg10[%c0_25, %c0_26] : memref<32x128xbf16, #tpu.memory_space<vmem>>, vector<32x128xbf16>
      tpu.vector_store %arg10[%c0_25, %c0_26], %44 {strides = array<i32>} : memref<32x128xbf16, #tpu.memory_space<vmem>>, vector<32x128xbf16>,
      %46 = arith.truncf %43 : vector<32x128xf32> to vector<32x128xbf16>
      %c0_27 = arith.constant 0 : index
      %c0_28 = arith.constant 0 : index
      %47 = vector.load %arg8[%c0_27, %c0_28] : memref<128x128xbf16, #tpu.memory_space<vmem>>, vector<128x128xbf16>
      %cst_29 = arith.constant dense<0.000000e+00> : vector<32x128xf32>
      %48 = tpu.matmul %46, %47, %cst_29 {dimension_numbers = #tpu.dot_dimension_numbers<[1], [0], [0], [1], [0, 0, 1, 1], [], []>} : vector<32x128xbf16>, vector<128x128xbf16>, vector<32x128xf32> -> vector<32x128xf32>
      %c0_30 = arith.constant 0 : index
      %c0_31 = arith.constant 0 : index
      %49 = vector.load %arg9[%c0_30, %c0_31] : memref<1x128xf32, #tpu.memory_space<vmem>>, vector<1x128xf32>
      %50 = vector.broadcast %49 : vector<1x128xf32> to vector<32x128xf32>
      %51 = arith.addf %48, %50 : vector<32x128xf32>
      %c0_32 = arith.constant 0 : index
      %c0_33 = arith.constant 0 : index
      %52 = vector.load %arg11[%c0_32, %c0_33] : memref<32x128xf32, #tpu.memory_space<vmem>>, vector<32x128xf32>
      tpu.vector_store %arg11[%c0_32, %c0_33], %51 {strides = array<i32>} : memref<32x128xf32, #tpu.memory_space<vmem>>, vector<32x128xf32>,
    } else {
    }
    return
  }
  func.func @transform_0(%arg0: i32, %arg1: i32) -> (i32, i32) {
    %c0_i32 = arith.constant 0 : i32
    return %arg0, %arg1 : i32, i32
  }
  func.func @transform_1(%arg0: i32, %arg1: i32) -> (i32, i32) {
    %c0_i32 = arith.constant 0 : i32
    %c0_i32_0 = arith.constant 0 : i32
    return %arg1, %c0_i32 : i32, i32
  }
  func.func @transform_2(%arg0: i32, %arg1: i32) -> (i32, i32) {
    %c0_i32 = arith.constant 0 : i32
    %c0_i32_0 = arith.constant 0 : i32
    %c0_i32_1 = arith.constant 0 : i32
    return %c0_i32, %c0_i32_0 : i32, i32
  }
  func.func @transform_3(%arg0: i32, %arg1: i32) -> (i32, i32) {
    %c0_i32 = arith.constant 0 : i32
    %c0_i32_0 = arith.constant 0 : i32
    return %arg0, %c0_i32 : i32, i32
  }
  func.func @transform_4(%arg0: i32, %arg1: i32) -> (i32, i32) {
    %c0_i32 = arith.constant 0 : i32
    %c0_i32_0 = arith.constant 0 : i32
    %c0_i32_1 = arith.constant 0 : i32
    return %c0_i32, %c0_i32_0 : i32, i32
  }
  func.func @transform_5(%arg0: i32, %arg1: i32) -> (i32, i32) {
    %c0_i32 = arith.constant 0 : i32
    %c0_i32_0 = arith.constant 0 : i32
    %c0_i32_1 = arith.constant 0 : i32
    return %c0_i32, %c0_i32_0 : i32, i32
  }
  func.func @transform_6(%arg0: i32, %arg1: i32) -> (i32, i32) {
    %c0_i32 = arith.constant 0 : i32
    %c0_i32_0 = arith.constant 0 : i32
    %c0_i32_1 = arith.constant 0 : i32
    return %c0_i32, %c0_i32_0 : i32, i32
  }
  func.func @transform_7(%arg0: i32, %arg1: i32) -> (i32, i32) {
    %c0_i32 = arith.constant 0 : i32
    %c0_i32_0 = arith.constant 0 : i32
    %c0_i32_1 = arith.constant 0 : i32
    return %c0_i32, %c0_i32_0 : i32, i32
  }
  func.func @transform_8(%arg0: i32, %arg1: i32) -> (i32, i32) {
    %c0_i32 = arith.constant 0 : i32
    %c0_i32_0 = arith.constant 0 : i32
    return %arg0, %c0_i32 : i32, i32
  }
  func.func @transform_9(%arg0: i32, %arg1: i32) -> (i32, i32) {
    %c0_i32 = arith.constant 0 : i32
    %c0_i32_0 = arith.constant 0 : i32
    return %arg0, %c0_i32 : i32, i32
  }
}

module attributes {stable_mosaic.version = 11 : i64} {
  func.func @_dense_kernel(%arg0: i32, %arg1: i32, %arg2: i32, %arg3: memref<32x128xbf16, #tpu.memory_space<vmem>>, %arg4: memref<128x512xbf16, #tpu.memory_space<vmem>>, %arg5: memref<1x512xbf16, #tpu.memory_space<vmem>>, %arg6: memref<32x512xbf16, #tpu.memory_space<vmem>>, %arg7: memref<32x512xf32, #tpu.memory_space<vmem>>) attributes {dimension_semantics = [#tpu.dimension_semantics<parallel>, #tpu.dimension_semantics<parallel>, #tpu.dimension_semantics<arbitrary>], iteration_bounds = array<i64: 1, 1, 1>, scalar_prefetch = 0 : i64, scratch_operands = 1 : i64, tpu.core_type = #tpu.core_type<tc>, window_params = [{transform_indices = @transform_0, window_bounds = array<i64: 32, 128>}, {transform_indices = @transform_1, window_bounds = array<i64: 128, 512>}, {transform_indices = @transform_2, window_bounds = array<i64: 1, 512>}, {transform_indices = @transform_3, window_bounds = array<i64: 32, 512>}]} {
    %c0_i32 = arith.constant 0 : i32
    %0 = arith.cmpi eq, %arg2, %c0_i32 : i32
    %1 = arith.extui %0 : i1 to i32
    %c0_i32_0 = arith.constant 0 : i32
    %2 = arith.cmpi ne, %1, %c0_i32_0 : i32
    scf.if %2 {
      %cst_10 = arith.constant 0.000000e+00 : f32
      %12 = vector.broadcast %cst_10 : f32 to vector<32x512xf32>
      %c0_11 = arith.constant 0 : index
      %c0_12 = arith.constant 0 : index
      %13 = vector.load %arg7[%c0_11, %c0_12] : memref<32x512xf32, #tpu.memory_space<vmem>>, vector<32x512xf32>
      tpu.vector_store %arg7[%c0_11, %c0_12], %12 {strides = array<i32>} : memref<32x512xf32, #tpu.memory_space<vmem>>, vector<32x512xf32>,
    } else {
    }
    %c0 = arith.constant 0 : index
    %c0_1 = arith.constant 0 : index
    %3 = vector.load %arg7[%c0, %c0_1] : memref<32x512xf32, #tpu.memory_space<vmem>>, vector<32x512xf32>
    %c0_2 = arith.constant 0 : index
    %c0_3 = arith.constant 0 : index
    %4 = vector.load %arg3[%c0_2, %c0_3] : memref<32x128xbf16, #tpu.memory_space<vmem>>, vector<32x128xbf16>
    %c0_4 = arith.constant 0 : index
    %c0_5 = arith.constant 0 : index
    %5 = vector.load %arg4[%c0_4, %c0_5] : memref<128x512xbf16, #tpu.memory_space<vmem>>, vector<128x512xbf16>
    %cst = arith.constant dense<0.000000e+00> : vector<32x512xf32>
    %6 = tpu.matmul %4, %5, %cst {dimension_numbers = #tpu.dot_dimension_numbers<[1], [0], [0], [1], [0, 0, 1, 1], [], []>} : vector<32x128xbf16>, vector<128x512xbf16>, vector<32x512xf32> -> vector<32x512xf32>
    %7 = arith.addf %3, %6 : vector<32x512xf32>
    %c0_6 = arith.constant 0 : index
    %c0_7 = arith.constant 0 : index
    %8 = vector.load %arg7[%c0_6, %c0_7] : memref<32x512xf32, #tpu.memory_space<vmem>>, vector<32x512xf32>
    tpu.vector_store %arg7[%c0_6, %c0_7], %7 {strides = array<i32>} : memref<32x512xf32, #tpu.memory_space<vmem>>, vector<32x512xf32>,
    %c0_i32_8 = arith.constant 0 : i32
    %9 = arith.cmpi eq, %arg2, %c0_i32_8 : i32
    %10 = arith.extui %9 : i1 to i32
    %c0_i32_9 = arith.constant 0 : i32
    %11 = arith.cmpi ne, %10, %c0_i32_9 : i32
    scf.if %11 {
      %c0_10 = arith.constant 0 : index
      %c0_11 = arith.constant 0 : index
      %12 = vector.load %arg7[%c0_10, %c0_11] : memref<32x512xf32, #tpu.memory_space<vmem>>, vector<32x512xf32>
      %c0_12 = arith.constant 0 : index
      %c0_13 = arith.constant 0 : index
      %13 = vector.load %arg5[%c0_12, %c0_13] : memref<1x512xbf16, #tpu.memory_space<vmem>>, vector<1x512xbf16>
      %14 = arith.extf %13 : vector<1x512xbf16> to vector<1x512xf32>
      %15 = vector.broadcast %14 : vector<1x512xf32> to vector<32x512xf32>
      %16 = arith.addf %12, %15 : vector<32x512xf32>
      %cst_14 = arith.constant 5.000000e-01 : f32
      %17 = vector.broadcast %cst_14 : f32 to vector<32x512xf32>
      %18 = arith.mulf %17, %16 : vector<32x512xf32>
      %cst_15 = arith.constant 4.471500e-02 : f32
      %19 = vector.broadcast %cst_15 : f32 to vector<32x512xf32>
      %20 = arith.mulf %19, %16 : vector<32x512xf32>
      %21 = arith.mulf %20, %16 : vector<32x512xf32>
      %22 = arith.mulf %21, %16 : vector<32x512xf32>
      %23 = arith.addf %16, %22 : vector<32x512xf32>
      %cst_16 = arith.constant 0.797884583 : f32
      %24 = vector.broadcast %cst_16 : f32 to vector<32x512xf32>
      %25 = arith.mulf %24, %23 : vector<32x512xf32>
      %26 = math.tanh %25 : vector<32x512xf32>
      %cst_17 = arith.constant 1.000000e+00 : f32
      %27 = vector.broadcast %cst_17 : f32 to vector<32x512xf32>
      %28 = arith.addf %27, %26 : vector<32x512xf32>
      %29 = arith.mulf %18, %28 : vector<32x512xf32>
      %30 = arith.truncf %29 : vector<32x512xf32> to vector<32x512xbf16>
      %c0_18 = arith.constant 0 : index
      %c0_19 = arith.constant 0 : index
      %31 = vector.load %arg6[%c0_18, %c0_19] : memref<32x512xbf16, #tpu.memory_space<vmem>>, vector<32x512xbf16>
      tpu.vector_store %arg6[%c0_18, %c0_19], %30 {strides = array<i32>} : memref<32x512xbf16, #tpu.memory_space<vmem>>, vector<32x512xbf16>,
    } else {
    }
    return
  }
  func.func @transform_0(%arg0: i32, %arg1: i32, %arg2: i32) -> (i32, i32) {
    %c0_i32 = arith.constant 0 : i32
    return %arg0, %arg2 : i32, i32
  }
  func.func @transform_1(%arg0: i32, %arg1: i32, %arg2: i32) -> (i32, i32) {
    %c0_i32 = arith.constant 0 : i32
    return %arg2, %arg1 : i32, i32
  }
  func.func @transform_2(%arg0: i32, %arg1: i32, %arg2: i32) -> (i32, i32) {
    %c0_i32 = arith.constant 0 : i32
    %c0_i32_0 = arith.constant 0 : i32
    return %c0_i32, %arg1 : i32, i32
  }
  func.func @transform_3(%arg0: i32, %arg1: i32, %arg2: i32) -> (i32, i32) {
    %c0_i32 = arith.constant 0 : i32
    return %arg0, %arg1 : i32, i32
  }
}

</mosaic_0001>

<llo_original>
// kernel: bert_for_qa.11
$region0: #{bert_for_qa.11}
  #allocation0 [shape = 'u32[]', space=smem, size = 0x4, offset = 0x4, fixed_abs, tag = 'smem constant byte address 0x4 - core index']
  #allocation1 [shape = 'u32[144,128]{1,0:T(1,128)}', space=vmem, size = 0x12000, scoped, tag = 'internal scratch']
  %s0 = inlined_call_operand.vmem [shape: bf16[2,16,128], index: 0, kind: input, shape index: {}]
  %s1 = inlined_call_operand.vmem [shape: bf16[16,128], index: 1, kind: input, shape index: {}]
  %s2 = inlined_call_operand.vmem [shape: bf16[2,16,128], index: 2, kind: input, shape index: {}]
  %s3 = inlined_call_operand.vmem [shape: f32[1,128], index: 3, kind: input, shape index: {}]
  %s4 = inlined_call_operand.vmem [shape: f32[1,128], index: 4, kind: input, shape index: {}]
  %s5 = inlined_call_operand.vmem [shape: bf16[2,16,128], index: 5, kind: output, shape index: {}]
  %s6 = sld [smem:[#allocation0]]
  $region53: #{bert_for_qa.11} parent=0
    _
  %s8 = ssub.s32 1, %s6
  %s9 = scalar_select 0, %s8, %s6
  loop: start=0, step=1, limit=4
  $region2: #{bert_for_qa.11} parent=0 // loop_pre_header
    _
  $region3: #{bert_for_qa.11} parent=0 // loop_header
    %s11 = sphi 0, %s15
    %p12 = scmp.ge.s32.totalorder %s11, 4
    %s21 = sphi 0, %s23
    %s24 = sphi 0, %s21
    %s25 = sphi 0, %s24
    %s41 = sphi 0, %s25
    %s45 = sphi 0, %s45
    %s47 = sphi 0, %s45
    %s48 = sphi 0, %s47
    %s62 = sphi 0, %s48
    %s68 = sphi 0, %s70
    %s71 = sphi 0, %s68
    %s72 = sphi 0, %s71
    %s88 = sphi 0, %s72
    %s92 = sphi 0, %s92
    %s94 = sphi 0, %s92
    %s95 = sphi 0, %s94
    %s109 = sphi 0, %s95
    %s113 = sphi 0, %s113
    %s115 = sphi 0, %s113
    %s116 = sphi 0, %s115
    %s130 = sphi 0, %s116
    %s136 = sphi 0, %s138
    %s139 = sphi 0, %s136
    %s140 = sphi 0, %s139
    %s156 = sphi 0, %s140
  $region4: #{bert_for_qa.11} parent=0 // loop_header_branch
    %14 = sbr.rel (%p12) target = $region8
  $region5: #{bert_for_qa.11} parent=0 // loop_body
    %s16 = ssub.s32 %s11, 1
    %s17 = ssub.s32 %s11, 2
    %s18 = sadd.s32 %s11, 1
    %s19 = ssub.s32 %s11, %s18
    %p20 = scmp.eq.s32.totalorder %s19, 0
    %s22 = sadd.s32 %s21, 1
    %s23 = scalar_select %p20, %s21, %s22
    %p26 = pneg %p20
    %p27 = scmp.eq.s32.totalorder %s11, 1
    %p28 = por %p26, %p27
    %p29 = scmp.ne.s32.totalorder %s21, %s24
    %p30 = scmp.eq.s32.totalorder %s11, 0
    %p31 = por %p29, %p30
    %p32 = scmp.ne.s32.totalorder %s21, %s24
    %p33 = scmp.eq.s32.totalorder %s16, 1
    %p34 = por %p32, %p33
    %p35 = scmp.ne.s32.totalorder %s24, %s25
    %p36 = scmp.eq.s32.totalorder %s16, 0
    %p37 = por %p35, %p36
    %p38 = scmp.ne.s32.totalorder %s24, %s25
    %p39 = scmp.eq.s32.totalorder %s17, 1
    %p40 = por %p38, %p39
    %p42 = scmp.ne.s32.totalorder %s25, %s41
    %p43 = scmp.eq.s32.totalorder %s17, 0
    %p44 = por %p42, %p43
    %s46 = sadd.s32 %s45, 1
    %p49 = scmp.eq.s32.totalorder %s11, 1
    %p50 = scmp.ne.s32.totalorder %s45, %s47
    %p51 = scmp.eq.s32.totalorder %s11, 0
    %p52 = por %p50, %p51
    %p53 = scmp.ne.s32.totalorder %s45, %s47
    %p54 = scmp.eq.s32.totalorder %s16, 1
    %p55 = por %p53, %p54
    %p56 = scmp.ne.s32.totalorder %s47, %s48
    %p57 = scmp.eq.s32.totalorder %s16, 0
    %p58 = por %p56, %p57
    %p59 = scmp.ne.s32.totalorder %s47, %s48
    %p60 = scmp.eq.s32.totalorder %s17, 1
    %p61 = por %p59, %p60
    %p63 = scmp.ne.s32.totalorder %s48, %s62
    %p64 = scmp.eq.s32.totalorder %s17, 0
    %p65 = por %p63, %p64
    %s66 = ssub.s32 %s11, %s18
    %p67 = scmp.eq.s32.totalorder %s66, 0
    %s69 = sadd.s32 %s68, 1
    %s70 = scalar_select %p67, %s68, %s69
    %p73 = pneg %p67
    %p74 = scmp.eq.s32.totalorder %s11, 1
    %p75 = por %p73, %p74
    %p76 = scmp.ne.s32.totalorder %s68, %s71
    %p77 = scmp.eq.s32.totalorder %s11, 0
    %p78 = por %p76, %p77
    %p79 = scmp.ne.s32.totalorder %s68, %s71
    %p80 = scmp.eq.s32.totalorder %s16, 1
    %p81 = por %p79, %p80
    %p82 = scmp.ne.s32.totalorder %s71, %s72
    %p83 = scmp.eq.s32.totalorder %s16, 0
    %p84 = por %p82, %p83
    %p85 = scmp.ne.s32.totalorder %s71, %s72
    %p86 = scmp.eq.s32.totalorder %s17, 1
    %p87 = por %p85, %p86
    %p89 = scmp.ne.s32.totalorder %s72, %s88
    %p90 = scmp.eq.s32.totalorder %s17, 0
    %p91 = por %p89, %p90
    %s93 = sadd.s32 %s92, 1
    %p96 = scmp.eq.s32.totalorder %s11, 1
    %p97 = scmp.ne.s32.totalorder %s92, %s94
    %p98 = scmp.eq.s32.totalorder %s11, 0
    %p99 = por %p97, %p98
    %p100 = scmp.ne.s32.totalorder %s92, %s94
    %p101 = scmp.eq.s32.totalorder %s16, 1
    %p102 = por %p100, %p101
    %p103 = scmp.ne.s32.totalorder %s94, %s95
    %p104 = scmp.eq.s32.totalorder %s16, 0
    %p105 = por %p103, %p104
    %p106 = scmp.ne.s32.totalorder %s94, %s95
    %p107 = scmp.eq.s32.totalorder %s17, 1
    %p108 = por %p106, %p107
    %p110 = scmp.ne.s32.totalorder %s95, %s109
    %p111 = scmp.eq.s32.totalorder %s17, 0
    %p112 = por %p110, %p111
    %s114 = sadd.s32 %s113, 1
    %p117 = scmp.eq.s32.totalorder %s11, 1
    %p118 = scmp.ne.s32.totalorder %s113, %s115
    %p119 = scmp.eq.s32.totalorder %s11, 0
    %p120 = por %p118, %p119
    %p121 = scmp.ne.s32.totalorder %s113, %s115
    %p122 = scmp.eq.s32.totalorder %s16, 1
    %p123 = por %p121, %p122
    %p124 = scmp.ne.s32.totalorder %s115, %s116
    %p125 = scmp.eq.s32.totalorder %s16, 0
    %p126 = por %p124, %p125
    %p127 = scmp.ne.s32.totalorder %s115, %s116
    %p128 = scmp.eq.s32.totalorder %s17, 1
    %p129 = por %p127, %p128
    %p131 = scmp.ne.s32.totalorder %s116, %s130
    %p132 = scmp.eq.s32.totalorder %s17, 0
    %p133 = por %p131, %p132
    %s134 = ssub.s32 %s11, %s18
    %p135 = scmp.eq.s32.totalorder %s134, 0
    %s137 = sadd.s32 %s136, 1
    %s138 = scalar_select %p135, %s136, %s137
    %p141 = pneg %p135
    %p142 = scmp.eq.s32.totalorder %s11, 1
    %p143 = por %p141, %p142
    %p144 = scmp.ne.s32.totalorder %s136, %s139
    %p145 = scmp.eq.s32.totalorder %s11, 0
    %p146 = por %p144, %p145
    %p147 = scmp.ne.s32.totalorder %s136, %s139
    %p148 = scmp.eq.s32.totalorder %s16, 1
    %p149 = por %p147, %p148
    %p150 = scmp.ne.s32.totalorder %s139, %s140
    %p151 = scmp.eq.s32.totalorder %s16, 0
    %p152 = por %p150, %p151
    %p153 = scmp.ne.s32.totalorder %s139, %s140
    %p154 = scmp.eq.s32.totalorder %s17, 1
    %p155 = por %p153, %p154
    %p157 = scmp.ne.s32.totalorder %s140, %s156
    %p158 = scmp.eq.s32.totalorder %s17, 0
    %p159 = por %p157, %p158
    %p160 = scmp.le.s32.totalorder 1, %s11
    %p161 = scmp.lt.s32.totalorder %s11, 3
    %p162 = pnand %p160, %p161
    %p163 = pneg %p162
    // Predicated region
    $region9: #{bert_for_qa.11} parent=5 // pred_check
      _
    $region10: #{bert_for_qa.11} parent=5 // pred_check_branch
      %165 = sbr.rel (%p162) target = $region12
    $region11: #{bert_for_qa.11} parent=5 // pred_region
      %s166 = ssub.s32 %s11, 1
      // Predicated region
      $region13: #{bert_for_qa.11} parent=11 // pred_check
        %p167 = pneg %p58
      $region14: #{bert_for_qa.11} parent=11 // pred_check_branch
        %169 = sbr.rel (%p167) target = $region16
      $region15: #{bert_for_qa.11} parent=11 // pred_region
        _
      $region16: #{bert_for_qa.11} parent=11 // pred_fallthru
        _
      // Predicated region
      $region17: #{bert_for_qa.11} parent=11 // pred_check
        %p170 = pneg %p105
      $region18: #{bert_for_qa.11} parent=11 // pred_check_branch
        %172 = sbr.rel (%p170) target = $region20
      $region19: #{bert_for_qa.11} parent=11 // pred_region
        _
      $region20: #{bert_for_qa.11} parent=11 // pred_fallthru
        _
      // Predicated region
      $region21: #{bert_for_qa.11} parent=11 // pred_check
        %p173 = pneg %p126
      $region22: #{bert_for_qa.11} parent=11 // pred_check_branch
        %175 = sbr.rel (%p173) target = $region24
      $region23: #{bert_for_qa.11} parent=11 // pred_region
        _
      $region24: #{bert_for_qa.11} parent=11 // pred_fallthru
        _
    $region12: #{bert_for_qa.11} parent=5 // pred_fallthru
      _
    %p176 = scmp.lt.s32.totalorder %s11, 2
    // Predicated region
    $region25: #{bert_for_qa.11} parent=5 // pred_check
      %p177 = pneg %p176
    $region26: #{bert_for_qa.11} parent=5 // pred_check_branch
      %179 = sbr.rel (%p177) target = $region28
    $region27: #{bert_for_qa.11} parent=5 // pred_region
      // Predicated region
      $region29: #{bert_for_qa.11} parent=27 // pred_check
        %p180 = pneg %p31
      $region30: #{bert_for_qa.11} parent=27 // pred_check_branch
        %182 = sbr.rel (%p180) target = $region32
      $region31: #{bert_for_qa.11} parent=27 // pred_region
        %p183 = scmp.lt.s32.totalorder %s11, 1
        %s184 = scalar_select %p183, %s11, 1
        %s185 = smul.addr %s184, 2
        %s186 = smul.addr %s185, 4
        %s187 = scalar_lea.vmem %s0, %s186
      $region32: #{bert_for_qa.11} parent=27 // pred_fallthru
        _
      // Predicated region
      $region33: #{bert_for_qa.11} parent=27 // pred_check
        %p188 = pneg %p78
      $region34: #{bert_for_qa.11} parent=27 // pred_check_branch
        %190 = sbr.rel (%p188) target = $region36
      $region35: #{bert_for_qa.11} parent=27 // pred_region
        %p191 = scmp.lt.s32.totalorder %s11, 1
        %s192 = scalar_select %p191, %s11, 1
        %s193 = smul.addr %s192, 2
        %s194 = smul.addr %s193, 4
        %s195 = scalar_lea.vmem %s2, %s194
      $region36: #{bert_for_qa.11} parent=27 // pred_fallthru
        _
    $region28: #{bert_for_qa.11} parent=5 // pred_fallthru
      _
    %p196 = scmp.le.s32.totalorder 1, %s11
    %p197 = scmp.lt.s32.totalorder %s11, 3
    %p198 = pnand %p196, %p197
    %p199 = pneg %p198
    // Predicated region
    $region37: #{bert_for_qa.11} parent=5 // pred_check
      _
    $region38: #{bert_for_qa.11} parent=5 // pred_check_branch
      %201 = sbr.rel (%p198) target = $region40
    $region39: #{bert_for_qa.11} parent=5 // pred_region
      %s202 = ssub.s32 %s11, 1
      %p203 = scmp.lt.s32.totalorder %s16, 1
      %s204 = scalar_select %p203, %s16, 1
      %s205 = smul.addr %s204, 2
      %s206 = smul.addr %s205, 4
      %s207 = scalar_lea.vmem %s0, %s206
      %p208 = pneg %p37
      %p209 = pneg %p34
      %p210 = pneg %p58
      %p211 = pneg %p55
      %p212 = scmp.lt.s32.totalorder %s16, 1
      %s213 = scalar_select %p212, %s16, 1
      %s214 = smul.addr %s213, 2
      %s215 = smul.addr %s214, 4
      %s216 = scalar_lea.vmem %s2, %s215
      %p217 = pneg %p84
      %p218 = pneg %p81
      %p219 = pneg %p105
      %p220 = pneg %p102
      %p221 = pneg %p126
      %p222 = pneg %p123
      %p223 = pneg %p152
      %p224 = pneg %p149
      %p225 = scmp.lt.s32.totalorder %s16, 1
      %s226 = scalar_select %p225, %s16, 1
      %s227 = smul.addr %s226, 2
      %s228 = smul.addr %s227, 4
      %s229 = scalar_lea.vmem %s5, %s228
      %p230 = scmp.lt.s32.totalorder %s16, 1
      %s231 = scalar_select %p230, %s16, 1
      %s232 = smul.addr %s231, 2
      %s233 = smul.addr %s232, 4
      %s234 = scalar_lea.vmem %s0, %s233
      %p235 = scmp.lt.s32.totalorder %s16, 1
      %s236 = scalar_select %p235, %s16, 1
      %s237 = smul.addr %s236, 2
      %s238 = smul.addr %s237, 4
      %s239 = scalar_lea.vmem %s2, %s238
      %p240 = scmp.lt.s32.totalorder %s16, 1
      %s241 = scalar_select %p240, %s16, 1
      %s242 = smul.addr %s241, 2
      %s243 = smul.addr %s242, 4
      %s244 = scalar_lea.vmem %s5, %s243
      %v245 = vld [vmem:[%s234] sm:$0xf]
      %v246 = vld [vmem:[%s234 + $0x4] sm:$0xf]
      %v247 = vunpack.c.l.bf16 %v245
      %v248 = vunpack.c.l.bf16 %v246
      %v249 = vld [vmem:[%s1] sm:$0xf]
      %v250 = vld [vmem:[%s1 + $0x4] sm:$0xf]
      %v251 = vunpack.c.l.bf16 %v249
      %v252 = vunpack.c.l.bf16 %v250
      %v253 = vadd.f32 %v247, %v251
      %v254 = vadd.f32 %v248, %v252
      %v255 = vld [vmem:[%s239] sm:$0xf]
      %v256 = vld [vmem:[%s239 + $0x4] sm:$0xf]
      %v257 = vunpack.c.l.bf16 %v255
      %v258 = vunpack.c.l.bf16 %v256
      %v259 = vadd.f32 %v253, %v257
      %v260 = vadd.f32 %v254, %v258
      %261 = vadd.xlane.f32.xlu0 %v259
      %v262 = vpop.xlane.xlu0 %261
      %263 = vadd.xlane.f32.xlu0 %v260
      %v264 = vpop.xlane.xlu0 %263
      %v265 = vrcp.pop 128.0
      %v266 = vmul.f32 %v262, %v265
      %v267 = vmul.f32 %v264, %v265
      %v268 = vsub.f32 %v259, %v266
      %v269 = vsub.f32 %v260, %v267
      %v270 = vmul.f32 %v268, %v268
      %v271 = vmul.f32 %v269, %v269
      %272 = vadd.xlane.f32.xlu0 %v270
      %v273 = vpop.xlane.xlu0 %272
      %274 = vadd.xlane.f32.xlu0 %v271
      %v275 = vpop.xlane.xlu0 %274
      %v276 = vmul.f32 %v273, %v265
      %v277 = vmul.f32 %v275, %v265
      %v278 = vadd.f32 %v276, 1e-12
      %v279 = vadd.f32 %v277, 1e-12
      %v280 = vrsqrt.pop %v278
      %v281 = vrsqrt.pop %v279
      %v282 = vmul.f32 %v268, %v280
      %v283 = vmul.f32 %v269, %v281
      %v284 = vld [vmem:[%s3] sm:$0x1]
      %v286 = vlaneseq
      %v287 = vshrl.u32 %v286, 7
      %v288 = vsub.s32 0, %v287
      %v289 = vrot.slane %v284, %v288
      %v291 = vmul.f32 %v282, %v289
      %v292 = vmul.f32 %v283, %v289
      %v293 = vld [vmem:[%s4] sm:$0x1]
      %v295 = vlaneseq
      %v296 = vshrl.u32 %v295, 7
      %v297 = vsub.s32 0, %v296
      %v298 = vrot.slane %v293, %v297
      %v300 = vadd.f32 %v291, %v298
      %v301 = vadd.f32 %v292, %v298
      %v302 = vpack.c.bf16 %v301, %v300
      %v304 = vunpack.c.l.b16 %v302
      %v305 = vunpack.c.h.b16 %v302
      %v306 = vpack.c.b16 %v304, %v304
      %v307 = vpack.c.b16 %v305, %v305
      %310 = vst [vmem:[%s244] sm:$0xf] %v306
      %311 = vst [vmem:[%s244 + $0x4] sm:$0xf] %v307
      %p312 = scmp.lt.s32.totalorder %s16, 1
      %s313 = scalar_select %p312, %s16, 1
      %s314 = smul.addr %s313, 2
      %s315 = smul.addr %s314, 4
      %s316 = scalar_lea.vmem %s5, %s315
      // Predicated region
      $region41: #{bert_for_qa.11} parent=39 // pred_check
        %p317 = pneg %p149
      $region42: #{bert_for_qa.11} parent=39 // pred_check_branch
        %319 = sbr.rel (%p317) target = $region44
      $region43: #{bert_for_qa.11} parent=39 // pred_region
        _
      $region44: #{bert_for_qa.11} parent=39 // pred_fallthru
        _
    $region40: #{bert_for_qa.11} parent=5 // pred_fallthru
      _
    %p320 = scmp.le.s32.totalorder 2, %s11
    // Predicated region
    $region45: #{bert_for_qa.11} parent=5 // pred_check
      %p321 = pneg %p320
    $region46: #{bert_for_qa.11} parent=5 // pred_check_branch
      %323 = sbr.rel (%p321) target = $region48
    $region47: #{bert_for_qa.11} parent=5 // pred_region
      %s324 = ssub.s32 %s11, 2
      // Predicated region
      $region49: #{bert_for_qa.11} parent=47 // pred_check
        %p325 = pneg %p155
      $region50: #{bert_for_qa.11} parent=47 // pred_check_branch
        %327 = sbr.rel (%p325) target = $region52
      $region51: #{bert_for_qa.11} parent=47 // pred_region
        %p328 = scmp.lt.s32.totalorder %s17, 1
        %s329 = scalar_select %p328, %s17, 1
        %s330 = smul.addr %s329, 2
        %s331 = smul.addr %s330, 4
        %s332 = scalar_lea.vmem %s5, %s331
      $region52: #{bert_for_qa.11} parent=47 // pred_fallthru
        _
    $region48: #{bert_for_qa.11} parent=5 // pred_fallthru
      _
  $region6: #{bert_for_qa.11} parent=0 // loop_footer
    %s15 = sadd.s32 1, %s11
  $region7: #{bert_for_qa.11} parent=0 // loop_footer_branch
    %10 = sbr.rel target = $region3
  $region8: #{bert_for_qa.11} parent=0 // loop_exit
    _

// kernel: bert_for_qa.13
$region0: #{bert_for_qa.13}
  #allocation0 [shape = 'u32[]', space=smem, size = 0x4, offset = 0x4, fixed_abs, tag = 'smem constant byte address 0x4 - core index']
  #allocation1 [shape = 'u32[144,128]{1,0:T(1,128)}', space=vmem, size = 0x12000, scoped, tag = 'internal scratch']
  #allocation2 [shape = 'f32[16,128]{1,0:T(8,128)}', space=vmem, size = 0x2000, scoped, tag = 'scratch operand']
  %s0 = inlined_call_operand.vmem [shape: bf16[2,16,384], index: 0, kind: input, shape index: {}]
  %s1 = inlined_call_operand.vmem [shape: f32[2,1,16], index: 1, kind: input, shape index: {}]
  %s2 = inlined_call_operand.vmem [shape: bf16[2,16,128], index: 2, kind: output, shape index: {}]
  %s3 = sld [smem:[#allocation0]]
  $region41: #{bert_for_qa.13} parent=0
    _
  %s5 = ssub.s32 1, %s3
  %s6 = scalar_select 0, %s5, %s3
  loop: start=0, step=1, limit=4
  $region2: #{bert_for_qa.13} parent=0 // loop_pre_header
    _
  $region3: #{bert_for_qa.13} parent=0 // loop_header
    %s8 = sphi 0, %s12
    %p9 = scmp.ge.s32.totalorder %s8, 4
    %s18 = sphi 0, %s20
    %s21 = sphi 0, %s18
    %s22 = sphi 0, %s21
    %s38 = sphi 0, %s22
    %s44 = sphi 0, %s46
    %s47 = sphi 0, %s44
    %s48 = sphi 0, %s47
    %s64 = sphi 0, %s48
    %s70 = sphi 0, %s72
    %s73 = sphi 0, %s70
    %s74 = sphi 0, %s73
    %s90 = sphi 0, %s74
  $region4: #{bert_for_qa.13} parent=0 // loop_header_branch
    %11 = sbr.rel (%p9) target = $region8
  $region5: #{bert_for_qa.13} parent=0 // loop_body
    %s13 = ssub.s32 %s8, 1
    %s14 = ssub.s32 %s8, 2
    %s15 = sadd.s32 %s8, 1
    %s16 = ssub.s32 %s8, %s15
    %p17 = scmp.eq.s32.totalorder %s16, 0
    %s19 = sadd.s32 %s18, 1
    %s20 = scalar_select %p17, %s18, %s19
    %p23 = pneg %p17
    %p24 = scmp.eq.s32.totalorder %s8, 1
    %p25 = por %p23, %p24
    %p26 = scmp.ne.s32.totalorder %s18, %s21
    %p27 = scmp.eq.s32.totalorder %s8, 0
    %p28 = por %p26, %p27
    %p29 = scmp.ne.s32.totalorder %s18, %s21
    %p30 = scmp.eq.s32.totalorder %s13, 1
    %p31 = por %p29, %p30
    %p32 = scmp.ne.s32.totalorder %s21, %s22
    %p33 = scmp.eq.s32.totalorder %s13, 0
    %p34 = por %p32, %p33
    %p35 = scmp.ne.s32.totalorder %s21, %s22
    %p36 = scmp.eq.s32.totalorder %s14, 1
    %p37 = por %p35, %p36
    %p39 = scmp.ne.s32.totalorder %s22, %s38
    %p40 = scmp.eq.s32.totalorder %s14, 0
    %p41 = por %p39, %p40
    %s42 = ssub.s32 %s8, %s15
    %p43 = scmp.eq.s32.totalorder %s42, 0
    %s45 = sadd.s32 %s44, 1
    %s46 = scalar_select %p43, %s44, %s45
    %p49 = pneg %p43
    %p50 = scmp.eq.s32.totalorder %s8, 1
    %p51 = por %p49, %p50
    %p52 = scmp.ne.s32.totalorder %s44, %s47
    %p53 = scmp.eq.s32.totalorder %s8, 0
    %p54 = por %p52, %p53
    %p55 = scmp.ne.s32.totalorder %s44, %s47
    %p56 = scmp.eq.s32.totalorder %s13, 1
    %p57 = por %p55, %p56
    %p58 = scmp.ne.s32.totalorder %s47, %s48
    %p59 = scmp.eq.s32.totalorder %s13, 0
    %p60 = por %p58, %p59
    %p61 = scmp.ne.s32.totalorder %s47, %s48
    %p62 = scmp.eq.s32.totalorder %s14, 1
    %p63 = por %p61, %p62
    %p65 = scmp.ne.s32.totalorder %s48, %s64
    %p66 = scmp.eq.s32.totalorder %s14, 0
    %p67 = por %p65, %p66
    %s68 = ssub.s32 %s8, %s15
    %p69 = scmp.eq.s32.totalorder %s68, 0
    %s71 = sadd.s32 %s70, 1
    %s72 = scalar_select %p69, %s70, %s71
    %p75 = pneg %p69
    %p76 = scmp.eq.s32.totalorder %s8, 1
    %p77 = por %p75, %p76
    %p78 = scmp.ne.s32.totalorder %s70, %s73
    %p79 = scmp.eq.s32.totalorder %s8, 0
    %p80 = por %p78, %p79
    %p81 = scmp.ne.s32.totalorder %s70, %s73
    %p82 = scmp.eq.s32.totalorder %s13, 1
    %p83 = por %p81, %p82
    %p84 = scmp.ne.s32.totalorder %s73, %s74
    %p85 = scmp.eq.s32.totalorder %s13, 0
    %p86 = por %p84, %p85
    %p87 = scmp.ne.s32.totalorder %s73, %s74
    %p88 = scmp.eq.s32.totalorder %s14, 1
    %p89 = por %p87, %p88
    %p91 = scmp.ne.s32.totalorder %s74, %s90
    %p92 = scmp.eq.s32.totalorder %s14, 0
    %p93 = por %p91, %p92
    %p94 = scmp.le.s32.totalorder 1, %s8
    %p95 = scmp.lt.s32.totalorder %s8, 3
    %p96 = pnand %p94, %p95
    %p97 = pneg %p96
    // Predicated region
    $region9: #{bert_for_qa.13} parent=5 // pred_check
      _
    $region10: #{bert_for_qa.13} parent=5 // pred_check_branch
      %99 = sbr.rel (%p96) target = $region12
    $region11: #{bert_for_qa.13} parent=5 // pred_region
      %s100 = ssub.s32 %s8, 1
    $region12: #{bert_for_qa.13} parent=5 // pred_fallthru
      _
    %p101 = scmp.lt.s32.totalorder %s8, 2
    // Predicated region
    $region13: #{bert_for_qa.13} parent=5 // pred_check
      %p102 = pneg %p101
    $region14: #{bert_for_qa.13} parent=5 // pred_check_branch
      %104 = sbr.rel (%p102) target = $region16
    $region15: #{bert_for_qa.13} parent=5 // pred_region
      // Predicated region
      $region17: #{bert_for_qa.13} parent=15 // pred_check
        %p105 = pneg %p28
      $region18: #{bert_for_qa.13} parent=15 // pred_check_branch
        %107 = sbr.rel (%p105) target = $region20
      $region19: #{bert_for_qa.13} parent=15 // pred_region
        %p108 = scmp.lt.s32.totalorder %s8, 1
        %s109 = scalar_select %p108, %s8, 1
        %s110 = smul.addr %s109, 6
        %s111 = smul.addr %s110, 4
        %s112 = scalar_lea.vmem %s0, %s111
      $region20: #{bert_for_qa.13} parent=15 // pred_fallthru
        _
      // Predicated region
      $region21: #{bert_for_qa.13} parent=15 // pred_check
        %p113 = pneg %p54
      $region22: #{bert_for_qa.13} parent=15 // pred_check_branch
        %115 = sbr.rel (%p113) target = $region24
      $region23: #{bert_for_qa.13} parent=15 // pred_region
        %p116 = scmp.lt.s32.totalorder %s8, 1
        %s117 = scalar_select %p116, %s8, 1
        %s118 = scalar_lea.vmem %s1, %s117
      $region24: #{bert_for_qa.13} parent=15 // pred_fallthru
        _
    $region16: #{bert_for_qa.13} parent=5 // pred_fallthru
      _
    %p119 = scmp.le.s32.totalorder 1, %s8
    %p120 = scmp.lt.s32.totalorder %s8, 3
    %p121 = pnand %p119, %p120
    %p122 = pneg %p121
    // Predicated region
    $region25: #{bert_for_qa.13} parent=5 // pred_check
      _
    $region26: #{bert_for_qa.13} parent=5 // pred_check_branch
      %124 = sbr.rel (%p121) target = $region28
    $region27: #{bert_for_qa.13} parent=5 // pred_region
      %s125 = ssub.s32 %s8, 1
      %p126 = scmp.lt.s32.totalorder %s13, 1
      %s127 = scalar_select %p126, %s13, 1
      %s128 = smul.addr %s127, 6
      %s129 = smul.addr %s128, 4
      %s130 = scalar_lea.vmem %s0, %s129
      %p131 = pneg %p34
      %p132 = pneg %p31
      %p133 = scmp.lt.s32.totalorder %s13, 1
      %s134 = scalar_select %p133, %s13, 1
      %s135 = scalar_lea.vmem %s1, %s134
      %p136 = pneg %p60
      %p137 = pneg %p57
      %p138 = pneg %p86
      %p139 = pneg %p83
      %p140 = scmp.lt.s32.totalorder %s13, 1
      %s141 = scalar_select %p140, %s13, 1
      %s142 = smul.addr %s141, 2
      %s143 = smul.addr %s142, 4
      %s144 = scalar_lea.vmem %s2, %s143
      %p145 = scmp.lt.s32.totalorder %s13, 1
      %s146 = scalar_select %p145, %s13, 1
      %s147 = smul.addr %s146, 6
      %s148 = smul.addr %s147, 4
      %s149 = scalar_lea.vmem %s0, %s148
      %p150 = scmp.lt.s32.totalorder %s13, 1
      %s151 = scalar_select %p150, %s13, 1
      %s152 = scalar_lea.vmem %s1, %s151
      %p153 = scmp.lt.s32.totalorder %s13, 1
      %s154 = scalar_select %p153, %s13, 1
      %s155 = smul.addr %s154, 2
      %s156 = smul.addr %s155, 4
      %s157 = scalar_lea.vmem %s2, %s156
      %v160 = vld [vmem:[%s149] sm:$0xff]
      %v161 = vld [vmem:[%s149 + $0x8] sm:$0xf]
      %v162 = vld [vmem:[%s149 + $0xc] sm:$0xff]
      %v163 = vld [vmem:[%s149 + $0x14] sm:$0xf]
      %v164 = vld [vmem:[%s152] sm:$0x1]
      %v165 = vmul.bf16 %v160, 1043676725
      %v166 = vmul.bf16 %v162, 1043676725
      %v168 = vlaneseq
      %v169 = vshrl.u32 %v168, 7
      %v170 = vsub.s32 0, %v169
      %v171 = vrot.slane %v164, %v170
      %v175 = vunpack.c.l.b16 %v165
      %v176 = vunpack.c.l.b16 %v166
      %v177 = vpack.c.b16 %v176, %v175
      %v180 = vunpack.c.h.b16 %v160
      %v181 = vunpack.c.h.b16 %v162
      %v182 = vpack.c.b16 %v181, %v180
      %vm183 = vcmask 261120
      %v185 = vsel %vm183, %v177, 0
      %v188 = vsel %vm183, %v182, 0
      %190 = vmatprep.subr.bf16.mxu0 0
      %191 = vmatpush1.bf16.xpose.msra.mxu0 %v188
      %192 = vmatprep.subr.bf16.mxu0 0
      %193 = vmatpush1.bf16.xpose.msra.mxu0 0
      %194 = vmatprep.subr.bf16.mxu0 0
      %195 = vmatpush1.bf16.xpose.msra.mxu0 0
      %196 = vmatprep.subr.bf16.mxu0 0
      %197 = vmatpush1.bf16.xpose.msra.mxu0 0
      %198 = vmatprep.subr.bf16.mxu0 0
      %199 = vmatpush1.bf16.xpose.msra.mxu0 0
      %200 = vmatprep.subr.bf16.mxu0 0
      %201 = vmatpush1.bf16.xpose.msra.mxu0 0
      %202 = vmatprep.subr.bf16.mxu0 0
      %203 = vmatpush1.bf16.xpose.msra.mxu0 0
      %204 = vmatprep.subr.bf16.mxu0 0
      %205 = vmatpush1.bf16.xpose.msra.mxu0 0
      %206 = vmatprep.subr.bf16.mxu0 0
      %207 = vmatpush1.bf16.xpose.msra.mxu0 0
      %208 = vmatprep.subr.bf16.mxu0 0
      %209 = vmatpush1.bf16.xpose.msra.mxu0 0
      %210 = vmatprep.subr.bf16.mxu0 0
      %211 = vmatpush1.bf16.xpose.msra.mxu0 0
      %212 = vmatprep.subr.bf16.mxu0 0
      %213 = vmatpush1.bf16.xpose.msra.mxu0 0
      %214 = vmatprep.subr.bf16.mxu0 0
      %215 = vmatpush1.bf16.xpose.msra.mxu0 0
      %216 = vmatprep.subr.bf16.mxu0 0
      %217 = vmatpush1.bf16.xpose.msra.mxu0 0
      %218 = vmatprep.subr.bf16.mxu0 0
      %219 = vmatpush1.bf16.xpose.msra.mxu0 0
      %220 = vmatprep.subr.bf16.mxu0 0
      %221 = vmatpush1.bf16.xpose.msra.mxu0 0
      %222 = vmatprep.mubr.bf16.mxu0 0
      %223 = vmatmul.mubr.bf16.gmra.mrb[0].mxu0 %v185
      %v224 = vpop.f32.mrb[0].mxu0
      %v225 = vadd.f32 %v171, %v224
      %v226 = vpop.f32.mrb[0].mxu0
      %v227 = vpop.f32.mrb[0].mxu0
      %v228 = vadd.f32 %v171, %v227
      %v229 = vpop.f32.mrb[0].mxu0
      %230 = vdwg.mxu0
      %vm231 = vcmask 130048
      %v232 = vsel %vm231, %v225, -inf
      %233 = vmax.xlane.f32.xlu0 %v232
      %v234 = vpop.xlane.xlu0 %233
      %v235 = vsel %vm231, %v228, -inf
      %236 = vmax.xlane.f32.xlu0 %v235
      %v237 = vpop.xlane.xlu0 %236
      %v238 = vsub.f32 %v225, %v234
      %v239 = vsub.f32 %v228, %v237
      %v240 = vmul.f32 %v238, 1.442695
      %v241 = vpow.pop %v240
      %v242 = vmul.f32 %v239, 1.442695
      %v243 = vpow.pop %v242
      %v244 = vsel %vm231, %v241, 0.0
      %245 = vadd.xlane.f32.xlu0 %v244
      %v246 = vpop.xlane.xlu0 %245
      %v247 = vsel %vm231, %v243, 0.0
      %248 = vadd.xlane.f32.xlu0 %v247
      %v249 = vpop.xlane.xlu0 %248
      %v250 = vrcp.pop %v246
      %v251 = vrcp.pop %v249
      %v252 = vmul.f32 %v241, %v250
      %v253 = vmul.f32 %v243, %v251
      %v254 = vpack.c.bf16 %v253, %v252
      %v257 = vunpack.c.l.b16 %v161
      %v258 = vunpack.c.l.b16 %v163
      %v259 = vpack.c.b16 %v258, %v257
      %v262 = vsel %vm231, %v254, 0
      %264 = vmatprep.subr.bf16.mxu0 0
      %265 = vmatpush1.bf16.msra.mxu0 %v259
      %266 = vmatprep.subr.bf16.mxu0 0
      %267 = vmatpush1.bf16.msra.mxu0 0
      %268 = vmatprep.subr.bf16.mxu0 0
      %269 = vmatpush1.bf16.msra.mxu0 0
      %270 = vmatprep.subr.bf16.mxu0 0
      %271 = vmatpush1.bf16.msra.mxu0 0
      %272 = vmatprep.subr.bf16.mxu0 0
      %273 = vmatpush1.bf16.msra.mxu0 0
      %274 = vmatprep.subr.bf16.mxu0 0
      %275 = vmatpush1.bf16.msra.mxu0 0
      %276 = vmatprep.subr.bf16.mxu0 0
      %277 = vmatpush1.bf16.msra.mxu0 0
      %278 = vmatprep.subr.bf16.mxu0 0
      %279 = vmatpush1.bf16.msra.mxu0 0
      %280 = vmatprep.subr.bf16.mxu0 0
      %281 = vmatpush1.bf16.msra.mxu0 0
      %282 = vmatprep.subr.bf16.mxu0 0
      %283 = vmatpush1.bf16.msra.mxu0 0
      %284 = vmatprep.subr.bf16.mxu0 0
      %285 = vmatpush1.bf16.msra.mxu0 0
      %286 = vmatprep.subr.bf16.mxu0 0
      %287 = vmatpush1.bf16.msra.mxu0 0
      %288 = vmatprep.subr.bf16.mxu0 0
      %289 = vmatpush1.bf16.msra.mxu0 0
      %290 = vmatprep.subr.bf16.mxu0 0
      %291 = vmatpush1.bf16.msra.mxu0 0
      %292 = vmatprep.subr.bf16.mxu0 0
      %293 = vmatpush1.bf16.msra.mxu0 0
      %294 = vmatprep.subr.bf16.mxu0 0
      %295 = vmatpush1.bf16.msra.mxu0 0
      %296 = vmatprep.mubr.bf16.mxu0 0
      %297 = vmatmul.mubr.bf16.gmra.mrb[0].mxu0 %v262
      %v298 = vpop.f32.mrb[0].mxu0
      %v299 = vadd.f32 0.0, %v298
      %v300 = vpop.f32.mrb[0].mxu0
      %v301 = vpop.f32.mrb[0].mxu0
      %v302 = vadd.f32 0.0, %v301
      %v303 = vpop.f32.mrb[0].mxu0
      %304 = vdwg.mxu0
      %305 = vst.msk [vmem:[#allocation2] sm:$0xff] %vm183, %v299
      %306 = vst.msk [vmem:[#allocation2 + $0x8] sm:$0xff] %vm183, %v302
      %307 = vrot.lane.b32.xlu0 %v177, 96
      %v308 = vpop.permute.xlu0 %307
      %309 = vrot.lane.b32.xlu0 %v182, 96
      %v310 = vpop.permute.xlu0 %309
      %v312 = vsel %vm183, %v308, 0
      %v315 = vsel %vm183, %v310, 0
      %317 = vmatprep.subr.bf16.mxu0 0
      %318 = vmatpush1.bf16.xpose.msra.mxu0 %v315
      %319 = vmatprep.subr.bf16.mxu0 0
      %320 = vmatpush1.bf16.xpose.msra.mxu0 0
      %321 = vmatprep.subr.bf16.mxu0 0
      %322 = vmatpush1.bf16.xpose.msra.mxu0 0
      %323 = vmatprep.subr.bf16.mxu0 0
      %324 = vmatpush1.bf16.xpose.msra.mxu0 0
      %325 = vmatprep.subr.bf16.mxu0 0
      %326 = vmatpush1.bf16.xpose.msra.mxu0 0
      %327 = vmatprep.subr.bf16.mxu0 0
      %328 = vmatpush1.bf16.xpose.msra.mxu0 0
      %329 = vmatprep.subr.bf16.mxu0 0
      %330 = vmatpush1.bf16.xpose.msra.mxu0 0
      %331 = vmatprep.subr.bf16.mxu0 0
      %332 = vmatpush1.bf16.xpose.msra.mxu0 0
      %333 = vmatprep.subr.bf16.mxu0 0
      %334 = vmatpush1.bf16.xpose.msra.mxu0 0
      %335 = vmatprep.subr.bf16.mxu0 0
      %336 = vmatpush1.bf16.xpose.msra.mxu0 0
      %337 = vmatprep.subr.bf16.mxu0 0
      %338 = vmatpush1.bf16.xpose.msra.mxu0 0
      %339 = vmatprep.subr.bf16.mxu0 0
      %340 = vmatpush1.bf16.xpose.msra.mxu0 0
      %341 = vmatprep.subr.bf16.mxu0 0
      %342 = vmatpush1.bf16.xpose.msra.mxu0 0
      %343 = vmatprep.subr.bf16.mxu0 0
      %344 = vmatpush1.bf16.xpose.msra.mxu0 0
      %345 = vmatprep.subr.bf16.mxu0 0
      %346 = vmatpush1.bf16.xpose.msra.mxu0 0
      %347 = vmatprep.subr.bf16.mxu0 0
      %348 = vmatpush1.bf16.xpose.msra.mxu0 0
      %349 = vmatprep.mubr.bf16.mxu0 0
      %350 = vmatmul.mubr.bf16.gmra.mrb[0].mxu0 %v312
      %v351 = vpop.f32.mrb[0].mxu0
      %v352 = vadd.f32 %v171, %v351
      %v353 = vpop.f32.mrb[0].mxu0
      %v354 = vpop.f32.mrb[0].mxu0
      %v355 = vadd.f32 %v171, %v354
      %v356 = vpop.f32.mrb[0].mxu0
      %357 = vdwg.mxu0
      %v358 = vsel %vm231, %v352, -inf
      %359 = vmax.xlane.f32.xlu0 %v358
      %v360 = vpop.xlane.xlu0 %359
      %v361 = vsel %vm231, %v355, -inf
      %362 = vmax.xlane.f32.xlu0 %v361
      %v363 = vpop.xlane.xlu0 %362
      %v364 = vsub.f32 %v352, %v360
      %v365 = vsub.f32 %v355, %v363
      %v366 = vmul.f32 %v364, 1.442695
      %v367 = vpow.pop %v366
      %v368 = vmul.f32 %v365, 1.442695
      %v369 = vpow.pop %v368
      %v370 = vsel %vm231, %v367, 0.0
      %371 = vadd.xlane.f32.xlu0 %v370
      %v372 = vpop.xlane.xlu0 %371
      %v373 = vsel %vm231, %v369, 0.0
      %374 = vadd.xlane.f32.xlu0 %v373
      %v375 = vpop.xlane.xlu0 %374
      %v376 = vrcp.pop %v372
      %v377 = vrcp.pop %v375
      %v378 = vmul.f32 %v367, %v376
      %v379 = vmul.f32 %v369, %v377
      %v380 = vpack.c.bf16 %v379, %v378
      %381 = vrot.lane.b32.xlu0 %v259, 96
      %v382 = vpop.permute.xlu0 %381
      %v385 = vsel %vm231, %v380, 0
      %387 = vmatprep.subr.bf16.mxu0 0
      %388 = vmatpush1.bf16.msra.mxu0 %v382
      %389 = vmatprep.subr.bf16.mxu0 0
      %390 = vmatpush1.bf16.msra.mxu0 0
      %391 = vmatprep.subr.bf16.mxu0 0
      %392 = vmatpush1.bf16.msra.mxu0 0
      %393 = vmatprep.subr.bf16.mxu0 0
      %394 = vmatpush1.bf16.msra.mxu0 0
      %395 = vmatprep.subr.bf16.mxu0 0
      %396 = vmatpush1.bf16.msra.mxu0 0
      %397 = vmatprep.subr.bf16.mxu0 0
      %398 = vmatpush1.bf16.msra.mxu0 0
      %399 = vmatprep.subr.bf16.mxu0 0
      %400 = vmatpush1.bf16.msra.mxu0 0
      %401 = vmatprep.subr.bf16.mxu0 0
      %402 = vmatpush1.bf16.msra.mxu0 0
      %403 = vmatprep.subr.bf16.mxu0 0
      %404 = vmatpush1.bf16.msra.mxu0 0
      %405 = vmatprep.subr.bf16.mxu0 0
      %406 = vmatpush1.bf16.msra.mxu0 0
      %407 = vmatprep.subr.bf16.mxu0 0
      %408 = vmatpush1.bf16.msra.mxu0 0
      %409 = vmatprep.subr.bf16.mxu0 0
      %410 = vmatpush1.bf16.msra.mxu0 0
      %411 = vmatprep.subr.bf16.mxu0 0
      %412 = vmatpush1.bf16.msra.mxu0 0
      %413 = vmatprep.subr.bf16.mxu0 0
      %414 = vmatpush1.bf16.msra.mxu0 0
      %415 = vmatprep.subr.bf16.mxu0 0
      %416 = vmatpush1.bf16.msra.mxu0 0
      %417 = vmatprep.subr.bf16.mxu0 0
      %418 = vmatpush1.bf16.msra.mxu0 0
      %419 = vmatprep.mubr.bf16.mxu0 0
      %420 = vmatmul.mubr.bf16.gmra.mrb[0].mxu0 %v385
      %v421 = vpop.f32.mrb[0].mxu0
      %v422 = vadd.f32 0.0, %v421
      %v423 = vpop.f32.mrb[0].mxu0
      %v424 = vpop.f32.mrb[0].mxu0
      %v425 = vadd.f32 0.0, %v424
      %v426 = vpop.f32.mrb[0].mxu0
      %427 = vdwg.mxu0
      %430 = vrot.lane.b32.xlu0 %v422, 32
      %v431 = vpop.permute.xlu0 %430
      %432 = vrot.lane.b32.xlu0 %v425, 32
      %v433 = vpop.permute.xlu0 %432
      %vm436 = vcmask 523520
      %437 = vst.msk [vmem:[#allocation2] sm:$0xff] %vm436, %v431
      %438 = vst.msk [vmem:[#allocation2 + $0x8] sm:$0xff] %vm436, %v433
      %439 = vrot.lane.b32.xlu0 %v177, 64
      %v440 = vpop.permute.xlu0 %439
      %441 = vrot.lane.b32.xlu0 %v182, 64
      %v442 = vpop.permute.xlu0 %441
      %v444 = vsel %vm183, %v440, 0
      %v447 = vsel %vm183, %v442, 0
      %449 = vmatprep.subr.bf16.mxu0 0
      %450 = vmatpush1.bf16.xpose.msra.mxu0 %v447
      %451 = vmatprep.subr.bf16.mxu0 0
      %452 = vmatpush1.bf16.xpose.msra.mxu0 0
      %453 = vmatprep.subr.bf16.mxu0 0
      %454 = vmatpush1.bf16.xpose.msra.mxu0 0
      %455 = vmatprep.subr.bf16.mxu0 0
      %456 = vmatpush1.bf16.xpose.msra.mxu0 0
      %457 = vmatprep.subr.bf16.mxu0 0
      %458 = vmatpush1.bf16.xpose.msra.mxu0 0
      %459 = vmatprep.subr.bf16.mxu0 0
      %460 = vmatpush1.bf16.xpose.msra.mxu0 0
      %461 = vmatprep.subr.bf16.mxu0 0
      %462 = vmatpush1.bf16.xpose.msra.mxu0 0
      %463 = vmatprep.subr.bf16.mxu0 0
      %464 = vmatpush1.bf16.xpose.msra.mxu0 0
      %465 = vmatprep.subr.bf16.mxu0 0
      %466 = vmatpush1.bf16.xpose.msra.mxu0 0
      %467 = vmatprep.subr.bf16.mxu0 0
      %468 = vmatpush1.bf16.xpose.msra.mxu0 0
      %469 = vmatprep.subr.bf16.mxu0 0
      %470 = vmatpush1.bf16.xpose.msra.mxu0 0
      %471 = vmatprep.subr.bf16.mxu0 0
      %472 = vmatpush1.bf16.xpose.msra.mxu0 0
      %473 = vmatprep.subr.bf16.mxu0 0
      %474 = vmatpush1.bf16.xpose.msra.mxu0 0
      %475 = vmatprep.subr.bf16.mxu0 0
      %476 = vmatpush1.bf16.xpose.msra.mxu0 0
      %477 = vmatprep.subr.bf16.mxu0 0
      %478 = vmatpush1.bf16.xpose.msra.mxu0 0
      %479 = vmatprep.subr.bf16.mxu0 0
      %480 = vmatpush1.bf16.xpose.msra.mxu0 0
      %481 = vmatprep.mubr.bf16.mxu0 0
      %482 = vmatmul.mubr.bf16.gmra.mrb[0].mxu0 %v444
      %v483 = vpop.f32.mrb[0].mxu0
      %v484 = vadd.f32 %v171, %v483
      %v485 = vpop.f32.mrb[0].mxu0
      %v486 = vpop.f32.mrb[0].mxu0
      %v487 = vadd.f32 %v171, %v486
      %v488 = vpop.f32.mrb[0].mxu0
      %489 = vdwg.mxu0
      %v490 = vsel %vm231, %v484, -inf
      %491 = vmax.xlane.f32.xlu0 %v490
      %v492 = vpop.xlane.xlu0 %491
      %v493 = vsel %vm231, %v487, -inf
      %494 = vmax.xlane.f32.xlu0 %v493
      %v495 = vpop.xlane.xlu0 %494
      %v496 = vsub.f32 %v484, %v492
      %v497 = vsub.f32 %v487, %v495
      %v498 = vmul.f32 %v496, 1.442695
      %v499 = vpow.pop %v498
      %v500 = vmul.f32 %v497, 1.442695
      %v501 = vpow.pop %v500
      %v502 = vsel %vm231, %v499, 0.0
      %503 = vadd.xlane.f32.xlu0 %v502
      %v504 = vpop.xlane.xlu0 %503
      %v505 = vsel %vm231, %v501, 0.0
      %506 = vadd.xlane.f32.xlu0 %v505
      %v507 = vpop.xlane.xlu0 %506
      %v508 = vrcp.pop %v504
      %v509 = vrcp.pop %v507
      %v510 = vmul.f32 %v499, %v508
      %v511 = vmul.f32 %v501, %v509
      %v512 = vpack.c.bf16 %v511, %v510
      %513 = vrot.lane.b32.xlu0 %v259, 64
      %v514 = vpop.permute.xlu0 %513
      %v517 = vsel %vm231, %v512, 0
      %519 = vmatprep.subr.bf16.mxu0 0
      %520 = vmatpush1.bf16.msra.mxu0 %v514
      %521 = vmatprep.subr.bf16.mxu0 0
      %522 = vmatpush1.bf16.msra.mxu0 0
      %523 = vmatprep.subr.bf16.mxu0 0
      %524 = vmatpush1.bf16.msra.mxu0 0
      %525 = vmatprep.subr.bf16.mxu0 0
      %526 = vmatpush1.bf16.msra.mxu0 0
      %527 = vmatprep.subr.bf16.mxu0 0
      %528 = vmatpush1.bf16.msra.mxu0 0
      %529 = vmatprep.subr.bf16.mxu0 0
      %530 = vmatpush1.bf16.msra.mxu0 0
      %531 = vmatprep.subr.bf16.mxu0 0
      %532 = vmatpush1.bf16.msra.mxu0 0
      %533 = vmatprep.subr.bf16.mxu0 0
      %534 = vmatpush1.bf16.msra.mxu0 0
      %535 = vmatprep.subr.bf16.mxu0 0
      %536 = vmatpush1.bf16.msra.mxu0 0
      %537 = vmatprep.subr.bf16.mxu0 0
      %538 = vmatpush1.bf16.msra.mxu0 0
      %539 = vmatprep.subr.bf16.mxu0 0
      %540 = vmatpush1.bf16.msra.mxu0 0
      %541 = vmatprep.subr.bf16.mxu0 0
      %542 = vmatpush1.bf16.msra.mxu0 0
      %543 = vmatprep.subr.bf16.mxu0 0
      %544 = vmatpush1.bf16.msra.mxu0 0
      %545 = vmatprep.subr.bf16.mxu0 0
      %546 = vmatpush1.bf16.msra.mxu0 0
      %547 = vmatprep.subr.bf16.mxu0 0
      %548 = vmatpush1.bf16.msra.mxu0 0
      %549 = vmatprep.subr.bf16.mxu0 0
      %550 = vmatpush1.bf16.msra.mxu0 0
      %551 = vmatprep.mubr.bf16.mxu0 0
      %552 = vmatmul.mubr.bf16.gmra.mrb[0].mxu0 %v517
      %v553 = vpop.f32.mrb[0].mxu0
      %v554 = vadd.f32 0.0, %v553
      %v555 = vpop.f32.mrb[0].mxu0
      %v556 = vpop.f32.mrb[0].mxu0
      %v557 = vadd.f32 0.0, %v556
      %v558 = vpop.f32.mrb[0].mxu0
      %559 = vdwg.mxu0
      %562 = vrot.lane.b32.xlu0 %v554, 64
      %v563 = vpop.permute.xlu0 %562
      %564 = vrot.lane.b32.xlu0 %v557, 64
      %v565 = vpop.permute.xlu0 %564
      %vm568 = vcmask 785920
      %569 = vst.msk [vmem:[#allocation2] sm:$0xff] %vm568, %v563
      %570 = vst.msk [vmem:[#allocation2 + $0x8] sm:$0xff] %vm568, %v565
      %571 = vrot.lane.b32.xlu0 %v177, 32
      %v572 = vpop.permute.xlu0 %571
      %573 = vrot.lane.b32.xlu0 %v182, 32
      %v574 = vpop.permute.xlu0 %573
      %v576 = vsel %vm183, %v572, 0
      %v579 = vsel %vm183, %v574, 0
      %581 = vmatprep.subr.bf16.mxu0 0
      %582 = vmatpush1.bf16.xpose.msra.mxu0 %v579
      %583 = vmatprep.subr.bf16.mxu0 0
      %584 = vmatpush1.bf16.xpose.msra.mxu0 0
      %585 = vmatprep.subr.bf16.mxu0 0
      %586 = vmatpush1.bf16.xpose.msra.mxu0 0
      %587 = vmatprep.subr.bf16.mxu0 0
      %588 = vmatpush1.bf16.xpose.msra.mxu0 0
      %589 = vmatprep.subr.bf16.mxu0 0
      %590 = vmatpush1.bf16.xpose.msra.mxu0 0
      %591 = vmatprep.subr.bf16.mxu0 0
      %592 = vmatpush1.bf16.xpose.msra.mxu0 0
      %593 = vmatprep.subr.bf16.mxu0 0
      %594 = vmatpush1.bf16.xpose.msra.mxu0 0
      %595 = vmatprep.subr.bf16.mxu0 0
      %596 = vmatpush1.bf16.xpose.msra.mxu0 0
      %597 = vmatprep.subr.bf16.mxu0 0
      %598 = vmatpush1.bf16.xpose.msra.mxu0 0
      %599 = vmatprep.subr.bf16.mxu0 0
      %600 = vmatpush1.bf16.xpose.msra.mxu0 0
      %601 = vmatprep.subr.bf16.mxu0 0
      %602 = vmatpush1.bf16.xpose.msra.mxu0 0
      %603 = vmatprep.subr.bf16.mxu0 0
      %604 = vmatpush1.bf16.xpose.msra.mxu0 0
      %605 = vmatprep.subr.bf16.mxu0 0
      %606 = vmatpush1.bf16.xpose.msra.mxu0 0
      %607 = vmatprep.subr.bf16.mxu0 0
      %608 = vmatpush1.bf16.xpose.msra.mxu0 0
      %609 = vmatprep.subr.bf16.mxu0 0
      %610 = vmatpush1.bf16.xpose.msra.mxu0 0
      %611 = vmatprep.subr.bf16.mxu0 0
      %612 = vmatpush1.bf16.xpose.msra.mxu0 0
      %613 = vmatprep.mubr.bf16.mxu0 0
      %614 = vmatmul.mubr.bf16.gmra.mrb[0].mxu0 %v576
      %v615 = vpop.f32.mrb[0].mxu0
      %v616 = vadd.f32 %v171, %v615
      %v617 = vpop.f32.mrb[0].mxu0
      %v618 = vpop.f32.mrb[0].mxu0
      %v619 = vadd.f32 %v171, %v618
      %v620 = vpop.f32.mrb[0].mxu0
      %621 = vdwg.mxu0
      %v622 = vsel %vm231, %v616, -inf
      %623 = vmax.xlane.f32.xlu0 %v622
      %v624 = vpop.xlane.xlu0 %623
      %v625 = vsel %vm231, %v619, -inf
      %626 = vmax.xlane.f32.xlu0 %v625
      %v627 = vpop.xlane.xlu0 %626
      %v628 = vsub.f32 %v616, %v624
      %v629 = vsub.f32 %v619, %v627
      %v630 = vmul.f32 %v628, 1.442695
      %v631 = vpow.pop %v630
      %v632 = vmul.f32 %v629, 1.442695
      %v633 = vpow.pop %v632
      %v634 = vsel %vm231, %v631, 0.0
      %635 = vadd.xlane.f32.xlu0 %v634
      %v636 = vpop.xlane.xlu0 %635
      %v637 = vsel %vm231, %v633, 0.0
      %638 = vadd.xlane.f32.xlu0 %v637
      %v639 = vpop.xlane.xlu0 %638
      %v640 = vrcp.pop %v636
      %v641 = vrcp.pop %v639
      %v642 = vmul.f32 %v631, %v640
      %v643 = vmul.f32 %v633, %v641
      %v644 = vpack.c.bf16 %v643, %v642
      %645 = vrot.lane.b32.xlu0 %v259, 32
      %v646 = vpop.permute.xlu0 %645
      %v649 = vsel %vm231, %v644, 0
      %651 = vmatprep.subr.bf16.mxu0 0
      %652 = vmatpush1.bf16.msra.mxu0 %v646
      %653 = vmatprep.subr.bf16.mxu0 0
      %654 = vmatpush1.bf16.msra.mxu0 0
      %655 = vmatprep.subr.bf16.mxu0 0
      %656 = vmatpush1.bf16.msra.mxu0 0
      %657 = vmatprep.subr.bf16.mxu0 0
      %658 = vmatpush1.bf16.msra.mxu0 0
      %659 = vmatprep.subr.bf16.mxu0 0
      %660 = vmatpush1.bf16.msra.mxu0 0
      %661 = vmatprep.subr.bf16.mxu0 0
      %662 = vmatpush1.bf16.msra.mxu0 0
      %663 = vmatprep.subr.bf16.mxu0 0
      %664 = vmatpush1.bf16.msra.mxu0 0
      %665 = vmatprep.subr.bf16.mxu0 0
      %666 = vmatpush1.bf16.msra.mxu0 0
      %667 = vmatprep.subr.bf16.mxu0 0
      %668 = vmatpush1.bf16.msra.mxu0 0
      %669 = vmatprep.subr.bf16.mxu0 0
      %670 = vmatpush1.bf16.msra.mxu0 0
      %671 = vmatprep.subr.bf16.mxu0 0
      %672 = vmatpush1.bf16.msra.mxu0 0
      %673 = vmatprep.subr.bf16.mxu0 0
      %674 = vmatpush1.bf16.msra.mxu0 0
      %675 = vmatprep.subr.bf16.mxu0 0
      %676 = vmatpush1.bf16.msra.mxu0 0
      %677 = vmatprep.subr.bf16.mxu0 0
      %678 = vmatpush1.bf16.msra.mxu0 0
      %679 = vmatprep.subr.bf16.mxu0 0
      %680 = vmatpush1.bf16.msra.mxu0 0
      %681 = vmatprep.subr.bf16.mxu0 0
      %682 = vmatpush1.bf16.msra.mxu0 0
      %683 = vmatprep.mubr.bf16.mxu0 0
      %684 = vmatmul.mubr.bf16.gmra.mrb[0].mxu0 %v649
      %v685 = vpop.f32.mrb[0].mxu0
      %v686 = vadd.f32 0.0, %v685
      %v687 = vpop.f32.mrb[0].mxu0
      %v688 = vpop.f32.mrb[0].mxu0
      %v689 = vadd.f32 0.0, %v688
      %v690 = vpop.f32.mrb[0].mxu0
      %691 = vdwg.mxu0
      %694 = vrot.lane.b32.xlu0 %v686, 96
      %v695 = vpop.permute.xlu0 %694
      %696 = vrot.lane.b32.xlu0 %v689, 96
      %v697 = vpop.permute.xlu0 %696
      %vm700 = vcmask 1048320
      %701 = vst.msk [vmem:[#allocation2] sm:$0xff] %vm700, %v695
      %702 = vst.msk [vmem:[#allocation2 + $0x8] sm:$0xff] %vm700, %v697
      %v703 = vld [vmem:[#allocation2] sm:$0xff]
      %v704 = vld [vmem:[#allocation2 + $0x8] sm:$0xff]
      %v705 = vpack.c.bf16 %v704, %v703
      %v707 = vunpack.c.l.b16 %v705
      %v708 = vunpack.c.h.b16 %v705
      %v709 = vpack.c.b16 %v707, %v707
      %v710 = vpack.c.b16 %v708, %v708
      %713 = vst [vmem:[%s157] sm:$0xf] %v709
      %714 = vst [vmem:[%s157 + $0x4] sm:$0xf] %v710
      %p715 = scmp.lt.s32.totalorder %s13, 1
      %s716 = scalar_select %p715, %s13, 1
      %s717 = smul.addr %s716, 2
      %s718 = smul.addr %s717, 4
      %s719 = scalar_lea.vmem %s2, %s718
      // Predicated region
      $region29: #{bert_for_qa.13} parent=27 // pred_check
        %p720 = pneg %p83
      $region30: #{bert_for_qa.13} parent=27 // pred_check_branch
        %722 = sbr.rel (%p720) target = $region32
      $region31: #{bert_for_qa.13} parent=27 // pred_region
        _
      $region32: #{bert_for_qa.13} parent=27 // pred_fallthru
        _
    $region28: #{bert_for_qa.13} parent=5 // pred_fallthru
      _
    %p723 = scmp.le.s32.totalorder 2, %s8
    // Predicated region
    $region33: #{bert_for_qa.13} parent=5 // pred_check
      %p724 = pneg %p723
    $region34: #{bert_for_qa.13} parent=5 // pred_check_branch
      %726 = sbr.rel (%p724) target = $region36
    $region35: #{bert_for_qa.13} parent=5 // pred_region
      %s727 = ssub.s32 %s8, 2
      // Predicated region
      $region37: #{bert_for_qa.13} parent=35 // pred_check
        %p728 = pneg %p89
      $region38: #{bert_for_qa.13} parent=35 // pred_check_branch
        %730 = sbr.rel (%p728) target = $region40
      $region39: #{bert_for_qa.13} parent=35 // pred_region
        %p731 = scmp.lt.s32.totalorder %s14, 1
        %s732 = scalar_select %p731, %s14, 1
        %s733 = smul.addr %s732, 2
        %s734 = smul.addr %s733, 4
        %s735 = scalar_lea.vmem %s2, %s734
      $region40: #{bert_for_qa.13} parent=35 // pred_fallthru
        _
    $region36: #{bert_for_qa.13} parent=5 // pred_fallthru
      _
  $region6: #{bert_for_qa.13} parent=0 // loop_footer
    %s12 = sadd.s32 1, %s8
  $region7: #{bert_for_qa.13} parent=0 // loop_footer_branch
    %7 = sbr.rel target = $region3
  $region8: #{bert_for_qa.13} parent=0 // loop_exit
    _

// kernel: bert_for_qa.14
$region0: #{bert_for_qa.14}
  #allocation0 [shape = 'u32[]', space=smem, size = 0x4, offset = 0x4, fixed_abs, tag = 'smem constant byte address 0x4 - core index']
  #allocation1 [shape = 'u32[144,128]{1,0:T(1,128)}', space=vmem, size = 0x12000, scoped, tag = 'internal scratch']
  #allocation2 [shape = 'f32[32,128]{1,0:T(8,128)}', space=vmem, size = 0x4000, scoped, tag = 'scratch operand']
  %s0 = inlined_call_operand.vmem [shape: bf16[32,128], index: 0, kind: input, shape index: {}]
  %s1 = inlined_call_operand.vmem [shape: bf16[128,128], index: 1, kind: input, shape index: {}]
  %s2 = inlined_call_operand.vmem [shape: bf16[1,128], index: 2, kind: input, shape index: {}]
  %s3 = inlined_call_operand.vmem [shape: bf16[32,128], index: 3, kind: input, shape index: {}]
  %s4 = inlined_call_operand.vmem [shape: f32[1,128], index: 4, kind: input, shape index: {}]
  %s5 = inlined_call_operand.vmem [shape: f32[1,128], index: 5, kind: input, shape index: {}]
  %s6 = inlined_call_operand.vmem [shape: bf16[32,128], index: 6, kind: output, shape index: {}]
  %s7 = sld [smem:[#allocation0]]
  $region42: #{bert_for_qa.14} parent=0
    _
  %s9 = ssub.s32 1, %s7
  %s10 = scalar_select 0, %s9, %s7
  // Predicated region
  $region2: #{bert_for_qa.14} parent=0 // pred_check
    _
  $region3: #{bert_for_qa.14} parent=0 // pred_check_branch
    %12 = sbr.rel (0) target = $region5
  $region4: #{bert_for_qa.14} parent=0 // pred_region
    _
  $region5: #{bert_for_qa.14} parent=0 // pred_fallthru
    _
  // Predicated region
  $region6: #{bert_for_qa.14} parent=0 // pred_check
    _
  $region7: #{bert_for_qa.14} parent=0 // pred_check_branch
    %14 = sbr.rel (0) target = $region9
  $region8: #{bert_for_qa.14} parent=0 // pred_region
    _
  $region9: #{bert_for_qa.14} parent=0 // pred_fallthru
    _
  // Predicated region
  $region10: #{bert_for_qa.14} parent=0 // pred_check
    _
  $region11: #{bert_for_qa.14} parent=0 // pred_check_branch
    %16 = sbr.rel (0) target = $region13
  $region12: #{bert_for_qa.14} parent=0 // pred_region
    _
  $region13: #{bert_for_qa.14} parent=0 // pred_fallthru
    _
  // Predicated region
  $region14: #{bert_for_qa.14} parent=0 // pred_check
    _
  $region15: #{bert_for_qa.14} parent=0 // pred_check_branch
    %18 = sbr.rel (0) target = $region17
  $region16: #{bert_for_qa.14} parent=0 // pred_region
    _
  $region17: #{bert_for_qa.14} parent=0 // pred_fallthru
    _
  // Predicated region
  $region18: #{bert_for_qa.14} parent=0 // pred_check
    _
  $region19: #{bert_for_qa.14} parent=0 // pred_check_branch
    %20 = sbr.rel (0) target = $region21
  $region20: #{bert_for_qa.14} parent=0 // pred_region
    _
  $region21: #{bert_for_qa.14} parent=0 // pred_fallthru
    _
  // Predicated region
  $region22: #{bert_for_qa.14} parent=0 // pred_check
    _
  $region23: #{bert_for_qa.14} parent=0 // pred_check_branch
    %22 = sbr.rel (0) target = $region25
  $region24: #{bert_for_qa.14} parent=0 // pred_region
    _
  $region25: #{bert_for_qa.14} parent=0 // pred_fallthru
    _
  %p24 = scmp.eq.s32.totalorder 0, 0
  // Predicated region
  $region26: #{bert_for_qa.14} parent=0 // pred_check
    %p25 = pneg %p24
  $region27: #{bert_for_qa.14} parent=0 // pred_check_branch
    %27 = sbr.rel (%p25) target = $region29
  $region28: #{bert_for_qa.14} parent=0 // pred_region
    %28 = vst [vmem:[#allocation2] sm:$0xff] 0.0
    %29 = vst [vmem:[#allocation2 + $0x8] sm:$0xff] 0.0
    %30 = vst [vmem:[#allocation2 + $0x10] sm:$0xff] 0.0
    %31 = vst [vmem:[#allocation2 + $0x18] sm:$0xff] 0.0
  $region29: #{bert_for_qa.14} parent=0 // pred_fallthru
    _
  %v32 = vld [vmem:[#allocation2] sm:$0xff]
  %v33 = vld [vmem:[#allocation2 + $0x8] sm:$0xff]
  %v34 = vld [vmem:[#allocation2 + $0x10] sm:$0xff]
  %v35 = vld [vmem:[#allocation2 + $0x18] sm:$0xff]
  %v36 = vld [vmem:[%s0] sm:$0xf]
  %v37 = vld [vmem:[%s0 + $0x4] sm:$0xf]
  %v38 = vld [vmem:[%s0 + $0x8] sm:$0xf]
  %v39 = vld [vmem:[%s0 + $0xc] sm:$0xf]
  %v40 = vld [vmem:[%s1] sm:$0xf]
  %v41 = vld [vmem:[%s1 + $0x4] sm:$0xf]
  %v42 = vld [vmem:[%s1 + $0x8] sm:$0xf]
  %v43 = vld [vmem:[%s1 + $0xc] sm:$0xf]
  %v44 = vld [vmem:[%s1 + $0x10] sm:$0xf]
  %v45 = vld [vmem:[%s1 + $0x14] sm:$0xf]
  %v46 = vld [vmem:[%s1 + $0x18] sm:$0xf]
  %v47 = vld [vmem:[%s1 + $0x1c] sm:$0xf]
  %v48 = vld [vmem:[%s1 + $0x20] sm:$0xf]
  %v49 = vld [vmem:[%s1 + $0x24] sm:$0xf]
  %v50 = vld [vmem:[%s1 + $0x28] sm:$0xf]
  %v51 = vld [vmem:[%s1 + $0x2c] sm:$0xf]
  %v52 = vld [vmem:[%s1 + $0x30] sm:$0xf]
  %v53 = vld [vmem:[%s1 + $0x34] sm:$0xf]
  %v54 = vld [vmem:[%s1 + $0x38] sm:$0xf]
  %v55 = vld [vmem:[%s1 + $0x3c] sm:$0xf]
  %v60 = vunpack.c.l.b16 %v36
  %v61 = vunpack.c.l.b16 %v37
  %v62 = vunpack.c.l.b16 %v38
  %v63 = vunpack.c.l.b16 %v39
  %v64 = vpack.c.b16 %v61, %v60
  %v65 = vpack.c.b16 %v63, %v62
  %v84 = vunpack.c.l.b16 %v40
  %v85 = vunpack.c.l.b16 %v41
  %v86 = vunpack.c.l.b16 %v42
  %v87 = vunpack.c.l.b16 %v43
  %v88 = vunpack.c.l.b16 %v44
  %v89 = vunpack.c.l.b16 %v45
  %v90 = vunpack.c.l.b16 %v46
  %v91 = vunpack.c.l.b16 %v47
  %v92 = vunpack.c.l.b16 %v48
  %v93 = vunpack.c.l.b16 %v49
  %v94 = vunpack.c.l.b16 %v50
  %v95 = vunpack.c.l.b16 %v51
  %v96 = vunpack.c.l.b16 %v52
  %v97 = vunpack.c.l.b16 %v53
  %v98 = vunpack.c.l.b16 %v54
  %v99 = vunpack.c.l.b16 %v55
  %v100 = vpack.c.b16 %v85, %v84
  %v101 = vpack.c.b16 %v87, %v86
  %v102 = vpack.c.b16 %v89, %v88
  %v103 = vpack.c.b16 %v91, %v90
  %v104 = vpack.c.b16 %v93, %v92
  %v105 = vpack.c.b16 %v95, %v94
  %v106 = vpack.c.b16 %v97, %v96
  %v107 = vpack.c.b16 %v99, %v98
  %116 = vmatprep.subr.bf16.mxu0 0
  %117 = vmatpush1.bf16.msra.mxu0 %v100
  %118 = vmatprep.subr.bf16.mxu0 0
  %119 = vmatpush1.bf16.msra.mxu0 %v101
  %120 = vmatprep.subr.bf16.mxu0 0
  %121 = vmatpush1.bf16.msra.mxu0 %v102
  %122 = vmatprep.subr.bf16.mxu0 0
  %123 = vmatpush1.bf16.msra.mxu0 %v103
  %124 = vmatprep.subr.bf16.mxu0 0
  %125 = vmatpush1.bf16.msra.mxu0 %v104
  %126 = vmatprep.subr.bf16.mxu0 0
  %127 = vmatpush1.bf16.msra.mxu0 %v105
  %128 = vmatprep.subr.bf16.mxu0 0
  %129 = vmatpush1.bf16.msra.mxu0 %v106
  %130 = vmatprep.subr.bf16.mxu0 0
  %131 = vmatpush1.bf16.msra.mxu0 %v107
  %132 = vmatprep.subr.bf16.mxu0 0
  %133 = vmatpush1.bf16.msra.mxu0 0
  %134 = vmatprep.subr.bf16.mxu0 0
  %135 = vmatpush1.bf16.msra.mxu0 0
  %136 = vmatprep.subr.bf16.mxu0 0
  %137 = vmatpush1.bf16.msra.mxu0 0
  %138 = vmatprep.subr.bf16.mxu0 0
  %139 = vmatpush1.bf16.msra.mxu0 0
  %140 = vmatprep.subr.bf16.mxu0 0
  %141 = vmatpush1.bf16.msra.mxu0 0
  %142 = vmatprep.subr.bf16.mxu0 0
  %143 = vmatpush1.bf16.msra.mxu0 0
  %144 = vmatprep.subr.bf16.mxu0 0
  %145 = vmatpush1.bf16.msra.mxu0 0
  %146 = vmatprep.subr.bf16.mxu0 0
  %147 = vmatpush1.bf16.msra.mxu0 0
  %148 = vmatprep.mubr.bf16.mxu0 0
  %149 = vmatmul.mubr.bf16.gmra.mrb[0].mxu0 %v64
  %v150 = vpop.f32.mrb[0].mxu0
  %v151 = vadd.f32 0.0, %v150
  %v152 = vpop.f32.mrb[0].mxu0
  %v153 = vpop.f32.mrb[0].mxu0
  %v154 = vadd.f32 0.0, %v153
  %v155 = vpop.f32.mrb[0].mxu0
  %156 = vmatprep.mubr.bf16.mxu0 0
  %157 = vmatmul.mubr.bf16.gmra.mrb[0].mxu0 %v65
  %v158 = vpop.f32.mrb[0].mxu0
  %v159 = vadd.f32 0.0, %v158
  %v160 = vpop.f32.mrb[0].mxu0
  %v161 = vpop.f32.mrb[0].mxu0
  %v162 = vadd.f32 0.0, %v161
  %v163 = vpop.f32.mrb[0].mxu0
  %164 = vdwg.mxu0
  %v165 = vadd.f32 %v32, %v151
  %v166 = vadd.f32 %v33, %v154
  %v167 = vadd.f32 %v34, %v159
  %v168 = vadd.f32 %v35, %v162
  %169 = vst [vmem:[#allocation2] sm:$0xff] %v165
  %170 = vst [vmem:[#allocation2 + $0x8] sm:$0xff] %v166
  %171 = vst [vmem:[#allocation2 + $0x10] sm:$0xff] %v167
  %172 = vst [vmem:[#allocation2 + $0x18] sm:$0xff] %v168
  // Predicated region
  $region30: #{bert_for_qa.14} parent=0 // pred_check
    %p173 = pneg %p24
  $region31: #{bert_for_qa.14} parent=0 // pred_check_branch
    %175 = sbr.rel (%p173) target = $region33
  $region32: #{bert_for_qa.14} parent=0 // pred_region
    %v176 = vld [vmem:[#allocation2] sm:$0xff]
    %v177 = vld [vmem:[#allocation2 + $0x8] sm:$0xff]
    %v178 = vld [vmem:[#allocation2 + $0x10] sm:$0xff]
    %v179 = vld [vmem:[#allocation2 + $0x18] sm:$0xff]
    %v180 = vld [vmem:[%s2] sm:$0x1]
    %v181 = vunpack.c.l.bf16 %v180
    %v182 = vlaneseq
    %v183 = vshrl.u32 %v182, 7
    %v184 = vsub.s32 0, %v183
    %v185 = vrot.slane %v181, %v184
    %v186 = vadd.f32 %v176, %v185
    %v187 = vadd.f32 %v177, %v185
    %v188 = vadd.f32 %v178, %v185
    %v189 = vadd.f32 %v179, %v185
    %v190 = vld [vmem:[%s3] sm:$0xf]
    %v191 = vld [vmem:[%s3 + $0x4] sm:$0xf]
    %v192 = vld [vmem:[%s3 + $0x8] sm:$0xf]
    %v193 = vld [vmem:[%s3 + $0xc] sm:$0xf]
    %v194 = vunpack.c.l.bf16 %v190
    %v195 = vunpack.c.l.bf16 %v191
    %v196 = vunpack.c.l.bf16 %v192
    %v197 = vunpack.c.l.bf16 %v193
    %v198 = vadd.f32 %v186, %v194
    %v199 = vadd.f32 %v187, %v195
    %v200 = vadd.f32 %v188, %v196
    %v201 = vadd.f32 %v189, %v197
    %202 = vadd.xlane.f32.xlu0 %v198
    %v203 = vpop.xlane.xlu0 %202
    %204 = vadd.xlane.f32.xlu0 %v199
    %v205 = vpop.xlane.xlu0 %204
    %206 = vadd.xlane.f32.xlu0 %v200
    %v207 = vpop.xlane.xlu0 %206
    %208 = vadd.xlane.f32.xlu0 %v201
    %v209 = vpop.xlane.xlu0 %208
    %v210 = vrcp.pop 128.0
    %v211 = vmul.f32 %v203, %v210
    %v212 = vmul.f32 %v205, %v210
    %v213 = vmul.f32 %v207, %v210
    %v214 = vmul.f32 %v209, %v210
    %v215 = vsub.f32 %v198, %v211
    %v216 = vsub.f32 %v199, %v212
    %v217 = vsub.f32 %v200, %v213
    %v218 = vsub.f32 %v201, %v214
    %v219 = vmul.f32 %v215, %v215
    %v220 = vmul.f32 %v216, %v216
    %v221 = vmul.f32 %v217, %v217
    %v222 = vmul.f32 %v218, %v218
    %223 = vadd.xlane.f32.xlu0 %v219
    %v224 = vpop.xlane.xlu0 %223
    %225 = vadd.xlane.f32.xlu0 %v220
    %v226 = vpop.xlane.xlu0 %225
    %227 = vadd.xlane.f32.xlu0 %v221
    %v228 = vpop.xlane.xlu0 %227
    %229 = vadd.xlane.f32.xlu0 %v222
    %v230 = vpop.xlane.xlu0 %229
    %v231 = vmul.f32 %v224, %v210
    %v232 = vmul.f32 %v226, %v210
    %v233 = vmul.f32 %v228, %v210
    %v234 = vmul.f32 %v230, %v210
    %v235 = vadd.f32 %v231, 1e-12
    %v236 = vadd.f32 %v232, 1e-12
    %v237 = vadd.f32 %v233, 1e-12
    %v238 = vadd.f32 %v234, 1e-12
    %v239 = vrsqrt.pop %v235
    %v240 = vrsqrt.pop %v236
    %v241 = vrsqrt.pop %v237
    %v242 = vrsqrt.pop %v238
    %v243 = vmul.f32 %v215, %v239
    %v244 = vmul.f32 %v216, %v240
    %v245 = vmul.f32 %v217, %v241
    %v246 = vmul.f32 %v218, %v242
    %v247 = vld [vmem:[%s4] sm:$0x1]
    %v249 = vlaneseq
    %v250 = vshrl.u32 %v249, 7
    %v251 = vsub.s32 0, %v250
    %v252 = vrot.slane %v247, %v251
    %v254 = vmul.f32 %v243, %v252
    %v255 = vmul.f32 %v244, %v252
    %v256 = vmul.f32 %v245, %v252
    %v257 = vmul.f32 %v246, %v252
    %v258 = vld [vmem:[%s5] sm:$0x1]
    %v260 = vlaneseq
    %v261 = vshrl.u32 %v260, 7
    %v262 = vsub.s32 0, %v261
    %v263 = vrot.slane %v258, %v262
    %v265 = vadd.f32 %v254, %v263
    %v266 = vadd.f32 %v255, %v263
    %v267 = vadd.f32 %v256, %v263
    %v268 = vadd.f32 %v257, %v263
    %v269 = vpack.c.bf16 %v266, %v265
    %v270 = vpack.c.bf16 %v268, %v267
    %v273 = vunpack.c.l.b16 %v269
    %v274 = vunpack.c.h.b16 %v269
    %v275 = vunpack.c.l.b16 %v270
    %v276 = vunpack.c.h.b16 %v270
    %v277 = vpack.c.b16 %v273, %v273
    %v278 = vpack.c.b16 %v274, %v274
    %v279 = vpack.c.b16 %v275, %v275
    %v280 = vpack.c.b16 %v276, %v276
    %285 = vst [vmem:[%s6] sm:$0xf] %v277
    %286 = vst [vmem:[%s6 + $0x4] sm:$0xf] %v278
    %287 = vst [vmem:[%s6 + $0x8] sm:$0xf] %v279
    %288 = vst [vmem:[%s6 + $0xc] sm:$0xf] %v280
  $region33: #{bert_for_qa.14} parent=0 // pred_fallthru
    _
  // Predicated region
  $region34: #{bert_for_qa.14} parent=0 // pred_check
    _
  $region35: #{bert_for_qa.14} parent=0 // pred_check_branch
    %290 = sbr.rel (0) target = $region37
  $region36: #{bert_for_qa.14} parent=0 // pred_region
    _
  $region37: #{bert_for_qa.14} parent=0 // pred_fallthru
    _
  // Predicated region
  $region38: #{bert_for_qa.14} parent=0 // pred_check
    _
  $region39: #{bert_for_qa.14} parent=0 // pred_check_branch
    %292 = sbr.rel (0) target = $region41
  $region40: #{bert_for_qa.14} parent=0 // pred_region
    _
  $region41: #{bert_for_qa.14} parent=0 // pred_fallthru
    _

// kernel: bert_for_qa.12
$region0: #{bert_for_qa.12}
  #allocation0 [shape = 'u32[]', space=smem, size = 0x4, offset = 0x4, fixed_abs, tag = 'smem constant byte address 0x4 - core index']
  #allocation1 [shape = 'u32[144,128]{1,0:T(1,128)}', space=vmem, size = 0x12000, scoped, tag = 'internal scratch']
  #allocation2 [shape = 'f32[32,384]{1,0:T(8,128)}', space=vmem, size = 0xc000, scoped, tag = 'scratch operand']
  %s0 = inlined_call_operand.vmem [shape: bf16[32,128], index: 0, kind: input, shape index: {}]
  %s1 = inlined_call_operand.vmem [shape: bf16[128,384], index: 1, kind: input, shape index: {}]
  %s2 = inlined_call_operand.vmem [shape: bf16[1,384], index: 2, kind: input, shape index: {}]
  %s3 = inlined_call_operand.vmem [shape: bf16[32,384], index: 3, kind: output, shape index: {}]
  %s4 = sld [smem:[#allocation0]]
  $region30: #{bert_for_qa.12} parent=0
    _
  %s6 = ssub.s32 1, %s4
  %s7 = scalar_select 0, %s6, %s4
  // Predicated region
  $region2: #{bert_for_qa.12} parent=0 // pred_check
    _
  $region3: #{bert_for_qa.12} parent=0 // pred_check_branch
    %9 = sbr.rel (0) target = $region5
  $region4: #{bert_for_qa.12} parent=0 // pred_region
    _
  $region5: #{bert_for_qa.12} parent=0 // pred_fallthru
    _
  // Predicated region
  $region6: #{bert_for_qa.12} parent=0 // pred_check
    _
  $region7: #{bert_for_qa.12} parent=0 // pred_check_branch
    %11 = sbr.rel (0) target = $region9
  $region8: #{bert_for_qa.12} parent=0 // pred_region
    _
  $region9: #{bert_for_qa.12} parent=0 // pred_fallthru
    _
  // Predicated region
  $region10: #{bert_for_qa.12} parent=0 // pred_check
    _
  $region11: #{bert_for_qa.12} parent=0 // pred_check_branch
    %13 = sbr.rel (0) target = $region13
  $region12: #{bert_for_qa.12} parent=0 // pred_region
    _
  $region13: #{bert_for_qa.12} parent=0 // pred_fallthru
    _
  %p15 = scmp.eq.s32.totalorder 0, 0
  // Predicated region
  $region14: #{bert_for_qa.12} parent=0 // pred_check
    %p16 = pneg %p15
  $region15: #{bert_for_qa.12} parent=0 // pred_check_branch
    %18 = sbr.rel (%p16) target = $region17
  $region16: #{bert_for_qa.12} parent=0 // pred_region
    %19 = vst [vmem:[#allocation2] sm:$0xff] 0.0
    %20 = vst [vmem:[#allocation2 + $0x8] sm:$0xff] 0.0
    %21 = vst [vmem:[#allocation2 + $0x10] sm:$0xff] 0.0
    %22 = vst [vmem:[#allocation2 + $0x18] sm:$0xff] 0.0
    %23 = vst [vmem:[#allocation2 + $0x20] sm:$0xff] 0.0
    %24 = vst [vmem:[#allocation2 + $0x28] sm:$0xff] 0.0
    %25 = vst [vmem:[#allocation2 + $0x30] sm:$0xff] 0.0
    %26 = vst [vmem:[#allocation2 + $0x38] sm:$0xff] 0.0
    %27 = vst [vmem:[#allocation2 + $0x40] sm:$0xff] 0.0
    %28 = vst [vmem:[#allocation2 + $0x48] sm:$0xff] 0.0
    %29 = vst [vmem:[#allocation2 + $0x50] sm:$0xff] 0.0
    %30 = vst [vmem:[#allocation2 + $0x58] sm:$0xff] 0.0
  $region17: #{bert_for_qa.12} parent=0 // pred_fallthru
    _
  %v31 = vld [vmem:[#allocation2] sm:$0xff]
  %v32 = vld [vmem:[#allocation2 + $0x8] sm:$0xff]
  %v33 = vld [vmem:[#allocation2 + $0x10] sm:$0xff]
  %v34 = vld [vmem:[#allocation2 + $0x18] sm:$0xff]
  %v35 = vld [vmem:[#allocation2 + $0x20] sm:$0xff]
  %v36 = vld [vmem:[#allocation2 + $0x28] sm:$0xff]
  %v37 = vld [vmem:[#allocation2 + $0x30] sm:$0xff]
  %v38 = vld [vmem:[#allocation2 + $0x38] sm:$0xff]
  %v39 = vld [vmem:[#allocation2 + $0x40] sm:$0xff]
  %v40 = vld [vmem:[#allocation2 + $0x48] sm:$0xff]
  %v41 = vld [vmem:[#allocation2 + $0x50] sm:$0xff]
  %v42 = vld [vmem:[#allocation2 + $0x58] sm:$0xff]
  %v43 = vld [vmem:[%s0] sm:$0xf]
  %v44 = vld [vmem:[%s0 + $0x4] sm:$0xf]
  %v45 = vld [vmem:[%s0 + $0x8] sm:$0xf]
  %v46 = vld [vmem:[%s0 + $0xc] sm:$0xf]
  %v47 = vld [vmem:[%s1] sm:$0xff]
  %v48 = vld [vmem:[%s1 + $0x8] sm:$0xf]
  %v49 = vld [vmem:[%s1 + $0xc] sm:$0xff]
  %v50 = vld [vmem:[%s1 + $0x14] sm:$0xf]
  %v51 = vld [vmem:[%s1 + $0x18] sm:$0xff]
  %v52 = vld [vmem:[%s1 + $0x20] sm:$0xf]
  %v53 = vld [vmem:[%s1 + $0x24] sm:$0xff]
  %v54 = vld [vmem:[%s1 + $0x2c] sm:$0xf]
  %v55 = vld [vmem:[%s1 + $0x30] sm:$0xff]
  %v56 = vld [vmem:[%s1 + $0x38] sm:$0xf]
  %v57 = vld [vmem:[%s1 + $0x3c] sm:$0xff]
  %v58 = vld [vmem:[%s1 + $0x44] sm:$0xf]
  %v59 = vld [vmem:[%s1 + $0x48] sm:$0xff]
  %v60 = vld [vmem:[%s1 + $0x50] sm:$0xf]
  %v61 = vld [vmem:[%s1 + $0x54] sm:$0xff]
  %v62 = vld [vmem:[%s1 + $0x5c] sm:$0xf]
  %v63 = vld [vmem:[%s1 + $0x60] sm:$0xff]
  %v64 = vld [vmem:[%s1 + $0x68] sm:$0xf]
  %v65 = vld [vmem:[%s1 + $0x6c] sm:$0xff]
  %v66 = vld [vmem:[%s1 + $0x74] sm:$0xf]
  %v67 = vld [vmem:[%s1 + $0x78] sm:$0xff]
  %v68 = vld [vmem:[%s1 + $0x80] sm:$0xf]
  %v69 = vld [vmem:[%s1 + $0x84] sm:$0xff]
  %v70 = vld [vmem:[%s1 + $0x8c] sm:$0xf]
  %v71 = vld [vmem:[%s1 + $0x90] sm:$0xff]
  %v72 = vld [vmem:[%s1 + $0x98] sm:$0xf]
  %v73 = vld [vmem:[%s1 + $0x9c] sm:$0xff]
  %v74 = vld [vmem:[%s1 + $0xa4] sm:$0xf]
  %v75 = vld [vmem:[%s1 + $0xa8] sm:$0xff]
  %v76 = vld [vmem:[%s1 + $0xb0] sm:$0xf]
  %v77 = vld [vmem:[%s1 + $0xb4] sm:$0xff]
  %v78 = vld [vmem:[%s1 + $0xbc] sm:$0xf]
  %v83 = vunpack.c.l.b16 %v43
  %v84 = vunpack.c.l.b16 %v44
  %v85 = vunpack.c.l.b16 %v45
  %v86 = vunpack.c.l.b16 %v46
  %v87 = vpack.c.b16 %v84, %v83
  %v88 = vpack.c.b16 %v86, %v85
  %v123 = vunpack.c.l.b16 %v47
  %v124 = vunpack.c.h.b16 %v47
  %v125 = vunpack.c.l.b16 %v48
  %v126 = vunpack.c.l.b16 %v49
  %v127 = vunpack.c.h.b16 %v49
  %v128 = vunpack.c.l.b16 %v50
  %v129 = vunpack.c.l.b16 %v51
  %v130 = vunpack.c.h.b16 %v51
  %v131 = vunpack.c.l.b16 %v52
  %v132 = vunpack.c.l.b16 %v53
  %v133 = vunpack.c.h.b16 %v53
  %v134 = vunpack.c.l.b16 %v54
  %v135 = vunpack.c.l.b16 %v55
  %v136 = vunpack.c.h.b16 %v55
  %v137 = vunpack.c.l.b16 %v56
  %v138 = vunpack.c.l.b16 %v57
  %v139 = vunpack.c.h.b16 %v57
  %v140 = vunpack.c.l.b16 %v58
  %v141 = vunpack.c.l.b16 %v59
  %v142 = vunpack.c.h.b16 %v59
  %v143 = vunpack.c.l.b16 %v60
  %v144 = vunpack.c.l.b16 %v61
  %v145 = vunpack.c.h.b16 %v61
  %v146 = vunpack.c.l.b16 %v62
  %v147 = vunpack.c.l.b16 %v63
  %v148 = vunpack.c.h.b16 %v63
  %v149 = vunpack.c.l.b16 %v64
  %v150 = vunpack.c.l.b16 %v65
  %v151 = vunpack.c.h.b16 %v65
  %v152 = vunpack.c.l.b16 %v66
  %v153 = vunpack.c.l.b16 %v67
  %v154 = vunpack.c.h.b16 %v67
  %v155 = vunpack.c.l.b16 %v68
  %v156 = vunpack.c.l.b16 %v69
  %v157 = vunpack.c.h.b16 %v69
  %v158 = vunpack.c.l.b16 %v70
  %v159 = vunpack.c.l.b16 %v71
  %v160 = vunpack.c.h.b16 %v71
  %v161 = vunpack.c.l.b16 %v72
  %v162 = vunpack.c.l.b16 %v73
  %v163 = vunpack.c.h.b16 %v73
  %v164 = vunpack.c.l.b16 %v74
  %v165 = vunpack.c.l.b16 %v75
  %v166 = vunpack.c.h.b16 %v75
  %v167 = vunpack.c.l.b16 %v76
  %v168 = vunpack.c.l.b16 %v77
  %v169 = vunpack.c.h.b16 %v77
  %v170 = vunpack.c.l.b16 %v78
  %v171 = vpack.c.b16 %v126, %v123
  %v172 = vpack.c.b16 %v127, %v124
  %v173 = vpack.c.b16 %v128, %v125
  %v174 = vpack.c.b16 %v132, %v129
  %v175 = vpack.c.b16 %v133, %v130
  %v176 = vpack.c.b16 %v134, %v131
  %v177 = vpack.c.b16 %v138, %v135
  %v178 = vpack.c.b16 %v139, %v136
  %v179 = vpack.c.b16 %v140, %v137
  %v180 = vpack.c.b16 %v144, %v141
  %v181 = vpack.c.b16 %v145, %v142
  %v182 = vpack.c.b16 %v146, %v143
  %v183 = vpack.c.b16 %v150, %v147
  %v184 = vpack.c.b16 %v151, %v148
  %v185 = vpack.c.b16 %v152, %v149
  %v186 = vpack.c.b16 %v156, %v153
  %v187 = vpack.c.b16 %v157, %v154
  %v188 = vpack.c.b16 %v158, %v155
  %v189 = vpack.c.b16 %v162, %v159
  %v190 = vpack.c.b16 %v163, %v160
  %v191 = vpack.c.b16 %v164, %v161
  %v192 = vpack.c.b16 %v168, %v165
  %v193 = vpack.c.b16 %v169, %v166
  %v194 = vpack.c.b16 %v170, %v167
  %219 = vmatprep.subr.bf16.mxu0 %v172
  %220 = vmatpush1.bf16.msra.mxu0 %v171
  %221 = vmatprep.subr.bf16.mxu0 %v175
  %222 = vmatpush1.bf16.msra.mxu0 %v174
  %223 = vmatprep.subr.bf16.mxu0 %v178
  %224 = vmatpush1.bf16.msra.mxu0 %v177
  %225 = vmatprep.subr.bf16.mxu0 %v181
  %226 = vmatpush1.bf16.msra.mxu0 %v180
  %227 = vmatprep.subr.bf16.mxu0 %v184
  %228 = vmatpush1.bf16.msra.mxu0 %v183
  %229 = vmatprep.subr.bf16.mxu0 %v187
  %230 = vmatpush1.bf16.msra.mxu0 %v186
  %231 = vmatprep.subr.bf16.mxu0 %v190
  %232 = vmatpush1.bf16.msra.mxu0 %v189
  %233 = vmatprep.subr.bf16.mxu0 %v193
  %234 = vmatpush1.bf16.msra.mxu0 %v192
  %235 = vmatprep.subr.bf16.mxu0 0
  %236 = vmatpush1.bf16.msra.mxu0 0
  %237 = vmatprep.subr.bf16.mxu0 0
  %238 = vmatpush1.bf16.msra.mxu0 0
  %239 = vmatprep.subr.bf16.mxu0 0
  %240 = vmatpush1.bf16.msra.mxu0 0
  %241 = vmatprep.subr.bf16.mxu0 0
  %242 = vmatpush1.bf16.msra.mxu0 0
  %243 = vmatprep.subr.bf16.mxu0 0
  %244 = vmatpush1.bf16.msra.mxu0 0
  %245 = vmatprep.subr.bf16.mxu0 0
  %246 = vmatpush1.bf16.msra.mxu0 0
  %247 = vmatprep.subr.bf16.mxu0 0
  %248 = vmatpush1.bf16.msra.mxu0 0
  %249 = vmatprep.subr.bf16.mxu0 0
  %250 = vmatpush1.bf16.msra.mxu0 0
  %251 = vmatprep.mubr.bf16.mxu0 0
  %252 = vmatmul.mubr.bf16.gmra.mrb[0].mxu0 %v87
  %v253 = vpop.f32.mrb[0].mxu0
  %v254 = vadd.f32 0.0, %v253
  %v255 = vpop.f32.mrb[0].mxu0
  %v256 = vadd.f32 0.0, %v255
  %v257 = vpop.f32.mrb[0].mxu0
  %v258 = vadd.f32 0.0, %v257
  %v259 = vpop.f32.mrb[0].mxu0
  %v260 = vadd.f32 0.0, %v259
  %261 = vmatprep.mubr.bf16.mxu0 0
  %262 = vmatmul.mubr.bf16.gmra.mrb[0].mxu0 %v88
  %v263 = vpop.f32.mrb[0].mxu0
  %v264 = vadd.f32 0.0, %v263
  %v265 = vpop.f32.mrb[0].mxu0
  %v266 = vadd.f32 0.0, %v265
  %v267 = vpop.f32.mrb[0].mxu0
  %v268 = vadd.f32 0.0, %v267
  %v269 = vpop.f32.mrb[0].mxu0
  %v270 = vadd.f32 0.0, %v269
  %271 = vdwg.mxu0
  %272 = vmatprep.subr.bf16.mxu0 0
  %273 = vmatpush1.bf16.msra.mxu0 %v173
  %274 = vmatprep.subr.bf16.mxu0 0
  %275 = vmatpush1.bf16.msra.mxu0 %v176
  %276 = vmatprep.subr.bf16.mxu0 0
  %277 = vmatpush1.bf16.msra.mxu0 %v179
  %278 = vmatprep.subr.bf16.mxu0 0
  %279 = vmatpush1.bf16.msra.mxu0 %v182
  %280 = vmatprep.subr.bf16.mxu0 0
  %281 = vmatpush1.bf16.msra.mxu0 %v185
  %282 = vmatprep.subr.bf16.mxu0 0
  %283 = vmatpush1.bf16.msra.mxu0 %v188
  %284 = vmatprep.subr.bf16.mxu0 0
  %285 = vmatpush1.bf16.msra.mxu0 %v191
  %286 = vmatprep.subr.bf16.mxu0 0
  %287 = vmatpush1.bf16.msra.mxu0 %v194
  %288 = vmatprep.subr.bf16.mxu0 0
  %289 = vmatpush1.bf16.msra.mxu0 0
  %290 = vmatprep.subr.bf16.mxu0 0
  %291 = vmatpush1.bf16.msra.mxu0 0
  %292 = vmatprep.subr.bf16.mxu0 0
  %293 = vmatpush1.bf16.msra.mxu0 0
  %294 = vmatprep.subr.bf16.mxu0 0
  %295 = vmatpush1.bf16.msra.mxu0 0
  %296 = vmatprep.subr.bf16.mxu0 0
  %297 = vmatpush1.bf16.msra.mxu0 0
  %298 = vmatprep.subr.bf16.mxu0 0
  %299 = vmatpush1.bf16.msra.mxu0 0
  %300 = vmatprep.subr.bf16.mxu0 0
  %301 = vmatpush1.bf16.msra.mxu0 0
  %302 = vmatprep.subr.bf16.mxu0 0
  %303 = vmatpush1.bf16.msra.mxu0 0
  %304 = vmatprep.mubr.bf16.mxu0 0
  %305 = vmatmul.mubr.bf16.gmra.mrb[0].mxu0 %v87
  %v306 = vpop.f32.mrb[0].mxu0
  %v307 = vadd.f32 0.0, %v306
  %v308 = vpop.f32.mrb[0].mxu0
  %v309 = vpop.f32.mrb[0].mxu0
  %v310 = vadd.f32 0.0, %v309
  %v311 = vpop.f32.mrb[0].mxu0
  %312 = vmatprep.mubr.bf16.mxu0 0
  %313 = vmatmul.mubr.bf16.gmra.mrb[0].mxu0 %v88
  %v314 = vpop.f32.mrb[0].mxu0
  %v315 = vadd.f32 0.0, %v314
  %v316 = vpop.f32.mrb[0].mxu0
  %v317 = vpop.f32.mrb[0].mxu0
  %v318 = vadd.f32 0.0, %v317
  %v319 = vpop.f32.mrb[0].mxu0
  %320 = vdwg.mxu0
  %v321 = vadd.f32 %v31, %v254
  %v322 = vadd.f32 %v32, %v256
  %v323 = vadd.f32 %v33, %v307
  %v324 = vadd.f32 %v34, %v258
  %v325 = vadd.f32 %v35, %v260
  %v326 = vadd.f32 %v36, %v310
  %v327 = vadd.f32 %v37, %v264
  %v328 = vadd.f32 %v38, %v266
  %v329 = vadd.f32 %v39, %v315
  %v330 = vadd.f32 %v40, %v268
  %v331 = vadd.f32 %v41, %v270
  %v332 = vadd.f32 %v42, %v318
  %333 = vst [vmem:[#allocation2] sm:$0xff] %v321
  %334 = vst [vmem:[#allocation2 + $0x8] sm:$0xff] %v322
  %335 = vst [vmem:[#allocation2 + $0x10] sm:$0xff] %v323
  %336 = vst [vmem:[#allocation2 + $0x18] sm:$0xff] %v324
  %337 = vst [vmem:[#allocation2 + $0x20] sm:$0xff] %v325
  %338 = vst [vmem:[#allocation2 + $0x28] sm:$0xff] %v326
  %339 = vst [vmem:[#allocation2 + $0x30] sm:$0xff] %v327
  %340 = vst [vmem:[#allocation2 + $0x38] sm:$0xff] %v328
  %341 = vst [vmem:[#allocation2 + $0x40] sm:$0xff] %v329
  %342 = vst [vmem:[#allocation2 + $0x48] sm:$0xff] %v330
  %343 = vst [vmem:[#allocation2 + $0x50] sm:$0xff] %v331
  %344 = vst [vmem:[#allocation2 + $0x58] sm:$0xff] %v332
  // Predicated region
  $region18: #{bert_for_qa.12} parent=0 // pred_check
    %p345 = pneg %p15
  $region19: #{bert_for_qa.12} parent=0 // pred_check_branch
    %347 = sbr.rel (%p345) target = $region21
  $region20: #{bert_for_qa.12} parent=0 // pred_region
    %v348 = vld [vmem:[#allocation2] sm:$0xff]
    %v349 = vld [vmem:[#allocation2 + $0x8] sm:$0xff]
    %v350 = vld [vmem:[#allocation2 + $0x10] sm:$0xff]
    %v351 = vld [vmem:[#allocation2 + $0x18] sm:$0xff]
    %v352 = vld [vmem:[#allocation2 + $0x20] sm:$0xff]
    %v353 = vld [vmem:[#allocation2 + $0x28] sm:$0xff]
    %v354 = vld [vmem:[#allocation2 + $0x30] sm:$0xff]
    %v355 = vld [vmem:[#allocation2 + $0x38] sm:$0xff]
    %v356 = vld [vmem:[#allocation2 + $0x40] sm:$0xff]
    %v357 = vld [vmem:[#allocation2 + $0x48] sm:$0xff]
    %v358 = vld [vmem:[#allocation2 + $0x50] sm:$0xff]
    %v359 = vld [vmem:[#allocation2 + $0x58] sm:$0xff]
    %v360 = vld [vmem:[%s2] sm:$0x7]
    %v361 = vunpack.c.l.bf16 %v360
    %v363 = vlaneseq
    %v364 = vshrl.u32 %v363, 7
    %v365 = vsub.s32 0, %v364
    %v366 = vrot.slane %v361, %v365
    %v367 = vlaneseq
    %v368 = vshrl.u32 %v367, 7
    %v369 = vsub.s32 2, %v368
    %v370 = vrot.slane %v361, %v369
    %v371 = vlaneseq
    %v372 = vshrl.u32 %v371, 7
    %v373 = vsub.s32 4, %v372
    %v374 = vrot.slane %v361, %v373
    %v378 = vlaneseq
    %v379 = vshrl.u32 %v378, 7
    %v380 = vsub.s32 0, %v379
    %v381 = vrot.slane %v366, %v380
    %v382 = vlaneseq
    %v383 = vshrl.u32 %v382, 7
    %v384 = vsub.s32 0, %v383
    %v385 = vrot.slane %v370, %v384
    %v386 = vlaneseq
    %v387 = vshrl.u32 %v386, 7
    %v388 = vsub.s32 0, %v387
    %v389 = vrot.slane %v374, %v388
    %v390 = vadd.f32 %v348, %v381
    %v391 = vadd.f32 %v349, %v385
    %v392 = vadd.f32 %v350, %v389
    %v393 = vadd.f32 %v351, %v381
    %v394 = vadd.f32 %v352, %v385
    %v395 = vadd.f32 %v353, %v389
    %v396 = vadd.f32 %v354, %v381
    %v397 = vadd.f32 %v355, %v385
    %v398 = vadd.f32 %v356, %v389
    %v399 = vadd.f32 %v357, %v381
    %v400 = vadd.f32 %v358, %v385
    %v401 = vadd.f32 %v359, %v389
    %v402 = vpack.c.bf16 %v393, %v390
    %v403 = vpack.c.bf16 %v394, %v391
    %v404 = vpack.c.bf16 %v395, %v392
    %v405 = vpack.c.bf16 %v399, %v396
    %v406 = vpack.c.bf16 %v400, %v397
    %v407 = vpack.c.bf16 %v401, %v398
    %v414 = vunpack.c.l.b16 %v402
    %v415 = vunpack.c.l.b16 %v403
    %v416 = vunpack.c.l.b16 %v404
    %v417 = vunpack.c.h.b16 %v402
    %v418 = vunpack.c.h.b16 %v403
    %v419 = vunpack.c.h.b16 %v404
    %v420 = vunpack.c.l.b16 %v405
    %v421 = vunpack.c.l.b16 %v406
    %v422 = vunpack.c.l.b16 %v407
    %v423 = vunpack.c.h.b16 %v405
    %v424 = vunpack.c.h.b16 %v406
    %v425 = vunpack.c.h.b16 %v407
    %v426 = vpack.c.b16 %v415, %v414
    %v427 = vpack.c.b16 %v416, %v416
    %v428 = vpack.c.b16 %v418, %v417
    %v429 = vpack.c.b16 %v419, %v419
    %v430 = vpack.c.b16 %v421, %v420
    %v431 = vpack.c.b16 %v422, %v422
    %v432 = vpack.c.b16 %v424, %v423
    %v433 = vpack.c.b16 %v425, %v425
    %442 = vst [vmem:[%s3] sm:$0xff] %v426
    %443 = vst [vmem:[%s3 + $0x8] sm:$0xf] %v427
    %444 = vst [vmem:[%s3 + $0xc] sm:$0xff] %v428
    %445 = vst [vmem:[%s3 + $0x14] sm:$0xf] %v429
    %446 = vst [vmem:[%s3 + $0x18] sm:$0xff] %v430
    %447 = vst [vmem:[%s3 + $0x20] sm:$0xf] %v431
    %448 = vst [vmem:[%s3 + $0x24] sm:$0xff] %v432
    %449 = vst [vmem:[%s3 + $0x2c] sm:$0xf] %v433
  $region21: #{bert_for_qa.12} parent=0 // pred_fallthru
    _
  // Predicated region
  $region22: #{bert_for_qa.12} parent=0 // pred_check
    _
  $region23: #{bert_for_qa.12} parent=0 // pred_check_branch
    %451 = sbr.rel (0) target = $region25
  $region24: #{bert_for_qa.12} parent=0 // pred_region
    _
  $region25: #{bert_for_qa.12} parent=0 // pred_fallthru
    _
  // Predicated region
  $region26: #{bert_for_qa.12} parent=0 // pred_check
    _
  $region27: #{bert_for_qa.12} parent=0 // pred_check_branch
    %453 = sbr.rel (0) target = $region29
  $region28: #{bert_for_qa.12} parent=0 // pred_region
    _
  $region29: #{bert_for_qa.12} parent=0 // pred_fallthru
    _

// kernel: bert_for_qa.16
$region0: #{bert_for_qa.16}
  #allocation0 [shape = 'u32[]', space=smem, size = 0x4, offset = 0x4, fixed_abs, tag = 'smem constant byte address 0x4 - core index']
  #allocation1 [shape = 'u32[144,128]{1,0:T(1,128)}', space=vmem, size = 0x12000, scoped, tag = 'internal scratch']
  #allocation2 [shape = 'f32[32,128]{1,0:T(8,128)}', space=vmem, size = 0x4000, scoped, tag = 'scratch operand']
  %s0 = inlined_call_operand.vmem [shape: bf16[32,512], index: 0, kind: input, shape index: {}]
  %s1 = inlined_call_operand.vmem [shape: bf16[512,128], index: 1, kind: input, shape index: {}]
  %s2 = inlined_call_operand.vmem [shape: bf16[1,128], index: 2, kind: input, shape index: {}]
  %s3 = inlined_call_operand.vmem [shape: bf16[32,128], index: 3, kind: input, shape index: {}]
  %s4 = inlined_call_operand.vmem [shape: f32[1,128], index: 4, kind: input, shape index: {}]
  %s5 = inlined_call_operand.vmem [shape: f32[1,128], index: 5, kind: input, shape index: {}]
  %s6 = inlined_call_operand.vmem [shape: bf16[32,128], index: 6, kind: output, shape index: {}]
  %s7 = sld [smem:[#allocation0]]
  $region42: #{bert_for_qa.16} parent=0
    _
  %s9 = ssub.s32 1, %s7
  %s10 = scalar_select 0, %s9, %s7
  // Predicated region
  $region2: #{bert_for_qa.16} parent=0 // pred_check
    _
  $region3: #{bert_for_qa.16} parent=0 // pred_check_branch
    %12 = sbr.rel (0) target = $region5
  $region4: #{bert_for_qa.16} parent=0 // pred_region
    _
  $region5: #{bert_for_qa.16} parent=0 // pred_fallthru
    _
  // Predicated region
  $region6: #{bert_for_qa.16} parent=0 // pred_check
    _
  $region7: #{bert_for_qa.16} parent=0 // pred_check_branch
    %14 = sbr.rel (0) target = $region9
  $region8: #{bert_for_qa.16} parent=0 // pred_region
    _
  $region9: #{bert_for_qa.16} parent=0 // pred_fallthru
    _
  // Predicated region
  $region10: #{bert_for_qa.16} parent=0 // pred_check
    _
  $region11: #{bert_for_qa.16} parent=0 // pred_check_branch
    %16 = sbr.rel (0) target = $region13
  $region12: #{bert_for_qa.16} parent=0 // pred_region
    _
  $region13: #{bert_for_qa.16} parent=0 // pred_fallthru
    _
  // Predicated region
  $region14: #{bert_for_qa.16} parent=0 // pred_check
    _
  $region15: #{bert_for_qa.16} parent=0 // pred_check_branch
    %18 = sbr.rel (0) target = $region17
  $region16: #{bert_for_qa.16} parent=0 // pred_region
    _
  $region17: #{bert_for_qa.16} parent=0 // pred_fallthru
    _
  // Predicated region
  $region18: #{bert_for_qa.16} parent=0 // pred_check
    _
  $region19: #{bert_for_qa.16} parent=0 // pred_check_branch
    %20 = sbr.rel (0) target = $region21
  $region20: #{bert_for_qa.16} parent=0 // pred_region
    _
  $region21: #{bert_for_qa.16} parent=0 // pred_fallthru
    _
  // Predicated region
  $region22: #{bert_for_qa.16} parent=0 // pred_check
    _
  $region23: #{bert_for_qa.16} parent=0 // pred_check_branch
    %22 = sbr.rel (0) target = $region25
  $region24: #{bert_for_qa.16} parent=0 // pred_region
    _
  $region25: #{bert_for_qa.16} parent=0 // pred_fallthru
    _
  %p24 = scmp.eq.s32.totalorder 0, 0
  // Predicated region
  $region26: #{bert_for_qa.16} parent=0 // pred_check
    %p25 = pneg %p24
  $region27: #{bert_for_qa.16} parent=0 // pred_check_branch
    %27 = sbr.rel (%p25) target = $region29
  $region28: #{bert_for_qa.16} parent=0 // pred_region
    %28 = vst [vmem:[#allocation2] sm:$0xff] 0.0
    %29 = vst [vmem:[#allocation2 + $0x8] sm:$0xff] 0.0
    %30 = vst [vmem:[#allocation2 + $0x10] sm:$0xff] 0.0
    %31 = vst [vmem:[#allocation2 + $0x18] sm:$0xff] 0.0
  $region29: #{bert_for_qa.16} parent=0 // pred_fallthru
    _
  %v32 = vld [vmem:[#allocation2] sm:$0xff]
  %v33 = vld [vmem:[#allocation2 + $0x8] sm:$0xff]
  %v34 = vld [vmem:[#allocation2 + $0x10] sm:$0xff]
  %v35 = vld [vmem:[#allocation2 + $0x18] sm:$0xff]
  %v36 = vld [vmem:[%s0] sm:$0xff]
  %v37 = vld [vmem:[%s0 + $0x8] sm:$0xff]
  %v38 = vld [vmem:[%s0 + $0x10] sm:$0xff]
  %v39 = vld [vmem:[%s0 + $0x18] sm:$0xff]
  %v40 = vld [vmem:[%s0 + $0x20] sm:$0xff]
  %v41 = vld [vmem:[%s0 + $0x28] sm:$0xff]
  %v42 = vld [vmem:[%s0 + $0x30] sm:$0xff]
  %v43 = vld [vmem:[%s0 + $0x38] sm:$0xff]
  %v44 = vld [vmem:[%s1] sm:$0xf]
  %v45 = vld [vmem:[%s1 + $0x4] sm:$0xf]
  %v46 = vld [vmem:[%s1 + $0x8] sm:$0xf]
  %v47 = vld [vmem:[%s1 + $0xc] sm:$0xf]
  %v48 = vld [vmem:[%s1 + $0x10] sm:$0xf]
  %v49 = vld [vmem:[%s1 + $0x14] sm:$0xf]
  %v50 = vld [vmem:[%s1 + $0x18] sm:$0xf]
  %v51 = vld [vmem:[%s1 + $0x1c] sm:$0xf]
  %v52 = vld [vmem:[%s1 + $0x20] sm:$0xf]
  %v53 = vld [vmem:[%s1 + $0x24] sm:$0xf]
  %v54 = vld [vmem:[%s1 + $0x28] sm:$0xf]
  %v55 = vld [vmem:[%s1 + $0x2c] sm:$0xf]
  %v56 = vld [vmem:[%s1 + $0x30] sm:$0xf]
  %v57 = vld [vmem:[%s1 + $0x34] sm:$0xf]
  %v58 = vld [vmem:[%s1 + $0x38] sm:$0xf]
  %v59 = vld [vmem:[%s1 + $0x3c] sm:$0xf]
  %v60 = vld [vmem:[%s1 + $0x40] sm:$0xf]
  %v61 = vld [vmem:[%s1 + $0x44] sm:$0xf]
  %v62 = vld [vmem:[%s1 + $0x48] sm:$0xf]
  %v63 = vld [vmem:[%s1 + $0x4c] sm:$0xf]
  %v64 = vld [vmem:[%s1 + $0x50] sm:$0xf]
  %v65 = vld [vmem:[%s1 + $0x54] sm:$0xf]
  %v66 = vld [vmem:[%s1 + $0x58] sm:$0xf]
  %v67 = vld [vmem:[%s1 + $0x5c] sm:$0xf]
  %v68 = vld [vmem:[%s1 + $0x60] sm:$0xf]
  %v69 = vld [vmem:[%s1 + $0x64] sm:$0xf]
  %v70 = vld [vmem:[%s1 + $0x68] sm:$0xf]
  %v71 = vld [vmem:[%s1 + $0x6c] sm:$0xf]
  %v72 = vld [vmem:[%s1 + $0x70] sm:$0xf]
  %v73 = vld [vmem:[%s1 + $0x74] sm:$0xf]
  %v74 = vld [vmem:[%s1 + $0x78] sm:$0xf]
  %v75 = vld [vmem:[%s1 + $0x7c] sm:$0xf]
  %v76 = vld [vmem:[%s1 + $0x80] sm:$0xf]
  %v77 = vld [vmem:[%s1 + $0x84] sm:$0xf]
  %v78 = vld [vmem:[%s1 + $0x88] sm:$0xf]
  %v79 = vld [vmem:[%s1 + $0x8c] sm:$0xf]
  %v80 = vld [vmem:[%s1 + $0x90] sm:$0xf]
  %v81 = vld [vmem:[%s1 + $0x94] sm:$0xf]
  %v82 = vld [vmem:[%s1 + $0x98] sm:$0xf]
  %v83 = vld [vmem:[%s1 + $0x9c] sm:$0xf]
  %v84 = vld [vmem:[%s1 + $0xa0] sm:$0xf]
  %v85 = vld [vmem:[%s1 + $0xa4] sm:$0xf]
  %v86 = vld [vmem:[%s1 + $0xa8] sm:$0xf]
  %v87 = vld [vmem:[%s1 + $0xac] sm:$0xf]
  %v88 = vld [vmem:[%s1 + $0xb0] sm:$0xf]
  %v89 = vld [vmem:[%s1 + $0xb4] sm:$0xf]
  %v90 = vld [vmem:[%s1 + $0xb8] sm:$0xf]
  %v91 = vld [vmem:[%s1 + $0xbc] sm:$0xf]
  %v92 = vld [vmem:[%s1 + $0xc0] sm:$0xf]
  %v93 = vld [vmem:[%s1 + $0xc4] sm:$0xf]
  %v94 = vld [vmem:[%s1 + $0xc8] sm:$0xf]
  %v95 = vld [vmem:[%s1 + $0xcc] sm:$0xf]
  %v96 = vld [vmem:[%s1 + $0xd0] sm:$0xf]
  %v97 = vld [vmem:[%s1 + $0xd4] sm:$0xf]
  %v98 = vld [vmem:[%s1 + $0xd8] sm:$0xf]
  %v99 = vld [vmem:[%s1 + $0xdc] sm:$0xf]
  %v100 = vld [vmem:[%s1 + $0xe0] sm:$0xf]
  %v101 = vld [vmem:[%s1 + $0xe4] sm:$0xf]
  %v102 = vld [vmem:[%s1 + $0xe8] sm:$0xf]
  %v103 = vld [vmem:[%s1 + $0xec] sm:$0xf]
  %v104 = vld [vmem:[%s1 + $0xf0] sm:$0xf]
  %v105 = vld [vmem:[%s1 + $0xf4] sm:$0xf]
  %v106 = vld [vmem:[%s1 + $0xf8] sm:$0xf]
  %v107 = vld [vmem:[%s1 + $0xfc] sm:$0xf]
  %v116 = vunpack.c.l.b16 %v36
  %v117 = vunpack.c.h.b16 %v36
  %v118 = vunpack.c.l.b16 %v37
  %v119 = vunpack.c.h.b16 %v37
  %v120 = vunpack.c.l.b16 %v38
  %v121 = vunpack.c.h.b16 %v38
  %v122 = vunpack.c.l.b16 %v39
  %v123 = vunpack.c.h.b16 %v39
  %v124 = vunpack.c.l.b16 %v40
  %v125 = vunpack.c.h.b16 %v40
  %v126 = vunpack.c.l.b16 %v41
  %v127 = vunpack.c.h.b16 %v41
  %v128 = vunpack.c.l.b16 %v42
  %v129 = vunpack.c.h.b16 %v42
  %v130 = vunpack.c.l.b16 %v43
  %v131 = vunpack.c.h.b16 %v43
  %v132 = vpack.c.b16 %v120, %v116
  %v133 = vpack.c.b16 %v121, %v117
  %v134 = vpack.c.b16 %v122, %v118
  %v135 = vpack.c.b16 %v123, %v119
  %v136 = vpack.c.b16 %v128, %v124
  %v137 = vpack.c.b16 %v129, %v125
  %v138 = vpack.c.b16 %v130, %v126
  %v139 = vpack.c.b16 %v131, %v127
  %v212 = vunpack.c.l.b16 %v44
  %v213 = vunpack.c.l.b16 %v45
  %v214 = vunpack.c.l.b16 %v46
  %v215 = vunpack.c.l.b16 %v47
  %v216 = vunpack.c.l.b16 %v48
  %v217 = vunpack.c.l.b16 %v49
  %v218 = vunpack.c.l.b16 %v50
  %v219 = vunpack.c.l.b16 %v51
  %v220 = vunpack.c.l.b16 %v52
  %v221 = vunpack.c.l.b16 %v53
  %v222 = vunpack.c.l.b16 %v54
  %v223 = vunpack.c.l.b16 %v55
  %v224 = vunpack.c.l.b16 %v56
  %v225 = vunpack.c.l.b16 %v57
  %v226 = vunpack.c.l.b16 %v58
  %v227 = vunpack.c.l.b16 %v59
  %v228 = vunpack.c.l.b16 %v60
  %v229 = vunpack.c.l.b16 %v61
  %v230 = vunpack.c.l.b16 %v62
  %v231 = vunpack.c.l.b16 %v63
  %v232 = vunpack.c.l.b16 %v64
  %v233 = vunpack.c.l.b16 %v65
  %v234 = vunpack.c.l.b16 %v66
  %v235 = vunpack.c.l.b16 %v67
  %v236 = vunpack.c.l.b16 %v68
  %v237 = vunpack.c.l.b16 %v69
  %v238 = vunpack.c.l.b16 %v70
  %v239 = vunpack.c.l.b16 %v71
  %v240 = vunpack.c.l.b16 %v72
  %v241 = vunpack.c.l.b16 %v73
  %v242 = vunpack.c.l.b16 %v74
  %v243 = vunpack.c.l.b16 %v75
  %v244 = vunpack.c.l.b16 %v76
  %v245 = vunpack.c.l.b16 %v77
  %v246 = vunpack.c.l.b16 %v78
  %v247 = vunpack.c.l.b16 %v79
  %v248 = vunpack.c.l.b16 %v80
  %v249 = vunpack.c.l.b16 %v81
  %v250 = vunpack.c.l.b16 %v82
  %v251 = vunpack.c.l.b16 %v83
  %v252 = vunpack.c.l.b16 %v84
  %v253 = vunpack.c.l.b16 %v85
  %v254 = vunpack.c.l.b16 %v86
  %v255 = vunpack.c.l.b16 %v87
  %v256 = vunpack.c.l.b16 %v88
  %v257 = vunpack.c.l.b16 %v89
  %v258 = vunpack.c.l.b16 %v90
  %v259 = vunpack.c.l.b16 %v91
  %v260 = vunpack.c.l.b16 %v92
  %v261 = vunpack.c.l.b16 %v93
  %v262 = vunpack.c.l.b16 %v94
  %v263 = vunpack.c.l.b16 %v95
  %v264 = vunpack.c.l.b16 %v96
  %v265 = vunpack.c.l.b16 %v97
  %v266 = vunpack.c.l.b16 %v98
  %v267 = vunpack.c.l.b16 %v99
  %v268 = vunpack.c.l.b16 %v100
  %v269 = vunpack.c.l.b16 %v101
  %v270 = vunpack.c.l.b16 %v102
  %v271 = vunpack.c.l.b16 %v103
  %v272 = vunpack.c.l.b16 %v104
  %v273 = vunpack.c.l.b16 %v105
  %v274 = vunpack.c.l.b16 %v106
  %v275 = vunpack.c.l.b16 %v107
  %v276 = vpack.c.b16 %v213, %v212
  %v277 = vpack.c.b16 %v215, %v214
  %v278 = vpack.c.b16 %v217, %v216
  %v279 = vpack.c.b16 %v219, %v218
  %v280 = vpack.c.b16 %v221, %v220
  %v281 = vpack.c.b16 %v223, %v222
  %v282 = vpack.c.b16 %v225, %v224
  %v283 = vpack.c.b16 %v227, %v226
  %v284 = vpack.c.b16 %v229, %v228
  %v285 = vpack.c.b16 %v231, %v230
  %v286 = vpack.c.b16 %v233, %v232
  %v287 = vpack.c.b16 %v235, %v234
  %v288 = vpack.c.b16 %v237, %v236
  %v289 = vpack.c.b16 %v239, %v238
  %v290 = vpack.c.b16 %v241, %v240
  %v291 = vpack.c.b16 %v243, %v242
  %v292 = vpack.c.b16 %v245, %v244
  %v293 = vpack.c.b16 %v247, %v246
  %v294 = vpack.c.b16 %v249, %v248
  %v295 = vpack.c.b16 %v251, %v250
  %v296 = vpack.c.b16 %v253, %v252
  %v297 = vpack.c.b16 %v255, %v254
  %v298 = vpack.c.b16 %v257, %v256
  %v299 = vpack.c.b16 %v259, %v258
  %v300 = vpack.c.b16 %v261, %v260
  %v301 = vpack.c.b16 %v263, %v262
  %v302 = vpack.c.b16 %v265, %v264
  %v303 = vpack.c.b16 %v267, %v266
  %v304 = vpack.c.b16 %v269, %v268
  %v305 = vpack.c.b16 %v271, %v270
  %v306 = vpack.c.b16 %v273, %v272
  %v307 = vpack.c.b16 %v275, %v274
  %340 = vmatprep.subr.bf16.mxu0 0
  %341 = vmatpush1.bf16.msra.mxu0 %v276
  %342 = vmatprep.subr.bf16.mxu0 0
  %343 = vmatpush1.bf16.msra.mxu0 %v277
  %344 = vmatprep.subr.bf16.mxu0 0
  %345 = vmatpush1.bf16.msra.mxu0 %v278
  %346 = vmatprep.subr.bf16.mxu0 0
  %347 = vmatpush1.bf16.msra.mxu0 %v279
  %348 = vmatprep.subr.bf16.mxu0 0
  %349 = vmatpush1.bf16.msra.mxu0 %v280
  %350 = vmatprep.subr.bf16.mxu0 0
  %351 = vmatpush1.bf16.msra.mxu0 %v281
  %352 = vmatprep.subr.bf16.mxu0 0
  %353 = vmatpush1.bf16.msra.mxu0 %v282
  %354 = vmatprep.subr.bf16.mxu0 0
  %355 = vmatpush1.bf16.msra.mxu0 %v283
  %356 = vmatprep.subr.bf16.mxu0 0
  %357 = vmatpush1.bf16.msra.mxu0 %v284
  %358 = vmatprep.subr.bf16.mxu0 0
  %359 = vmatpush1.bf16.msra.mxu0 %v285
  %360 = vmatprep.subr.bf16.mxu0 0
  %361 = vmatpush1.bf16.msra.mxu0 %v286
  %362 = vmatprep.subr.bf16.mxu0 0
  %363 = vmatpush1.bf16.msra.mxu0 %v287
  %364 = vmatprep.subr.bf16.mxu0 0
  %365 = vmatpush1.bf16.msra.mxu0 %v288
  %366 = vmatprep.subr.bf16.mxu0 0
  %367 = vmatpush1.bf16.msra.mxu0 %v289
  %368 = vmatprep.subr.bf16.mxu0 0
  %369 = vmatpush1.bf16.msra.mxu0 %v290
  %370 = vmatprep.subr.bf16.mxu0 0
  %371 = vmatpush1.bf16.msra.mxu0 %v291
  %372 = vmatprep.mubr.bf16.mxu0 %v133
  %373 = vmatmul.mubr.bf16.gmra.mrb[0].mxu0 %v132
  %v374 = vpop.f32.mrb[0].mxu0
  %v375 = vadd.f32 0.0, %v374
  %v376 = vpop.f32.mrb[0].mxu0
  %v377 = vpop.f32.mrb[0].mxu0
  %v378 = vadd.f32 0.0, %v377
  %v379 = vpop.f32.mrb[0].mxu0
  %380 = vmatprep.mubr.bf16.mxu0 %v137
  %381 = vmatmul.mubr.bf16.gmra.mrb[0].mxu0 %v136
  %v382 = vpop.f32.mrb[0].mxu0
  %v383 = vadd.f32 0.0, %v382
  %v384 = vpop.f32.mrb[0].mxu0
  %v385 = vpop.f32.mrb[0].mxu0
  %v386 = vadd.f32 0.0, %v385
  %v387 = vpop.f32.mrb[0].mxu0
  %388 = vdwg.mxu0
  %389 = vmatprep.subr.bf16.mxu0 0
  %390 = vmatpush1.bf16.msra.mxu0 %v292
  %391 = vmatprep.subr.bf16.mxu0 0
  %392 = vmatpush1.bf16.msra.mxu0 %v293
  %393 = vmatprep.subr.bf16.mxu0 0
  %394 = vmatpush1.bf16.msra.mxu0 %v294
  %395 = vmatprep.subr.bf16.mxu0 0
  %396 = vmatpush1.bf16.msra.mxu0 %v295
  %397 = vmatprep.subr.bf16.mxu0 0
  %398 = vmatpush1.bf16.msra.mxu0 %v296
  %399 = vmatprep.subr.bf16.mxu0 0
  %400 = vmatpush1.bf16.msra.mxu0 %v297
  %401 = vmatprep.subr.bf16.mxu0 0
  %402 = vmatpush1.bf16.msra.mxu0 %v298
  %403 = vmatprep.subr.bf16.mxu0 0
  %404 = vmatpush1.bf16.msra.mxu0 %v299
  %405 = vmatprep.subr.bf16.mxu0 0
  %406 = vmatpush1.bf16.msra.mxu0 %v300
  %407 = vmatprep.subr.bf16.mxu0 0
  %408 = vmatpush1.bf16.msra.mxu0 %v301
  %409 = vmatprep.subr.bf16.mxu0 0
  %410 = vmatpush1.bf16.msra.mxu0 %v302
  %411 = vmatprep.subr.bf16.mxu0 0
  %412 = vmatpush1.bf16.msra.mxu0 %v303
  %413 = vmatprep.subr.bf16.mxu0 0
  %414 = vmatpush1.bf16.msra.mxu0 %v304
  %415 = vmatprep.subr.bf16.mxu0 0
  %416 = vmatpush1.bf16.msra.mxu0 %v305
  %417 = vmatprep.subr.bf16.mxu0 0
  %418 = vmatpush1.bf16.msra.mxu0 %v306
  %419 = vmatprep.subr.bf16.mxu0 0
  %420 = vmatpush1.bf16.msra.mxu0 %v307
  %421 = vmatprep.mubr.bf16.mxu0 %v135
  %422 = vmatmul.mubr.bf16.gmra.mrb[0].mxu0 %v134
  %v423 = vpop.f32.mrb[0].mxu0
  %v424 = vadd.f32 %v375, %v423
  %v425 = vpop.f32.mrb[0].mxu0
  %v426 = vpop.f32.mrb[0].mxu0
  %v427 = vadd.f32 %v378, %v426
  %v428 = vpop.f32.mrb[0].mxu0
  %429 = vmatprep.mubr.bf16.mxu0 %v139
  %430 = vmatmul.mubr.bf16.gmra.mrb[0].mxu0 %v138
  %v431 = vpop.f32.mrb[0].mxu0
  %v432 = vadd.f32 %v383, %v431
  %v433 = vpop.f32.mrb[0].mxu0
  %v434 = vpop.f32.mrb[0].mxu0
  %v435 = vadd.f32 %v386, %v434
  %v436 = vpop.f32.mrb[0].mxu0
  %437 = vdwg.mxu0
  %v438 = vadd.f32 %v32, %v424
  %v439 = vadd.f32 %v33, %v427
  %v440 = vadd.f32 %v34, %v432
  %v441 = vadd.f32 %v35, %v435
  %442 = vst [vmem:[#allocation2] sm:$0xff] %v438
  %443 = vst [vmem:[#allocation2 + $0x8] sm:$0xff] %v439
  %444 = vst [vmem:[#allocation2 + $0x10] sm:$0xff] %v440
  %445 = vst [vmem:[#allocation2 + $0x18] sm:$0xff] %v441
  // Predicated region
  $region30: #{bert_for_qa.16} parent=0 // pred_check
    %p446 = pneg %p24
  $region31: #{bert_for_qa.16} parent=0 // pred_check_branch
    %448 = sbr.rel (%p446) target = $region33
  $region32: #{bert_for_qa.16} parent=0 // pred_region
    %v449 = vld [vmem:[#allocation2] sm:$0xff]
    %v450 = vld [vmem:[#allocation2 + $0x8] sm:$0xff]
    %v451 = vld [vmem:[#allocation2 + $0x10] sm:$0xff]
    %v452 = vld [vmem:[#allocation2 + $0x18] sm:$0xff]
    %v453 = vld [vmem:[%s2] sm:$0x1]
    %v454 = vunpack.c.l.bf16 %v453
    %v455 = vlaneseq
    %v456 = vshrl.u32 %v455, 7
    %v457 = vsub.s32 0, %v456
    %v458 = vrot.slane %v454, %v457
    %v459 = vadd.f32 %v449, %v458
    %v460 = vadd.f32 %v450, %v458
    %v461 = vadd.f32 %v451, %v458
    %v462 = vadd.f32 %v452, %v458
    %v463 = vld [vmem:[%s3] sm:$0xf]
    %v464 = vld [vmem:[%s3 + $0x4] sm:$0xf]
    %v465 = vld [vmem:[%s3 + $0x8] sm:$0xf]
    %v466 = vld [vmem:[%s3 + $0xc] sm:$0xf]
    %v467 = vunpack.c.l.bf16 %v463
    %v468 = vunpack.c.l.bf16 %v464
    %v469 = vunpack.c.l.bf16 %v465
    %v470 = vunpack.c.l.bf16 %v466
    %v471 = vadd.f32 %v459, %v467
    %v472 = vadd.f32 %v460, %v468
    %v473 = vadd.f32 %v461, %v469
    %v474 = vadd.f32 %v462, %v470
    %475 = vadd.xlane.f32.xlu0 %v471
    %v476 = vpop.xlane.xlu0 %475
    %477 = vadd.xlane.f32.xlu0 %v472
    %v478 = vpop.xlane.xlu0 %477
    %479 = vadd.xlane.f32.xlu0 %v473
    %v480 = vpop.xlane.xlu0 %479
    %481 = vadd.xlane.f32.xlu0 %v474
    %v482 = vpop.xlane.xlu0 %481
    %v483 = vrcp.pop 128.0
    %v484 = vmul.f32 %v476, %v483
    %v485 = vmul.f32 %v478, %v483
    %v486 = vmul.f32 %v480, %v483
    %v487 = vmul.f32 %v482, %v483
    %v488 = vsub.f32 %v471, %v484
    %v489 = vsub.f32 %v472, %v485
    %v490 = vsub.f32 %v473, %v486
    %v491 = vsub.f32 %v474, %v487
    %v492 = vmul.f32 %v488, %v488
    %v493 = vmul.f32 %v489, %v489
    %v494 = vmul.f32 %v490, %v490
    %v495 = vmul.f32 %v491, %v491
    %496 = vadd.xlane.f32.xlu0 %v492
    %v497 = vpop.xlane.xlu0 %496
    %498 = vadd.xlane.f32.xlu0 %v493
    %v499 = vpop.xlane.xlu0 %498
    %500 = vadd.xlane.f32.xlu0 %v494
    %v501 = vpop.xlane.xlu0 %500
    %502 = vadd.xlane.f32.xlu0 %v495
    %v503 = vpop.xlane.xlu0 %502
    %v504 = vmul.f32 %v497, %v483
    %v505 = vmul.f32 %v499, %v483
    %v506 = vmul.f32 %v501, %v483
    %v507 = vmul.f32 %v503, %v483
    %v508 = vadd.f32 %v504, 1e-12
    %v509 = vadd.f32 %v505, 1e-12
    %v510 = vadd.f32 %v506, 1e-12
    %v511 = vadd.f32 %v507, 1e-12
    %v512 = vrsqrt.pop %v508
    %v513 = vrsqrt.pop %v509
    %v514 = vrsqrt.pop %v510
    %v515 = vrsqrt.pop %v511
    %v516 = vmul.f32 %v488, %v512
    %v517 = vmul.f32 %v489, %v513
    %v518 = vmul.f32 %v490, %v514
    %v519 = vmul.f32 %v491, %v515
    %v520 = vld [vmem:[%s4] sm:$0x1]
    %v522 = vlaneseq
    %v523 = vshrl.u32 %v522, 7
    %v524 = vsub.s32 0, %v523
    %v525 = vrot.slane %v520, %v524
    %v527 = vmul.f32 %v516, %v525
    %v528 = vmul.f32 %v517, %v525
    %v529 = vmul.f32 %v518, %v525
    %v530 = vmul.f32 %v519, %v525
    %v531 = vld [vmem:[%s5] sm:$0x1]
    %v533 = vlaneseq
    %v534 = vshrl.u32 %v533, 7
    %v535 = vsub.s32 0, %v534
    %v536 = vrot.slane %v531, %v535
    %v538 = vadd.f32 %v527, %v536
    %v539 = vadd.f32 %v528, %v536
    %v540 = vadd.f32 %v529, %v536
    %v541 = vadd.f32 %v530, %v536
    %v542 = vpack.c.bf16 %v539, %v538
    %v543 = vpack.c.bf16 %v541, %v540
    %v546 = vunpack.c.l.b16 %v542
    %v547 = vunpack.c.h.b16 %v542
    %v548 = vunpack.c.l.b16 %v543
    %v549 = vunpack.c.h.b16 %v543
    %v550 = vpack.c.b16 %v546, %v546
    %v551 = vpack.c.b16 %v547, %v547
    %v552 = vpack.c.b16 %v548, %v548
    %v553 = vpack.c.b16 %v549, %v549
    %558 = vst [vmem:[%s6] sm:$0xf] %v550
    %559 = vst [vmem:[%s6 + $0x4] sm:$0xf] %v551
    %560 = vst [vmem:[%s6 + $0x8] sm:$0xf] %v552
    %561 = vst [vmem:[%s6 + $0xc] sm:$0xf] %v553
  $region33: #{bert_for_qa.16} parent=0 // pred_fallthru
    _
  // Predicated region
  $region34: #{bert_for_qa.16} parent=0 // pred_check
    _
  $region35: #{bert_for_qa.16} parent=0 // pred_check_branch
    %563 = sbr.rel (0) target = $region37
  $region36: #{bert_for_qa.16} parent=0 // pred_region
    _
  $region37: #{bert_for_qa.16} parent=0 // pred_fallthru
    _
  // Predicated region
  $region38: #{bert_for_qa.16} parent=0 // pred_check
    _
  $region39: #{bert_for_qa.16} parent=0 // pred_check_branch
    %565 = sbr.rel (0) target = $region41
  $region40: #{bert_for_qa.16} parent=0 // pred_region
    _
  $region41: #{bert_for_qa.16} parent=0 // pred_fallthru
    _

// kernel: bert_for_qa.15
$region0: #{bert_for_qa.15}
  #allocation0 [shape = 'u32[]', space=smem, size = 0x4, offset = 0x4, fixed_abs, tag = 'smem constant byte address 0x4 - core index']
  #allocation1 [shape = 'u32[144,128]{1,0:T(1,128)}', space=vmem, size = 0x12000, scoped, tag = 'internal scratch']
  #allocation2 [shape = 'f32[32,512]{1,0:T(8,128)}', space=vmem, size = 0x10000, scoped, tag = 'scratch operand']
  %s0 = inlined_call_operand.vmem [shape: bf16[32,128], index: 0, kind: input, shape index: {}]
  %s1 = inlined_call_operand.vmem [shape: bf16[128,512], index: 1, kind: input, shape index: {}]
  %s2 = inlined_call_operand.vmem [shape: bf16[1,512], index: 2, kind: input, shape index: {}]
  %s3 = inlined_call_operand.vmem [shape: bf16[32,512], index: 3, kind: output, shape index: {}]
  %s4 = sld [smem:[#allocation0]]
  $region30: #{bert_for_qa.15} parent=0
    _
  %s6 = ssub.s32 1, %s4
  %s7 = scalar_select 0, %s6, %s4
  // Predicated region
  $region2: #{bert_for_qa.15} parent=0 // pred_check
    _
  $region3: #{bert_for_qa.15} parent=0 // pred_check_branch
    %9 = sbr.rel (0) target = $region5
  $region4: #{bert_for_qa.15} parent=0 // pred_region
    _
  $region5: #{bert_for_qa.15} parent=0 // pred_fallthru
    _
  // Predicated region
  $region6: #{bert_for_qa.15} parent=0 // pred_check
    _
  $region7: #{bert_for_qa.15} parent=0 // pred_check_branch
    %11 = sbr.rel (0) target = $region9
  $region8: #{bert_for_qa.15} parent=0 // pred_region
    _
  $region9: #{bert_for_qa.15} parent=0 // pred_fallthru
    _
  // Predicated region
  $region10: #{bert_for_qa.15} parent=0 // pred_check
    _
  $region11: #{bert_for_qa.15} parent=0 // pred_check_branch
    %13 = sbr.rel (0) target = $region13
  $region12: #{bert_for_qa.15} parent=0 // pred_region
    _
  $region13: #{bert_for_qa.15} parent=0 // pred_fallthru
    _
  %p15 = scmp.eq.s32.totalorder 0, 0
  // Predicated region
  $region14: #{bert_for_qa.15} parent=0 // pred_check
    %p16 = pneg %p15
  $region15: #{bert_for_qa.15} parent=0 // pred_check_branch
    %18 = sbr.rel (%p16) target = $region17
  $region16: #{bert_for_qa.15} parent=0 // pred_region
    %19 = vst [vmem:[#allocation2] sm:$0xff] 0.0
    %20 = vst [vmem:[#allocation2 + $0x8] sm:$0xff] 0.0
    %21 = vst [vmem:[#allocation2 + $0x10] sm:$0xff] 0.0
    %22 = vst [vmem:[#allocation2 + $0x18] sm:$0xff] 0.0
    %23 = vst [vmem:[#allocation2 + $0x20] sm:$0xff] 0.0
    %24 = vst [vmem:[#allocation2 + $0x28] sm:$0xff] 0.0
    %25 = vst [vmem:[#allocation2 + $0x30] sm:$0xff] 0.0
    %26 = vst [vmem:[#allocation2 + $0x38] sm:$0xff] 0.0
    %27 = vst [vmem:[#allocation2 + $0x40] sm:$0xff] 0.0
    %28 = vst [vmem:[#allocation2 + $0x48] sm:$0xff] 0.0
    %29 = vst [vmem:[#allocation2 + $0x50] sm:$0xff] 0.0
    %30 = vst [vmem:[#allocation2 + $0x58] sm:$0xff] 0.0
    %31 = vst [vmem:[#allocation2 + $0x60] sm:$0xff] 0.0
    %32 = vst [vmem:[#allocation2 + $0x68] sm:$0xff] 0.0
    %33 = vst [vmem:[#allocation2 + $0x70] sm:$0xff] 0.0
    %34 = vst [vmem:[#allocation2 + $0x78] sm:$0xff] 0.0
  $region17: #{bert_for_qa.15} parent=0 // pred_fallthru
    _
  %v35 = vld [vmem:[#allocation2] sm:$0xff]
  %v36 = vld [vmem:[#allocation2 + $0x8] sm:$0xff]
  %v37 = vld [vmem:[#allocation2 + $0x10] sm:$0xff]
  %v38 = vld [vmem:[#allocation2 + $0x18] sm:$0xff]
  %v39 = vld [vmem:[#allocation2 + $0x20] sm:$0xff]
  %v40 = vld [vmem:[#allocation2 + $0x28] sm:$0xff]
  %v41 = vld [vmem:[#allocation2 + $0x30] sm:$0xff]
  %v42 = vld [vmem:[#allocation2 + $0x38] sm:$0xff]
  %v43 = vld [vmem:[#allocation2 + $0x40] sm:$0xff]
  %v44 = vld [vmem:[#allocation2 + $0x48] sm:$0xff]
  %v45 = vld [vmem:[#allocation2 + $0x50] sm:$0xff]
  %v46 = vld [vmem:[#allocation2 + $0x58] sm:$0xff]
  %v47 = vld [vmem:[#allocation2 + $0x60] sm:$0xff]
  %v48 = vld [vmem:[#allocation2 + $0x68] sm:$0xff]
  %v49 = vld [vmem:[#allocation2 + $0x70] sm:$0xff]
  %v50 = vld [vmem:[#allocation2 + $0x78] sm:$0xff]
  %v51 = vld [vmem:[%s0] sm:$0xf]
  %v52 = vld [vmem:[%s0 + $0x4] sm:$0xf]
  %v53 = vld [vmem:[%s0 + $0x8] sm:$0xf]
  %v54 = vld [vmem:[%s0 + $0xc] sm:$0xf]
  %v55 = vld [vmem:[%s1] sm:$0xff]
  %v56 = vld [vmem:[%s1 + $0x8] sm:$0xff]
  %v57 = vld [vmem:[%s1 + $0x10] sm:$0xff]
  %v58 = vld [vmem:[%s1 + $0x18] sm:$0xff]
  %v59 = vld [vmem:[%s1 + $0x20] sm:$0xff]
  %v60 = vld [vmem:[%s1 + $0x28] sm:$0xff]
  %v61 = vld [vmem:[%s1 + $0x30] sm:$0xff]
  %v62 = vld [vmem:[%s1 + $0x38] sm:$0xff]
  %v63 = vld [vmem:[%s1 + $0x40] sm:$0xff]
  %v64 = vld [vmem:[%s1 + $0x48] sm:$0xff]
  %v65 = vld [vmem:[%s1 + $0x50] sm:$0xff]
  %v66 = vld [vmem:[%s1 + $0x58] sm:$0xff]
  %v67 = vld [vmem:[%s1 + $0x60] sm:$0xff]
  %v68 = vld [vmem:[%s1 + $0x68] sm:$0xff]
  %v69 = vld [vmem:[%s1 + $0x70] sm:$0xff]
  %v70 = vld [vmem:[%s1 + $0x78] sm:$0xff]
  %v71 = vld [vmem:[%s1 + $0x80] sm:$0xff]
  %v72 = vld [vmem:[%s1 + $0x88] sm:$0xff]
  %v73 = vld [vmem:[%s1 + $0x90] sm:$0xff]
  %v74 = vld [vmem:[%s1 + $0x98] sm:$0xff]
  %v75 = vld [vmem:[%s1 + $0xa0] sm:$0xff]
  %v76 = vld [vmem:[%s1 + $0xa8] sm:$0xff]
  %v77 = vld [vmem:[%s1 + $0xb0] sm:$0xff]
  %v78 = vld [vmem:[%s1 + $0xb8] sm:$0xff]
  %v79 = vld [vmem:[%s1 + $0xc0] sm:$0xff]
  %v80 = vld [vmem:[%s1 + $0xc8] sm:$0xff]
  %v81 = vld [vmem:[%s1 + $0xd0] sm:$0xff]
  %v82 = vld [vmem:[%s1 + $0xd8] sm:$0xff]
  %v83 = vld [vmem:[%s1 + $0xe0] sm:$0xff]
  %v84 = vld [vmem:[%s1 + $0xe8] sm:$0xff]
  %v85 = vld [vmem:[%s1 + $0xf0] sm:$0xff]
  %v86 = vld [vmem:[%s1 + $0xf8] sm:$0xff]
  %v91 = vunpack.c.l.b16 %v51
  %v92 = vunpack.c.l.b16 %v52
  %v93 = vunpack.c.l.b16 %v53
  %v94 = vunpack.c.l.b16 %v54
  %v95 = vpack.c.b16 %v92, %v91
  %v96 = vpack.c.b16 %v94, %v93
  %v131 = vunpack.c.l.b16 %v55
  %v132 = vunpack.c.h.b16 %v55
  %v133 = vunpack.c.l.b16 %v56
  %v134 = vunpack.c.h.b16 %v56
  %v135 = vunpack.c.l.b16 %v57
  %v136 = vunpack.c.h.b16 %v57
  %v137 = vunpack.c.l.b16 %v58
  %v138 = vunpack.c.h.b16 %v58
  %v139 = vunpack.c.l.b16 %v59
  %v140 = vunpack.c.h.b16 %v59
  %v141 = vunpack.c.l.b16 %v60
  %v142 = vunpack.c.h.b16 %v60
  %v143 = vunpack.c.l.b16 %v61
  %v144 = vunpack.c.h.b16 %v61
  %v145 = vunpack.c.l.b16 %v62
  %v146 = vunpack.c.h.b16 %v62
  %v147 = vunpack.c.l.b16 %v63
  %v148 = vunpack.c.h.b16 %v63
  %v149 = vunpack.c.l.b16 %v64
  %v150 = vunpack.c.h.b16 %v64
  %v151 = vunpack.c.l.b16 %v65
  %v152 = vunpack.c.h.b16 %v65
  %v153 = vunpack.c.l.b16 %v66
  %v154 = vunpack.c.h.b16 %v66
  %v155 = vunpack.c.l.b16 %v67
  %v156 = vunpack.c.h.b16 %v67
  %v157 = vunpack.c.l.b16 %v68
  %v158 = vunpack.c.h.b16 %v68
  %v159 = vunpack.c.l.b16 %v69
  %v160 = vunpack.c.h.b16 %v69
  %v161 = vunpack.c.l.b16 %v70
  %v162 = vunpack.c.h.b16 %v70
  %v163 = vunpack.c.l.b16 %v71
  %v164 = vunpack.c.h.b16 %v71
  %v165 = vunpack.c.l.b16 %v72
  %v166 = vunpack.c.h.b16 %v72
  %v167 = vunpack.c.l.b16 %v73
  %v168 = vunpack.c.h.b16 %v73
  %v169 = vunpack.c.l.b16 %v74
  %v170 = vunpack.c.h.b16 %v74
  %v171 = vunpack.c.l.b16 %v75
  %v172 = vunpack.c.h.b16 %v75
  %v173 = vunpack.c.l.b16 %v76
  %v174 = vunpack.c.h.b16 %v76
  %v175 = vunpack.c.l.b16 %v77
  %v176 = vunpack.c.h.b16 %v77
  %v177 = vunpack.c.l.b16 %v78
  %v178 = vunpack.c.h.b16 %v78
  %v179 = vunpack.c.l.b16 %v79
  %v180 = vunpack.c.h.b16 %v79
  %v181 = vunpack.c.l.b16 %v80
  %v182 = vunpack.c.h.b16 %v80
  %v183 = vunpack.c.l.b16 %v81
  %v184 = vunpack.c.h.b16 %v81
  %v185 = vunpack.c.l.b16 %v82
  %v186 = vunpack.c.h.b16 %v82
  %v187 = vunpack.c.l.b16 %v83
  %v188 = vunpack.c.h.b16 %v83
  %v189 = vunpack.c.l.b16 %v84
  %v190 = vunpack.c.h.b16 %v84
  %v191 = vunpack.c.l.b16 %v85
  %v192 = vunpack.c.h.b16 %v85
  %v193 = vunpack.c.l.b16 %v86
  %v194 = vunpack.c.h.b16 %v86
  %v195 = vpack.c.b16 %v135, %v131
  %v196 = vpack.c.b16 %v136, %v132
  %v197 = vpack.c.b16 %v137, %v133
  %v198 = vpack.c.b16 %v138, %v134
  %v199 = vpack.c.b16 %v143, %v139
  %v200 = vpack.c.b16 %v144, %v140
  %v201 = vpack.c.b16 %v145, %v141
  %v202 = vpack.c.b16 %v146, %v142
  %v203 = vpack.c.b16 %v151, %v147
  %v204 = vpack.c.b16 %v152, %v148
  %v205 = vpack.c.b16 %v153, %v149
  %v206 = vpack.c.b16 %v154, %v150
  %v207 = vpack.c.b16 %v159, %v155
  %v208 = vpack.c.b16 %v160, %v156
  %v209 = vpack.c.b16 %v161, %v157
  %v210 = vpack.c.b16 %v162, %v158
  %v211 = vpack.c.b16 %v167, %v163
  %v212 = vpack.c.b16 %v168, %v164
  %v213 = vpack.c.b16 %v169, %v165
  %v214 = vpack.c.b16 %v170, %v166
  %v215 = vpack.c.b16 %v175, %v171
  %v216 = vpack.c.b16 %v176, %v172
  %v217 = vpack.c.b16 %v177, %v173
  %v218 = vpack.c.b16 %v178, %v174
  %v219 = vpack.c.b16 %v183, %v179
  %v220 = vpack.c.b16 %v184, %v180
  %v221 = vpack.c.b16 %v185, %v181
  %v222 = vpack.c.b16 %v186, %v182
  %v223 = vpack.c.b16 %v191, %v187
  %v224 = vpack.c.b16 %v192, %v188
  %v225 = vpack.c.b16 %v193, %v189
  %v226 = vpack.c.b16 %v194, %v190
  %259 = vmatprep.subr.bf16.mxu0 %v196
  %260 = vmatpush1.bf16.msra.mxu0 %v195
  %261 = vmatprep.subr.bf16.mxu0 %v200
  %262 = vmatpush1.bf16.msra.mxu0 %v199
  %263 = vmatprep.subr.bf16.mxu0 %v204
  %264 = vmatpush1.bf16.msra.mxu0 %v203
  %265 = vmatprep.subr.bf16.mxu0 %v208
  %266 = vmatpush1.bf16.msra.mxu0 %v207
  %267 = vmatprep.subr.bf16.mxu0 %v212
  %268 = vmatpush1.bf16.msra.mxu0 %v211
  %269 = vmatprep.subr.bf16.mxu0 %v216
  %270 = vmatpush1.bf16.msra.mxu0 %v215
  %271 = vmatprep.subr.bf16.mxu0 %v220
  %272 = vmatpush1.bf16.msra.mxu0 %v219
  %273 = vmatprep.subr.bf16.mxu0 %v224
  %274 = vmatpush1.bf16.msra.mxu0 %v223
  %275 = vmatprep.subr.bf16.mxu0 0
  %276 = vmatpush1.bf16.msra.mxu0 0
  %277 = vmatprep.subr.bf16.mxu0 0
  %278 = vmatpush1.bf16.msra.mxu0 0
  %279 = vmatprep.subr.bf16.mxu0 0
  %280 = vmatpush1.bf16.msra.mxu0 0
  %281 = vmatprep.subr.bf16.mxu0 0
  %282 = vmatpush1.bf16.msra.mxu0 0
  %283 = vmatprep.subr.bf16.mxu0 0
  %284 = vmatpush1.bf16.msra.mxu0 0
  %285 = vmatprep.subr.bf16.mxu0 0
  %286 = vmatpush1.bf16.msra.mxu0 0
  %287 = vmatprep.subr.bf16.mxu0 0
  %288 = vmatpush1.bf16.msra.mxu0 0
  %289 = vmatprep.subr.bf16.mxu0 0
  %290 = vmatpush1.bf16.msra.mxu0 0
  %291 = vmatprep.mubr.bf16.mxu0 0
  %292 = vmatmul.mubr.bf16.gmra.mrb[0].mxu0 %v95
  %v293 = vpop.f32.mrb[0].mxu0
  %v294 = vadd.f32 0.0, %v293
  %v295 = vpop.f32.mrb[0].mxu0
  %v296 = vadd.f32 0.0, %v295
  %v297 = vpop.f32.mrb[0].mxu0
  %v298 = vadd.f32 0.0, %v297
  %v299 = vpop.f32.mrb[0].mxu0
  %v300 = vadd.f32 0.0, %v299
  %301 = vmatprep.mubr.bf16.mxu0 0
  %302 = vmatmul.mubr.bf16.gmra.mrb[0].mxu0 %v96
  %v303 = vpop.f32.mrb[0].mxu0
  %v304 = vadd.f32 0.0, %v303
  %v305 = vpop.f32.mrb[0].mxu0
  %v306 = vadd.f32 0.0, %v305
  %v307 = vpop.f32.mrb[0].mxu0
  %v308 = vadd.f32 0.0, %v307
  %v309 = vpop.f32.mrb[0].mxu0
  %v310 = vadd.f32 0.0, %v309
  %311 = vdwg.mxu0
  %312 = vmatprep.subr.bf16.mxu0 %v198
  %313 = vmatpush1.bf16.msra.mxu0 %v197
  %314 = vmatprep.subr.bf16.mxu0 %v202
  %315 = vmatpush1.bf16.msra.mxu0 %v201
  %316 = vmatprep.subr.bf16.mxu0 %v206
  %317 = vmatpush1.bf16.msra.mxu0 %v205
  %318 = vmatprep.subr.bf16.mxu0 %v210
  %319 = vmatpush1.bf16.msra.mxu0 %v209
  %320 = vmatprep.subr.bf16.mxu0 %v214
  %321 = vmatpush1.bf16.msra.mxu0 %v213
  %322 = vmatprep.subr.bf16.mxu0 %v218
  %323 = vmatpush1.bf16.msra.mxu0 %v217
  %324 = vmatprep.subr.bf16.mxu0 %v222
  %325 = vmatpush1.bf16.msra.mxu0 %v221
  %326 = vmatprep.subr.bf16.mxu0 %v226
  %327 = vmatpush1.bf16.msra.mxu0 %v225
  %328 = vmatprep.subr.bf16.mxu0 0
  %329 = vmatpush1.bf16.msra.mxu0 0
  %330 = vmatprep.subr.bf16.mxu0 0
  %331 = vmatpush1.bf16.msra.mxu0 0
  %332 = vmatprep.subr.bf16.mxu0 0
  %333 = vmatpush1.bf16.msra.mxu0 0
  %334 = vmatprep.subr.bf16.mxu0 0
  %335 = vmatpush1.bf16.msra.mxu0 0
  %336 = vmatprep.subr.bf16.mxu0 0
  %337 = vmatpush1.bf16.msra.mxu0 0
  %338 = vmatprep.subr.bf16.mxu0 0
  %339 = vmatpush1.bf16.msra.mxu0 0
  %340 = vmatprep.subr.bf16.mxu0 0
  %341 = vmatpush1.bf16.msra.mxu0 0
  %342 = vmatprep.subr.bf16.mxu0 0
  %343 = vmatpush1.bf16.msra.mxu0 0
  %344 = vmatprep.mubr.bf16.mxu0 0
  %345 = vmatmul.mubr.bf16.gmra.mrb[0].mxu0 %v95
  %v346 = vpop.f32.mrb[0].mxu0
  %v347 = vadd.f32 0.0, %v346
  %v348 = vpop.f32.mrb[0].mxu0
  %v349 = vadd.f32 0.0, %v348
  %v350 = vpop.f32.mrb[0].mxu0
  %v351 = vadd.f32 0.0, %v350
  %v352 = vpop.f32.mrb[0].mxu0
  %v353 = vadd.f32 0.0, %v352
  %354 = vmatprep.mubr.bf16.mxu0 0
  %355 = vmatmul.mubr.bf16.gmra.mrb[0].mxu0 %v96
  %v356 = vpop.f32.mrb[0].mxu0
  %v357 = vadd.f32 0.0, %v356
  %v358 = vpop.f32.mrb[0].mxu0
  %v359 = vadd.f32 0.0, %v358
  %v360 = vpop.f32.mrb[0].mxu0
  %v361 = vadd.f32 0.0, %v360
  %v362 = vpop.f32.mrb[0].mxu0
  %v363 = vadd.f32 0.0, %v362
  %364 = vdwg.mxu0
  %v365 = vadd.f32 %v35, %v294
  %v366 = vadd.f32 %v36, %v296
  %v367 = vadd.f32 %v37, %v347
  %v368 = vadd.f32 %v38, %v349
  %v369 = vadd.f32 %v39, %v298
  %v370 = vadd.f32 %v40, %v300
  %v371 = vadd.f32 %v41, %v351
  %v372 = vadd.f32 %v42, %v353
  %v373 = vadd.f32 %v43, %v304
  %v374 = vadd.f32 %v44, %v306
  %v375 = vadd.f32 %v45, %v357
  %v376 = vadd.f32 %v46, %v359
  %v377 = vadd.f32 %v47, %v308
  %v378 = vadd.f32 %v48, %v310
  %v379 = vadd.f32 %v49, %v361
  %v380 = vadd.f32 %v50, %v363
  %381 = vst [vmem:[#allocation2] sm:$0xff] %v365
  %382 = vst [vmem:[#allocation2 + $0x8] sm:$0xff] %v366
  %383 = vst [vmem:[#allocation2 + $0x10] sm:$0xff] %v367
  %384 = vst [vmem:[#allocation2 + $0x18] sm:$0xff] %v368
  %385 = vst [vmem:[#allocation2 + $0x20] sm:$0xff] %v369
  %386 = vst [vmem:[#allocation2 + $0x28] sm:$0xff] %v370
  %387 = vst [vmem:[#allocation2 + $0x30] sm:$0xff] %v371
  %388 = vst [vmem:[#allocation2 + $0x38] sm:$0xff] %v372
  %389 = vst [vmem:[#allocation2 + $0x40] sm:$0xff] %v373
  %390 = vst [vmem:[#allocation2 + $0x48] sm:$0xff] %v374
  %391 = vst [vmem:[#allocation2 + $0x50] sm:$0xff] %v375
  %392 = vst [vmem:[#allocation2 + $0x58] sm:$0xff] %v376
  %393 = vst [vmem:[#allocation2 + $0x60] sm:$0xff] %v377
  %394 = vst [vmem:[#allocation2 + $0x68] sm:$0xff] %v378
  %395 = vst [vmem:[#allocation2 + $0x70] sm:$0xff] %v379
  %396 = vst [vmem:[#allocation2 + $0x78] sm:$0xff] %v380
  // Predicated region
  $region18: #{bert_for_qa.15} parent=0 // pred_check
    %p397 = pneg %p15
  $region19: #{bert_for_qa.15} parent=0 // pred_check_branch
    %399 = sbr.rel (%p397) target = $region21
  $region20: #{bert_for_qa.15} parent=0 // pred_region
    %v400 = vld [vmem:[#allocation2] sm:$0xff]
    %v401 = vld [vmem:[#allocation2 + $0x8] sm:$0xff]
    %v402 = vld [vmem:[#allocation2 + $0x10] sm:$0xff]
    %v403 = vld [vmem:[#allocation2 + $0x18] sm:$0xff]
    %v404 = vld [vmem:[#allocation2 + $0x20] sm:$0xff]
    %v405 = vld [vmem:[#allocation2 + $0x28] sm:$0xff]
    %v406 = vld [vmem:[#allocation2 + $0x30] sm:$0xff]
    %v407 = vld [vmem:[#allocation2 + $0x38] sm:$0xff]
    %v408 = vld [vmem:[#allocation2 + $0x40] sm:$0xff]
    %v409 = vld [vmem:[#allocation2 + $0x48] sm:$0xff]
    %v410 = vld [vmem:[#allocation2 + $0x50] sm:$0xff]
    %v411 = vld [vmem:[#allocation2 + $0x58] sm:$0xff]
    %v412 = vld [vmem:[#allocation2 + $0x60] sm:$0xff]
    %v413 = vld [vmem:[#allocation2 + $0x68] sm:$0xff]
    %v414 = vld [vmem:[#allocation2 + $0x70] sm:$0xff]
    %v415 = vld [vmem:[#allocation2 + $0x78] sm:$0xff]
    %v416 = vld [vmem:[%s2] sm:$0xf]
    %v417 = vunpack.c.l.bf16 %v416
    %v419 = vlaneseq
    %v420 = vshrl.u32 %v419, 7
    %v421 = vsub.s32 0, %v420
    %v422 = vrot.slane %v417, %v421
    %v423 = vlaneseq
    %v424 = vshrl.u32 %v423, 7
    %v425 = vsub.s32 2, %v424
    %v426 = vrot.slane %v417, %v425
    %v427 = vlaneseq
    %v428 = vshrl.u32 %v427, 7
    %v429 = vsub.s32 4, %v428
    %v430 = vrot.slane %v417, %v429
    %v431 = vlaneseq
    %v432 = vshrl.u32 %v431, 7
    %v433 = vsub.s32 6, %v432
    %v434 = vrot.slane %v417, %v433
    %v439 = vlaneseq
    %v440 = vshrl.u32 %v439, 7
    %v441 = vsub.s32 0, %v440
    %v442 = vrot.slane %v422, %v441
    %v443 = vlaneseq
    %v444 = vshrl.u32 %v443, 7
    %v445 = vsub.s32 0, %v444
    %v446 = vrot.slane %v426, %v445
    %v447 = vlaneseq
    %v448 = vshrl.u32 %v447, 7
    %v449 = vsub.s32 0, %v448
    %v450 = vrot.slane %v430, %v449
    %v451 = vlaneseq
    %v452 = vshrl.u32 %v451, 7
    %v453 = vsub.s32 0, %v452
    %v454 = vrot.slane %v434, %v453
    %v455 = vadd.f32 %v400, %v442
    %v456 = vadd.f32 %v401, %v446
    %v457 = vadd.f32 %v402, %v450
    %v458 = vadd.f32 %v403, %v454
    %v459 = vadd.f32 %v404, %v442
    %v460 = vadd.f32 %v405, %v446
    %v461 = vadd.f32 %v406, %v450
    %v462 = vadd.f32 %v407, %v454
    %v463 = vadd.f32 %v408, %v442
    %v464 = vadd.f32 %v409, %v446
    %v465 = vadd.f32 %v410, %v450
    %v466 = vadd.f32 %v411, %v454
    %v467 = vadd.f32 %v412, %v442
    %v468 = vadd.f32 %v413, %v446
    %v469 = vadd.f32 %v414, %v450
    %v470 = vadd.f32 %v415, %v454
    %v471 = vmul.f32 %v455, 0.5
    %v472 = vmul.f32 %v456, 0.5
    %v473 = vmul.f32 %v457, 0.5
    %v474 = vmul.f32 %v458, 0.5
    %v475 = vmul.f32 %v459, 0.5
    %v476 = vmul.f32 %v460, 0.5
    %v477 = vmul.f32 %v461, 0.5
    %v478 = vmul.f32 %v462, 0.5
    %v479 = vmul.f32 %v463, 0.5
    %v480 = vmul.f32 %v464, 0.5
    %v481 = vmul.f32 %v465, 0.5
    %v482 = vmul.f32 %v466, 0.5
    %v483 = vmul.f32 %v467, 0.5
    %v484 = vmul.f32 %v468, 0.5
    %v485 = vmul.f32 %v469, 0.5
    %v486 = vmul.f32 %v470, 0.5
    %v487 = vmul.f32 %v455, 0.044715
    %v488 = vmul.f32 %v456, 0.044715
    %v489 = vmul.f32 %v457, 0.044715
    %v490 = vmul.f32 %v458, 0.044715
    %v491 = vmul.f32 %v459, 0.044715
    %v492 = vmul.f32 %v460, 0.044715
    %v493 = vmul.f32 %v461, 0.044715
    %v494 = vmul.f32 %v462, 0.044715
    %v495 = vmul.f32 %v463, 0.044715
    %v496 = vmul.f32 %v464, 0.044715
    %v497 = vmul.f32 %v465, 0.044715
    %v498 = vmul.f32 %v466, 0.044715
    %v499 = vmul.f32 %v467, 0.044715
    %v500 = vmul.f32 %v468, 0.044715
    %v501 = vmul.f32 %v469, 0.044715
    %v502 = vmul.f32 %v470, 0.044715
    %v503 = vmul.f32 %v487, %v455
    %v504 = vmul.f32 %v488, %v456
    %v505 = vmul.f32 %v489, %v457
    %v506 = vmul.f32 %v490, %v458
    %v507 = vmul.f32 %v491, %v459
    %v508 = vmul.f32 %v492, %v460
    %v509 = vmul.f32 %v493, %v461
    %v510 = vmul.f32 %v494, %v462
    %v511 = vmul.f32 %v495, %v463
    %v512 = vmul.f32 %v496, %v464
    %v513 = vmul.f32 %v497, %v465
    %v514 = vmul.f32 %v498, %v466
    %v515 = vmul.f32 %v499, %v467
    %v516 = vmul.f32 %v500, %v468
    %v517 = vmul.f32 %v501, %v469
    %v518 = vmul.f32 %v502, %v470
    %v519 = vmul.f32 %v503, %v455
    %v520 = vmul.f32 %v504, %v456
    %v521 = vmul.f32 %v505, %v457
    %v522 = vmul.f32 %v506, %v458
    %v523 = vmul.f32 %v507, %v459
    %v524 = vmul.f32 %v508, %v460
    %v525 = vmul.f32 %v509, %v461
    %v526 = vmul.f32 %v510, %v462
    %v527 = vmul.f32 %v511, %v463
    %v528 = vmul.f32 %v512, %v464
    %v529 = vmul.f32 %v513, %v465
    %v530 = vmul.f32 %v514, %v466
    %v531 = vmul.f32 %v515, %v467
    %v532 = vmul.f32 %v516, %v468
    %v533 = vmul.f32 %v517, %v469
    %v534 = vmul.f32 %v518, %v470
    %v535 = vadd.f32 %v455, %v519
    %v536 = vadd.f32 %v456, %v520
    %v537 = vadd.f32 %v457, %v521
    %v538 = vadd.f32 %v458, %v522
    %v539 = vadd.f32 %v459, %v523
    %v540 = vadd.f32 %v460, %v524
    %v541 = vadd.f32 %v461, %v525
    %v542 = vadd.f32 %v462, %v526
    %v543 = vadd.f32 %v463, %v527
    %v544 = vadd.f32 %v464, %v528
    %v545 = vadd.f32 %v465, %v529
    %v546 = vadd.f32 %v466, %v530
    %v547 = vadd.f32 %v467, %v531
    %v548 = vadd.f32 %v468, %v532
    %v549 = vadd.f32 %v469, %v533
    %v550 = vadd.f32 %v470, %v534
    %v551 = vmul.f32 %v535, 0.7978846
    %v552 = vmul.f32 %v536, 0.7978846
    %v553 = vmul.f32 %v537, 0.7978846
    %v554 = vmul.f32 %v538, 0.7978846
    %v555 = vmul.f32 %v539, 0.7978846
    %v556 = vmul.f32 %v540, 0.7978846
    %v557 = vmul.f32 %v541, 0.7978846
    %v558 = vmul.f32 %v542, 0.7978846
    %v559 = vmul.f32 %v543, 0.7978846
    %v560 = vmul.f32 %v544, 0.7978846
    %v561 = vmul.f32 %v545, 0.7978846
    %v562 = vmul.f32 %v546, 0.7978846
    %v563 = vmul.f32 %v547, 0.7978846
    %v564 = vmul.f32 %v548, 0.7978846
    %v565 = vmul.f32 %v549, 0.7978846
    %v566 = vmul.f32 %v550, 0.7978846
    %v567 = vtanh.pop %v551
    %v568 = vtanh.pop %v552
    %v569 = vtanh.pop %v553
    %v570 = vtanh.pop %v554
    %v571 = vtanh.pop %v555
    %v572 = vtanh.pop %v556
    %v573 = vtanh.pop %v557
    %v574 = vtanh.pop %v558
    %v575 = vtanh.pop %v559
    %v576 = vtanh.pop %v560
    %v577 = vtanh.pop %v561
    %v578 = vtanh.pop %v562
    %v579 = vtanh.pop %v563
    %v580 = vtanh.pop %v564
    %v581 = vtanh.pop %v565
    %v582 = vtanh.pop %v566
    %v583 = vadd.f32 %v567, 1.0
    %v584 = vadd.f32 %v568, 1.0
    %v585 = vadd.f32 %v569, 1.0
    %v586 = vadd.f32 %v570, 1.0
    %v587 = vadd.f32 %v571, 1.0
    %v588 = vadd.f32 %v572, 1.0
    %v589 = vadd.f32 %v573, 1.0
    %v590 = vadd.f32 %v574, 1.0
    %v591 = vadd.f32 %v575, 1.0
    %v592 = vadd.f32 %v576, 1.0
    %v593 = vadd.f32 %v577, 1.0
    %v594 = vadd.f32 %v578, 1.0
    %v595 = vadd.f32 %v579, 1.0
    %v596 = vadd.f32 %v580, 1.0
    %v597 = vadd.f32 %v581, 1.0
    %v598 = vadd.f32 %v582, 1.0
    %v599 = vmul.f32 %v471, %v583
    %v600 = vmul.f32 %v472, %v584
    %v601 = vmul.f32 %v473, %v585
    %v602 = vmul.f32 %v474, %v586
    %v603 = vmul.f32 %v475, %v587
    %v604 = vmul.f32 %v476, %v588
    %v605 = vmul.f32 %v477, %v589
    %v606 = vmul.f32 %v478, %v590
    %v607 = vmul.f32 %v479, %v591
    %v608 = vmul.f32 %v480, %v592
    %v609 = vmul.f32 %v481, %v593
    %v610 = vmul.f32 %v482, %v594
    %v611 = vmul.f32 %v483, %v595
    %v612 = vmul.f32 %v484, %v596
    %v613 = vmul.f32 %v485, %v597
    %v614 = vmul.f32 %v486, %v598
    %v615 = vpack.c.bf16 %v603, %v599
    %v616 = vpack.c.bf16 %v604, %v600
    %v617 = vpack.c.bf16 %v605, %v601
    %v618 = vpack.c.bf16 %v606, %v602
    %v619 = vpack.c.bf16 %v611, %v607
    %v620 = vpack.c.bf16 %v612, %v608
    %v621 = vpack.c.bf16 %v613, %v609
    %v622 = vpack.c.bf16 %v614, %v610
    %v631 = vunpack.c.l.b16 %v615
    %v632 = vunpack.c.l.b16 %v616
    %v633 = vunpack.c.l.b16 %v617
    %v634 = vunpack.c.l.b16 %v618
    %v635 = vunpack.c.h.b16 %v615
    %v636 = vunpack.c.h.b16 %v616
    %v637 = vunpack.c.h.b16 %v617
    %v638 = vunpack.c.h.b16 %v618
    %v639 = vunpack.c.l.b16 %v619
    %v640 = vunpack.c.l.b16 %v620
    %v641 = vunpack.c.l.b16 %v621
    %v642 = vunpack.c.l.b16 %v622
    %v643 = vunpack.c.h.b16 %v619
    %v644 = vunpack.c.h.b16 %v620
    %v645 = vunpack.c.h.b16 %v621
    %v646 = vunpack.c.h.b16 %v622
    %v647 = vpack.c.b16 %v632, %v631
    %v648 = vpack.c.b16 %v634, %v633
    %v649 = vpack.c.b16 %v636, %v635
    %v650 = vpack.c.b16 %v638, %v637
    %v651 = vpack.c.b16 %v640, %v639
    %v652 = vpack.c.b16 %v642, %v641
    %v653 = vpack.c.b16 %v644, %v643
    %v654 = vpack.c.b16 %v646, %v645
    %663 = vst [vmem:[%s3] sm:$0xff] %v647
    %664 = vst [vmem:[%s3 + $0x8] sm:$0xff] %v648
    %665 = vst [vmem:[%s3 + $0x10] sm:$0xff] %v649
    %666 = vst [vmem:[%s3 + $0x18] sm:$0xff] %v650
    %667 = vst [vmem:[%s3 + $0x20] sm:$0xff] %v651
    %668 = vst [vmem:[%s3 + $0x28] sm:$0xff] %v652
    %669 = vst [vmem:[%s3 + $0x30] sm:$0xff] %v653
    %670 = vst [vmem:[%s3 + $0x38] sm:$0xff] %v654
  $region21: #{bert_for_qa.15} parent=0 // pred_fallthru
    _
  // Predicated region
  $region22: #{bert_for_qa.15} parent=0 // pred_check
    _
  $region23: #{bert_for_qa.15} parent=0 // pred_check_branch
    %672 = sbr.rel (0) target = $region25
  $region24: #{bert_for_qa.15} parent=0 // pred_region
    _
  $region25: #{bert_for_qa.15} parent=0 // pred_fallthru
    _
  // Predicated region
  $region26: #{bert_for_qa.15} parent=0 // pred_check
    _
  $region27: #{bert_for_qa.15} parent=0 // pred_check_branch
    %674 = sbr.rel (0) target = $region29
  $region28: #{bert_for_qa.15} parent=0 // pred_region
    _
  $region29: #{bert_for_qa.15} parent=0 // pred_fallthru
    _

// kernel: bert_for_qa.21
$region0: #{bert_for_qa.21}
  #allocation0 [shape = 'u32[]', space=smem, size = 0x4, offset = 0x4, fixed_abs, tag = 'smem constant byte address 0x4 - core index']
  #allocation1 [shape = 'u32[144,128]{1,0:T(1,128)}', space=vmem, size = 0x12000, scoped, tag = 'internal scratch']
  #allocation2 [shape = 'f32[32,128]{1,0:T(8,128)}', space=vmem, size = 0x4000, scoped, tag = 'scratch operand']
  %s0 = inlined_call_operand.vmem [shape: bf16[32,512], index: 0, kind: input, shape index: {}]
  %s1 = inlined_call_operand.vmem [shape: bf16[512,128], index: 1, kind: input, shape index: {}]
  %s2 = inlined_call_operand.vmem [shape: bf16[1,128], index: 2, kind: input, shape index: {}]
  %s3 = inlined_call_operand.vmem [shape: bf16[32,128], index: 3, kind: input, shape index: {}]
  %s4 = inlined_call_operand.vmem [shape: f32[1,128], index: 4, kind: input, shape index: {}]
  %s5 = inlined_call_operand.vmem [shape: f32[1,128], index: 5, kind: input, shape index: {}]
  %s6 = inlined_call_operand.vmem [shape: bf16[128,128], index: 6, kind: input, shape index: {}]
  %s7 = inlined_call_operand.vmem [shape: f32[1,128], index: 7, kind: input, shape index: {}]
  %s8 = inlined_call_operand.hbm [shape: bf16[32,128], index: 8, kind: output, shape index: {0}]
  %s9 = inlined_call_operand.vmem [shape: f32[32,128], index: 9, kind: output, shape index: {1}]
  %10 = xla_tuple %s8, %s9
  %s11 = sld [smem:[#allocation0]]
  $region58: #{bert_for_qa.21} parent=0
    _
  %s13 = ssub.s32 1, %s11
  %s14 = scalar_select 0, %s13, %s11
  $region1: #{bert_for_qa.21} parent=0
    #allocation3 [shape = 'u8[8192]{0}', space=vmem, size = 0x2000, scoped, tag = 'output window, operand 0, single buffered']
    #allocation4 [shape = 's32[1]{0}', space=sflag, size = 0x4, scoped, tag = 'scoped memory for bert_for_qa.21']
    %15 = vsyncpa [#allocation4], 0
    // Predicated region
    $region2: #{bert_for_qa.21} parent=1 // pred_check
      _
    $region3: #{bert_for_qa.21} parent=1 // pred_check_branch
      %17 = sbr.rel (0) target = $region5
    $region4: #{bert_for_qa.21} parent=1 // pred_region
      _
    $region5: #{bert_for_qa.21} parent=1 // pred_fallthru
      _
    // Predicated region
    $region6: #{bert_for_qa.21} parent=1 // pred_check
      _
    $region7: #{bert_for_qa.21} parent=1 // pred_check_branch
      %19 = sbr.rel (0) target = $region9
    $region8: #{bert_for_qa.21} parent=1 // pred_region
      _
    $region9: #{bert_for_qa.21} parent=1 // pred_fallthru
      _
    // Predicated region
    $region10: #{bert_for_qa.21} parent=1 // pred_check
      _
    $region11: #{bert_for_qa.21} parent=1 // pred_check_branch
      %21 = sbr.rel (0) target = $region13
    $region12: #{bert_for_qa.21} parent=1 // pred_region
      _
    $region13: #{bert_for_qa.21} parent=1 // pred_fallthru
      _
    // Predicated region
    $region14: #{bert_for_qa.21} parent=1 // pred_check
      _
    $region15: #{bert_for_qa.21} parent=1 // pred_check_branch
      %23 = sbr.rel (0) target = $region17
    $region16: #{bert_for_qa.21} parent=1 // pred_region
      _
    $region17: #{bert_for_qa.21} parent=1 // pred_fallthru
      _
    // Predicated region
    $region18: #{bert_for_qa.21} parent=1 // pred_check
      _
    $region19: #{bert_for_qa.21} parent=1 // pred_check_branch
      %25 = sbr.rel (0) target = $region21
    $region20: #{bert_for_qa.21} parent=1 // pred_region
      _
    $region21: #{bert_for_qa.21} parent=1 // pred_fallthru
      _
    // Predicated region
    $region22: #{bert_for_qa.21} parent=1 // pred_check
      _
    $region23: #{bert_for_qa.21} parent=1 // pred_check_branch
      %27 = sbr.rel (0) target = $region25
    $region24: #{bert_for_qa.21} parent=1 // pred_region
      _
    $region25: #{bert_for_qa.21} parent=1 // pred_fallthru
      _
    // Predicated region
    $region26: #{bert_for_qa.21} parent=1 // pred_check
      _
    $region27: #{bert_for_qa.21} parent=1 // pred_check_branch
      %29 = sbr.rel (0) target = $region29
    $region28: #{bert_for_qa.21} parent=1 // pred_region
      _
    $region29: #{bert_for_qa.21} parent=1 // pred_fallthru
      _
    // Predicated region
    $region30: #{bert_for_qa.21} parent=1 // pred_check
      _
    $region31: #{bert_for_qa.21} parent=1 // pred_check_branch
      %31 = sbr.rel (0) target = $region33
    $region32: #{bert_for_qa.21} parent=1 // pred_region
      _
    $region33: #{bert_for_qa.21} parent=1 // pred_fallthru
      _
    %p33 = scmp.eq.s32.totalorder 0, 0
    // Predicated region
    $region34: #{bert_for_qa.21} parent=1 // pred_check
      %p34 = pneg %p33
    $region35: #{bert_for_qa.21} parent=1 // pred_check_branch
      %36 = sbr.rel (%p34) target = $region37
    $region36: #{bert_for_qa.21} parent=1 // pred_region
      %37 = vst [vmem:[#allocation2] sm:$0xff] 0.0
      %38 = vst [vmem:[#allocation2 + $0x8] sm:$0xff] 0.0
      %39 = vst [vmem:[#allocation2 + $0x10] sm:$0xff] 0.0
      %40 = vst [vmem:[#allocation2 + $0x18] sm:$0xff] 0.0
    $region37: #{bert_for_qa.21} parent=1 // pred_fallthru
      _
    %v41 = vld [vmem:[#allocation2] sm:$0xff]
    %v42 = vld [vmem:[#allocation2 + $0x8] sm:$0xff]
    %v43 = vld [vmem:[#allocation2 + $0x10] sm:$0xff]
    %v44 = vld [vmem:[#allocation2 + $0x18] sm:$0xff]
    %v45 = vld [vmem:[%s0] sm:$0xff]
    %v46 = vld [vmem:[%s0 + $0x8] sm:$0xff]
    %v47 = vld [vmem:[%s0 + $0x10] sm:$0xff]
    %v48 = vld [vmem:[%s0 + $0x18] sm:$0xff]
    %v49 = vld [vmem:[%s0 + $0x20] sm:$0xff]
    %v50 = vld [vmem:[%s0 + $0x28] sm:$0xff]
    %v51 = vld [vmem:[%s0 + $0x30] sm:$0xff]
    %v52 = vld [vmem:[%s0 + $0x38] sm:$0xff]
    %v53 = vld [vmem:[%s1] sm:$0xf]
    %v54 = vld [vmem:[%s1 + $0x4] sm:$0xf]
    %v55 = vld [vmem:[%s1 + $0x8] sm:$0xf]
    %v56 = vld [vmem:[%s1 + $0xc] sm:$0xf]
    %v57 = vld [vmem:[%s1 + $0x10] sm:$0xf]
    %v58 = vld [vmem:[%s1 + $0x14] sm:$0xf]
    %v59 = vld [vmem:[%s1 + $0x18] sm:$0xf]
    %v60 = vld [vmem:[%s1 + $0x1c] sm:$0xf]
    %v61 = vld [vmem:[%s1 + $0x20] sm:$0xf]
    %v62 = vld [vmem:[%s1 + $0x24] sm:$0xf]
    %v63 = vld [vmem:[%s1 + $0x28] sm:$0xf]
    %v64 = vld [vmem:[%s1 + $0x2c] sm:$0xf]
    %v65 = vld [vmem:[%s1 + $0x30] sm:$0xf]
    %v66 = vld [vmem:[%s1 + $0x34] sm:$0xf]
    %v67 = vld [vmem:[%s1 + $0x38] sm:$0xf]
    %v68 = vld [vmem:[%s1 + $0x3c] sm:$0xf]
    %v69 = vld [vmem:[%s1 + $0x40] sm:$0xf]
    %v70 = vld [vmem:[%s1 + $0x44] sm:$0xf]
    %v71 = vld [vmem:[%s1 + $0x48] sm:$0xf]
    %v72 = vld [vmem:[%s1 + $0x4c] sm:$0xf]
    %v73 = vld [vmem:[%s1 + $0x50] sm:$0xf]
    %v74 = vld [vmem:[%s1 + $0x54] sm:$0xf]
    %v75 = vld [vmem:[%s1 + $0x58] sm:$0xf]
    %v76 = vld [vmem:[%s1 + $0x5c] sm:$0xf]
    %v77 = vld [vmem:[%s1 + $0x60] sm:$0xf]
    %v78 = vld [vmem:[%s1 + $0x64] sm:$0xf]
    %v79 = vld [vmem:[%s1 + $0x68] sm:$0xf]
    %v80 = vld [vmem:[%s1 + $0x6c] sm:$0xf]
    %v81 = vld [vmem:[%s1 + $0x70] sm:$0xf]
    %v82 = vld [vmem:[%s1 + $0x74] sm:$0xf]
    %v83 = vld [vmem:[%s1 + $0x78] sm:$0xf]
    %v84 = vld [vmem:[%s1 + $0x7c] sm:$0xf]
    %v85 = vld [vmem:[%s1 + $0x80] sm:$0xf]
    %v86 = vld [vmem:[%s1 + $0x84] sm:$0xf]
    %v87 = vld [vmem:[%s1 + $0x88] sm:$0xf]
    %v88 = vld [vmem:[%s1 + $0x8c] sm:$0xf]
    %v89 = vld [vmem:[%s1 + $0x90] sm:$0xf]
    %v90 = vld [vmem:[%s1 + $0x94] sm:$0xf]
    %v91 = vld [vmem:[%s1 + $0x98] sm:$0xf]
    %v92 = vld [vmem:[%s1 + $0x9c] sm:$0xf]
    %v93 = vld [vmem:[%s1 + $0xa0] sm:$0xf]
    %v94 = vld [vmem:[%s1 + $0xa4] sm:$0xf]
    %v95 = vld [vmem:[%s1 + $0xa8] sm:$0xf]
    %v96 = vld [vmem:[%s1 + $0xac] sm:$0xf]
    %v97 = vld [vmem:[%s1 + $0xb0] sm:$0xf]
    %v98 = vld [vmem:[%s1 + $0xb4] sm:$0xf]
    %v99 = vld [vmem:[%s1 + $0xb8] sm:$0xf]
    %v100 = vld [vmem:[%s1 + $0xbc] sm:$0xf]
    %v101 = vld [vmem:[%s1 + $0xc0] sm:$0xf]
    %v102 = vld [vmem:[%s1 + $0xc4] sm:$0xf]
    %v103 = vld [vmem:[%s1 + $0xc8] sm:$0xf]
    %v104 = vld [vmem:[%s1 + $0xcc] sm:$0xf]
    %v105 = vld [vmem:[%s1 + $0xd0] sm:$0xf]
    %v106 = vld [vmem:[%s1 + $0xd4] sm:$0xf]
    %v107 = vld [vmem:[%s1 + $0xd8] sm:$0xf]
    %v108 = vld [vmem:[%s1 + $0xdc] sm:$0xf]
    %v109 = vld [vmem:[%s1 + $0xe0] sm:$0xf]
    %v110 = vld [vmem:[%s1 + $0xe4] sm:$0xf]
    %v111 = vld [vmem:[%s1 + $0xe8] sm:$0xf]
    %v112 = vld [vmem:[%s1 + $0xec] sm:$0xf]
    %v113 = vld [vmem:[%s1 + $0xf0] sm:$0xf]
    %v114 = vld [vmem:[%s1 + $0xf4] sm:$0xf]
    %v115 = vld [vmem:[%s1 + $0xf8] sm:$0xf]
    %v116 = vld [vmem:[%s1 + $0xfc] sm:$0xf]
    %v125 = vunpack.c.l.b16 %v45
    %v126 = vunpack.c.h.b16 %v45
    %v127 = vunpack.c.l.b16 %v46
    %v128 = vunpack.c.h.b16 %v46
    %v129 = vunpack.c.l.b16 %v47
    %v130 = vunpack.c.h.b16 %v47
    %v131 = vunpack.c.l.b16 %v48
    %v132 = vunpack.c.h.b16 %v48
    %v133 = vunpack.c.l.b16 %v49
    %v134 = vunpack.c.h.b16 %v49
    %v135 = vunpack.c.l.b16 %v50
    %v136 = vunpack.c.h.b16 %v50
    %v137 = vunpack.c.l.b16 %v51
    %v138 = vunpack.c.h.b16 %v51
    %v139 = vunpack.c.l.b16 %v52
    %v140 = vunpack.c.h.b16 %v52
    %v141 = vpack.c.b16 %v129, %v125
    %v142 = vpack.c.b16 %v130, %v126
    %v143 = vpack.c.b16 %v131, %v127
    %v144 = vpack.c.b16 %v132, %v128
    %v145 = vpack.c.b16 %v137, %v133
    %v146 = vpack.c.b16 %v138, %v134
    %v147 = vpack.c.b16 %v139, %v135
    %v148 = vpack.c.b16 %v140, %v136
    %v221 = vunpack.c.l.b16 %v53
    %v222 = vunpack.c.l.b16 %v54
    %v223 = vunpack.c.l.b16 %v55
    %v224 = vunpack.c.l.b16 %v56
    %v225 = vunpack.c.l.b16 %v57
    %v226 = vunpack.c.l.b16 %v58
    %v227 = vunpack.c.l.b16 %v59
    %v228 = vunpack.c.l.b16 %v60
    %v229 = vunpack.c.l.b16 %v61
    %v230 = vunpack.c.l.b16 %v62
    %v231 = vunpack.c.l.b16 %v63
    %v232 = vunpack.c.l.b16 %v64
    %v233 = vunpack.c.l.b16 %v65
    %v234 = vunpack.c.l.b16 %v66
    %v235 = vunpack.c.l.b16 %v67
    %v236 = vunpack.c.l.b16 %v68
    %v237 = vunpack.c.l.b16 %v69
    %v238 = vunpack.c.l.b16 %v70
    %v239 = vunpack.c.l.b16 %v71
    %v240 = vunpack.c.l.b16 %v72
    %v241 = vunpack.c.l.b16 %v73
    %v242 = vunpack.c.l.b16 %v74
    %v243 = vunpack.c.l.b16 %v75
    %v244 = vunpack.c.l.b16 %v76
    %v245 = vunpack.c.l.b16 %v77
    %v246 = vunpack.c.l.b16 %v78
    %v247 = vunpack.c.l.b16 %v79
    %v248 = vunpack.c.l.b16 %v80
    %v249 = vunpack.c.l.b16 %v81
    %v250 = vunpack.c.l.b16 %v82
    %v251 = vunpack.c.l.b16 %v83
    %v252 = vunpack.c.l.b16 %v84
    %v253 = vunpack.c.l.b16 %v85
    %v254 = vunpack.c.l.b16 %v86
    %v255 = vunpack.c.l.b16 %v87
    %v256 = vunpack.c.l.b16 %v88
    %v257 = vunpack.c.l.b16 %v89
    %v258 = vunpack.c.l.b16 %v90
    %v259 = vunpack.c.l.b16 %v91
    %v260 = vunpack.c.l.b16 %v92
    %v261 = vunpack.c.l.b16 %v93
    %v262 = vunpack.c.l.b16 %v94
    %v263 = vunpack.c.l.b16 %v95
    %v264 = vunpack.c.l.b16 %v96
    %v265 = vunpack.c.l.b16 %v97
    %v266 = vunpack.c.l.b16 %v98
    %v267 = vunpack.c.l.b16 %v99
    %v268 = vunpack.c.l.b16 %v100
    %v269 = vunpack.c.l.b16 %v101
    %v270 = vunpack.c.l.b16 %v102
    %v271 = vunpack.c.l.b16 %v103
    %v272 = vunpack.c.l.b16 %v104
    %v273 = vunpack.c.l.b16 %v105
    %v274 = vunpack.c.l.b16 %v106
    %v275 = vunpack.c.l.b16 %v107
    %v276 = vunpack.c.l.b16 %v108
    %v277 = vunpack.c.l.b16 %v109
    %v278 = vunpack.c.l.b16 %v110
    %v279 = vunpack.c.l.b16 %v111
    %v280 = vunpack.c.l.b16 %v112
    %v281 = vunpack.c.l.b16 %v113
    %v282 = vunpack.c.l.b16 %v114
    %v283 = vunpack.c.l.b16 %v115
    %v284 = vunpack.c.l.b16 %v116
    %v285 = vpack.c.b16 %v222, %v221
    %v286 = vpack.c.b16 %v224, %v223
    %v287 = vpack.c.b16 %v226, %v225
    %v288 = vpack.c.b16 %v228, %v227
    %v289 = vpack.c.b16 %v230, %v229
    %v290 = vpack.c.b16 %v232, %v231
    %v291 = vpack.c.b16 %v234, %v233
    %v292 = vpack.c.b16 %v236, %v235
    %v293 = vpack.c.b16 %v238, %v237
    %v294 = vpack.c.b16 %v240, %v239
    %v295 = vpack.c.b16 %v242, %v241
    %v296 = vpack.c.b16 %v244, %v243
    %v297 = vpack.c.b16 %v246, %v245
    %v298 = vpack.c.b16 %v248, %v247
    %v299 = vpack.c.b16 %v250, %v249
    %v300 = vpack.c.b16 %v252, %v251
    %v301 = vpack.c.b16 %v254, %v253
    %v302 = vpack.c.b16 %v256, %v255
    %v303 = vpack.c.b16 %v258, %v257
    %v304 = vpack.c.b16 %v260, %v259
    %v305 = vpack.c.b16 %v262, %v261
    %v306 = vpack.c.b16 %v264, %v263
    %v307 = vpack.c.b16 %v266, %v265
    %v308 = vpack.c.b16 %v268, %v267
    %v309 = vpack.c.b16 %v270, %v269
    %v310 = vpack.c.b16 %v272, %v271
    %v311 = vpack.c.b16 %v274, %v273
    %v312 = vpack.c.b16 %v276, %v275
    %v313 = vpack.c.b16 %v278, %v277
    %v314 = vpack.c.b16 %v280, %v279
    %v315 = vpack.c.b16 %v282, %v281
    %v316 = vpack.c.b16 %v284, %v283
    %349 = vmatprep.subr.bf16.mxu0 0
    %350 = vmatpush1.bf16.msra.mxu0 %v285
    %351 = vmatprep.subr.bf16.mxu0 0
    %352 = vmatpush1.bf16.msra.mxu0 %v286
    %353 = vmatprep.subr.bf16.mxu0 0
    %354 = vmatpush1.bf16.msra.mxu0 %v287
    %355 = vmatprep.subr.bf16.mxu0 0
    %356 = vmatpush1.bf16.msra.mxu0 %v288
    %357 = vmatprep.subr.bf16.mxu0 0
    %358 = vmatpush1.bf16.msra.mxu0 %v289
    %359 = vmatprep.subr.bf16.mxu0 0
    %360 = vmatpush1.bf16.msra.mxu0 %v290
    %361 = vmatprep.subr.bf16.mxu0 0
    %362 = vmatpush1.bf16.msra.mxu0 %v291
    %363 = vmatprep.subr.bf16.mxu0 0
    %364 = vmatpush1.bf16.msra.mxu0 %v292
    %365 = vmatprep.subr.bf16.mxu0 0
    %366 = vmatpush1.bf16.msra.mxu0 %v293
    %367 = vmatprep.subr.bf16.mxu0 0
    %368 = vmatpush1.bf16.msra.mxu0 %v294
    %369 = vmatprep.subr.bf16.mxu0 0
    %370 = vmatpush1.bf16.msra.mxu0 %v295
    %371 = vmatprep.subr.bf16.mxu0 0
    %372 = vmatpush1.bf16.msra.mxu0 %v296
    %373 = vmatprep.subr.bf16.mxu0 0
    %374 = vmatpush1.bf16.msra.mxu0 %v297
    %375 = vmatprep.subr.bf16.mxu0 0
    %376 = vmatpush1.bf16.msra.mxu0 %v298
    %377 = vmatprep.subr.bf16.mxu0 0
    %378 = vmatpush1.bf16.msra.mxu0 %v299
    %379 = vmatprep.subr.bf16.mxu0 0
    %380 = vmatpush1.bf16.msra.mxu0 %v300
    %381 = vmatprep.mubr.bf16.mxu0 %v142
    %382 = vmatmul.mubr.bf16.gmra.mrb[0].mxu0 %v141
    %v383 = vpop.f32.mrb[0].mxu0
    %v384 = vadd.f32 0.0, %v383
    %v385 = vpop.f32.mrb[0].mxu0
    %v386 = vpop.f32.mrb[0].mxu0
    %v387 = vadd.f32 0.0, %v386
    %v388 = vpop.f32.mrb[0].mxu0
    %389 = vmatprep.mubr.bf16.mxu0 %v146
    %390 = vmatmul.mubr.bf16.gmra.mrb[0].mxu0 %v145
    %v391 = vpop.f32.mrb[0].mxu0
    %v392 = vadd.f32 0.0, %v391
    %v393 = vpop.f32.mrb[0].mxu0
    %v394 = vpop.f32.mrb[0].mxu0
    %v395 = vadd.f32 0.0, %v394
    %v396 = vpop.f32.mrb[0].mxu0
    %397 = vdwg.mxu0
    %398 = vmatprep.subr.bf16.mxu0 0
    %399 = vmatpush1.bf16.msra.mxu0 %v301
    %400 = vmatprep.subr.bf16.mxu0 0
    %401 = vmatpush1.bf16.msra.mxu0 %v302
    %402 = vmatprep.subr.bf16.mxu0 0
    %403 = vmatpush1.bf16.msra.mxu0 %v303
    %404 = vmatprep.subr.bf16.mxu0 0
    %405 = vmatpush1.bf16.msra.mxu0 %v304
    %406 = vmatprep.subr.bf16.mxu0 0
    %407 = vmatpush1.bf16.msra.mxu0 %v305
    %408 = vmatprep.subr.bf16.mxu0 0
    %409 = vmatpush1.bf16.msra.mxu0 %v306
    %410 = vmatprep.subr.bf16.mxu0 0
    %411 = vmatpush1.bf16.msra.mxu0 %v307
    %412 = vmatprep.subr.bf16.mxu0 0
    %413 = vmatpush1.bf16.msra.mxu0 %v308
    %414 = vmatprep.subr.bf16.mxu0 0
    %415 = vmatpush1.bf16.msra.mxu0 %v309
    %416 = vmatprep.subr.bf16.mxu0 0
    %417 = vmatpush1.bf16.msra.mxu0 %v310
    %418 = vmatprep.subr.bf16.mxu0 0
    %419 = vmatpush1.bf16.msra.mxu0 %v311
    %420 = vmatprep.subr.bf16.mxu0 0
    %421 = vmatpush1.bf16.msra.mxu0 %v312
    %422 = vmatprep.subr.bf16.mxu0 0
    %423 = vmatpush1.bf16.msra.mxu0 %v313
    %424 = vmatprep.subr.bf16.mxu0 0
    %425 = vmatpush1.bf16.msra.mxu0 %v314
    %426 = vmatprep.subr.bf16.mxu0 0
    %427 = vmatpush1.bf16.msra.mxu0 %v315
    %428 = vmatprep.subr.bf16.mxu0 0
    %429 = vmatpush1.bf16.msra.mxu0 %v316
    %430 = vmatprep.mubr.bf16.mxu0 %v144
    %431 = vmatmul.mubr.bf16.gmra.mrb[0].mxu0 %v143
    %v432 = vpop.f32.mrb[0].mxu0
    %v433 = vadd.f32 %v384, %v432
    %v434 = vpop.f32.mrb[0].mxu0
    %v435 = vpop.f32.mrb[0].mxu0
    %v436 = vadd.f32 %v387, %v435
    %v437 = vpop.f32.mrb[0].mxu0
    %438 = vmatprep.mubr.bf16.mxu0 %v148
    %439 = vmatmul.mubr.bf16.gmra.mrb[0].mxu0 %v147
    %v440 = vpop.f32.mrb[0].mxu0
    %v441 = vadd.f32 %v392, %v440
    %v442 = vpop.f32.mrb[0].mxu0
    %v443 = vpop.f32.mrb[0].mxu0
    %v444 = vadd.f32 %v395, %v443
    %v445 = vpop.f32.mrb[0].mxu0
    %446 = vdwg.mxu0
    %v447 = vadd.f32 %v41, %v433
    %v448 = vadd.f32 %v42, %v436
    %v449 = vadd.f32 %v43, %v441
    %v450 = vadd.f32 %v44, %v444
    %451 = vst [vmem:[#allocation2] sm:$0xff] %v447
    %452 = vst [vmem:[#allocation2 + $0x8] sm:$0xff] %v448
    %453 = vst [vmem:[#allocation2 + $0x10] sm:$0xff] %v449
    %454 = vst [vmem:[#allocation2 + $0x18] sm:$0xff] %v450
    // Predicated region
    $region38: #{bert_for_qa.21} parent=1 // pred_check
      %p455 = pneg %p33
    $region39: #{bert_for_qa.21} parent=1 // pred_check_branch
      %457 = sbr.rel (%p455) target = $region41
    $region40: #{bert_for_qa.21} parent=1 // pred_region
      %v458 = vld [vmem:[#allocation2] sm:$0xff]
      %v459 = vld [vmem:[#allocation2 + $0x8] sm:$0xff]
      %v460 = vld [vmem:[#allocation2 + $0x10] sm:$0xff]
      %v461 = vld [vmem:[#allocation2 + $0x18] sm:$0xff]
      %v462 = vld [vmem:[%s2] sm:$0x1]
      %v463 = vunpack.c.l.bf16 %v462
      %v464 = vlaneseq
      %v465 = vshrl.u32 %v464, 7
      %v466 = vsub.s32 0, %v465
      %v467 = vrot.slane %v463, %v466
      %v468 = vadd.f32 %v458, %v467
      %v469 = vadd.f32 %v459, %v467
      %v470 = vadd.f32 %v460, %v467
      %v471 = vadd.f32 %v461, %v467
      %v472 = vld [vmem:[%s3] sm:$0xf]
      %v473 = vld [vmem:[%s3 + $0x4] sm:$0xf]
      %v474 = vld [vmem:[%s3 + $0x8] sm:$0xf]
      %v475 = vld [vmem:[%s3 + $0xc] sm:$0xf]
      %v476 = vunpack.c.l.bf16 %v472
      %v477 = vunpack.c.l.bf16 %v473
      %v478 = vunpack.c.l.bf16 %v474
      %v479 = vunpack.c.l.bf16 %v475
      %v480 = vadd.f32 %v468, %v476
      %v481 = vadd.f32 %v469, %v477
      %v482 = vadd.f32 %v470, %v478
      %v483 = vadd.f32 %v471, %v479
      %484 = vadd.xlane.f32.xlu0 %v480
      %v485 = vpop.xlane.xlu0 %484
      %486 = vadd.xlane.f32.xlu0 %v481
      %v487 = vpop.xlane.xlu0 %486
      %488 = vadd.xlane.f32.xlu0 %v482
      %v489 = vpop.xlane.xlu0 %488
      %490 = vadd.xlane.f32.xlu0 %v483
      %v491 = vpop.xlane.xlu0 %490
      %v492 = vrcp.pop 128.0
      %v493 = vmul.f32 %v485, %v492
      %v494 = vmul.f32 %v487, %v492
      %v495 = vmul.f32 %v489, %v492
      %v496 = vmul.f32 %v491, %v492
      %v497 = vsub.f32 %v480, %v493
      %v498 = vsub.f32 %v481, %v494
      %v499 = vsub.f32 %v482, %v495
      %v500 = vsub.f32 %v483, %v496
      %v501 = vmul.f32 %v497, %v497
      %v502 = vmul.f32 %v498, %v498
      %v503 = vmul.f32 %v499, %v499
      %v504 = vmul.f32 %v500, %v500
      %505 = vadd.xlane.f32.xlu0 %v501
      %v506 = vpop.xlane.xlu0 %505
      %507 = vadd.xlane.f32.xlu0 %v502
      %v508 = vpop.xlane.xlu0 %507
      %509 = vadd.xlane.f32.xlu0 %v503
      %v510 = vpop.xlane.xlu0 %509
      %511 = vadd.xlane.f32.xlu0 %v504
      %v512 = vpop.xlane.xlu0 %511
      %v513 = vmul.f32 %v506, %v492
      %v514 = vmul.f32 %v508, %v492
      %v515 = vmul.f32 %v510, %v492
      %v516 = vmul.f32 %v512, %v492
      %v517 = vadd.f32 %v513, 1e-12
      %v518 = vadd.f32 %v514, 1e-12
      %v519 = vadd.f32 %v515, 1e-12
      %v520 = vadd.f32 %v516, 1e-12
      %v521 = vrsqrt.pop %v517
      %v522 = vrsqrt.pop %v518
      %v523 = vrsqrt.pop %v519
      %v524 = vrsqrt.pop %v520
      %v525 = vmul.f32 %v497, %v521
      %v526 = vmul.f32 %v498, %v522
      %v527 = vmul.f32 %v499, %v523
      %v528 = vmul.f32 %v500, %v524
      %v529 = vld [vmem:[%s4] sm:$0x1]
      %v531 = vlaneseq
      %v532 = vshrl.u32 %v531, 7
      %v533 = vsub.s32 0, %v532
      %v534 = vrot.slane %v529, %v533
      %v536 = vmul.f32 %v525, %v534
      %v537 = vmul.f32 %v526, %v534
      %v538 = vmul.f32 %v527, %v534
      %v539 = vmul.f32 %v528, %v534
      %v540 = vld [vmem:[%s5] sm:$0x1]
      %v542 = vlaneseq
      %v543 = vshrl.u32 %v542, 7
      %v544 = vsub.s32 0, %v543
      %v545 = vrot.slane %v540, %v544
      %v547 = vadd.f32 %v536, %v545
      %v548 = vadd.f32 %v537, %v545
      %v549 = vadd.f32 %v538, %v545
      %v550 = vadd.f32 %v539, %v545
      %v551 = vpack.c.bf16 %v548, %v547
      %v552 = vpack.c.bf16 %v550, %v549
      %v555 = vunpack.c.l.b16 %v551
      %v556 = vunpack.c.h.b16 %v551
      %v557 = vunpack.c.l.b16 %v552
      %v558 = vunpack.c.h.b16 %v552
      %v559 = vpack.c.b16 %v555, %v555
      %v560 = vpack.c.b16 %v556, %v556
      %v561 = vpack.c.b16 %v557, %v557
      %v562 = vpack.c.b16 %v558, %v558
      %567 = vst [vmem:[#allocation3] sm:$0xf] %v559
      %568 = vst [vmem:[#allocation3 + $0x4] sm:$0xf] %v560
      %569 = vst [vmem:[#allocation3 + $0x8] sm:$0xf] %v561
      %570 = vst [vmem:[#allocation3 + $0xc] sm:$0xf] %v562
      %v571 = vld [vmem:[%s6] sm:$0xf]
      %v572 = vld [vmem:[%s6 + $0x4] sm:$0xf]
      %v573 = vld [vmem:[%s6 + $0x8] sm:$0xf]
      %v574 = vld [vmem:[%s6 + $0xc] sm:$0xf]
      %v575 = vld [vmem:[%s6 + $0x10] sm:$0xf]
      %v576 = vld [vmem:[%s6 + $0x14] sm:$0xf]
      %v577 = vld [vmem:[%s6 + $0x18] sm:$0xf]
      %v578 = vld [vmem:[%s6 + $0x1c] sm:$0xf]
      %v579 = vld [vmem:[%s6 + $0x20] sm:$0xf]
      %v580 = vld [vmem:[%s6 + $0x24] sm:$0xf]
      %v581 = vld [vmem:[%s6 + $0x28] sm:$0xf]
      %v582 = vld [vmem:[%s6 + $0x2c] sm:$0xf]
      %v583 = vld [vmem:[%s6 + $0x30] sm:$0xf]
      %v584 = vld [vmem:[%s6 + $0x34] sm:$0xf]
      %v585 = vld [vmem:[%s6 + $0x38] sm:$0xf]
      %v586 = vld [vmem:[%s6 + $0x3c] sm:$0xf]
      %v587 = vld [vmem:[%s7] sm:$0x1]
      %v589 = vlaneseq
      %v590 = vshrl.u32 %v589, 7
      %v591 = vsub.s32 0, %v590
      %v592 = vrot.slane %v587, %v591
      %v610 = vunpack.c.l.b16 %v571
      %v611 = vunpack.c.l.b16 %v572
      %v612 = vunpack.c.l.b16 %v573
      %v613 = vunpack.c.l.b16 %v574
      %v614 = vunpack.c.l.b16 %v575
      %v615 = vunpack.c.l.b16 %v576
      %v616 = vunpack.c.l.b16 %v577
      %v617 = vunpack.c.l.b16 %v578
      %v618 = vunpack.c.l.b16 %v579
      %v619 = vunpack.c.l.b16 %v580
      %v620 = vunpack.c.l.b16 %v581
      %v621 = vunpack.c.l.b16 %v582
      %v622 = vunpack.c.l.b16 %v583
      %v623 = vunpack.c.l.b16 %v584
      %v624 = vunpack.c.l.b16 %v585
      %v625 = vunpack.c.l.b16 %v586
      %v626 = vpack.c.b16 %v611, %v610
      %v627 = vpack.c.b16 %v613, %v612
      %v628 = vpack.c.b16 %v615, %v614
      %v629 = vpack.c.b16 %v617, %v616
      %v630 = vpack.c.b16 %v619, %v618
      %v631 = vpack.c.b16 %v621, %v620
      %v632 = vpack.c.b16 %v623, %v622
      %v633 = vpack.c.b16 %v625, %v624
      %642 = vmatprep.subr.bf16.mxu0 0
      %643 = vmatpush1.bf16.msra.mxu0 %v626
      %644 = vmatprep.subr.bf16.mxu0 0
      %645 = vmatpush1.bf16.msra.mxu0 %v627
      %646 = vmatprep.subr.bf16.mxu0 0
      %647 = vmatpush1.bf16.msra.mxu0 %v628
      %648 = vmatprep.subr.bf16.mxu0 0
      %649 = vmatpush1.bf16.msra.mxu0 %v629
      %650 = vmatprep.subr.bf16.mxu0 0
      %651 = vmatpush1.bf16.msra.mxu0 %v630
      %652 = vmatprep.subr.bf16.mxu0 0
      %653 = vmatpush1.bf16.msra.mxu0 %v631
      %654 = vmatprep.subr.bf16.mxu0 0
      %655 = vmatpush1.bf16.msra.mxu0 %v632
      %656 = vmatprep.subr.bf16.mxu0 0
      %657 = vmatpush1.bf16.msra.mxu0 %v633
      %658 = vmatprep.subr.bf16.mxu0 0
      %659 = vmatpush1.bf16.msra.mxu0 0
      %660 = vmatprep.subr.bf16.mxu0 0
      %661 = vmatpush1.bf16.msra.mxu0 0
      %662 = vmatprep.subr.bf16.mxu0 0
      %663 = vmatpush1.bf16.msra.mxu0 0
      %664 = vmatprep.subr.bf16.mxu0 0
      %665 = vmatpush1.bf16.msra.mxu0 0
      %666 = vmatprep.subr.bf16.mxu0 0
      %667 = vmatpush1.bf16.msra.mxu0 0
      %668 = vmatprep.subr.bf16.mxu0 0
      %669 = vmatpush1.bf16.msra.mxu0 0
      %670 = vmatprep.subr.bf16.mxu0 0
      %671 = vmatpush1.bf16.msra.mxu0 0
      %672 = vmatprep.subr.bf16.mxu0 0
      %673 = vmatpush1.bf16.msra.mxu0 0
      %674 = vmatprep.mubr.bf16.mxu0 0
      %675 = vmatmul.mubr.bf16.gmra.mrb[0].mxu0 %v551
      %v676 = vpop.f32.mrb[0].mxu0
      %v677 = vadd.f32 %v592, %v676
      %v678 = vpop.f32.mrb[0].mxu0
      %v679 = vpop.f32.mrb[0].mxu0
      %v680 = vadd.f32 %v592, %v679
      %v681 = vpop.f32.mrb[0].mxu0
      %682 = vmatprep.mubr.bf16.mxu0 0
      %683 = vmatmul.mubr.bf16.gmra.mrb[0].mxu0 %v552
      %v684 = vpop.f32.mrb[0].mxu0
      %v685 = vadd.f32 %v592, %v684
      %v686 = vpop.f32.mrb[0].mxu0
      %v687 = vpop.f32.mrb[0].mxu0
      %v688 = vadd.f32 %v592, %v687
      %v689 = vpop.f32.mrb[0].mxu0
      %690 = vdwg.mxu0
      %691 = vst [vmem:[%s9] sm:$0xff] %v677
      %692 = vst [vmem:[%s9 + $0x8] sm:$0xff] %v680
      %693 = vst [vmem:[%s9 + $0x10] sm:$0xff] %v685
      %694 = vst [vmem:[%s9 + $0x18] sm:$0xff] %v688
    $region41: #{bert_for_qa.21} parent=1 // pred_fallthru
      _
    // Predicated region
    $region42: #{bert_for_qa.21} parent=1 // pred_check
      _
    $region43: #{bert_for_qa.21} parent=1 // pred_check_branch
      %696 = sbr.rel (0) target = $region45
    $region44: #{bert_for_qa.21} parent=1 // pred_region
      %s698 = ssub.s32 256, 256
      %699 = vsyncadd [#allocation4], %s698
      %s700 = sshll.u32 [#allocation3], 4
      %s701 = int_to_ptr.vmem [resolvable:$true] %s700
      %706 = dma.vmem_to_hbm [thread:$0]  %s701, 256, %s8, [#allocation4], 64, 64, 4
    $region45: #{bert_for_qa.21} parent=1 // pred_fallthru
      _
    // Predicated region
    $region46: #{bert_for_qa.21} parent=1 // pred_check
      _
    $region47: #{bert_for_qa.21} parent=1 // pred_check_branch
      %708 = sbr.rel (0) target = $region49
    $region48: #{bert_for_qa.21} parent=1 // pred_region
      _
    $region49: #{bert_for_qa.21} parent=1 // pred_fallthru
      _
    // Predicated region
    $region50: #{bert_for_qa.21} parent=1 // pred_check
      _
    $region51: #{bert_for_qa.21} parent=1 // pred_check_branch
      %710 = sbr.rel (0) target = $region53
    $region52: #{bert_for_qa.21} parent=1 // pred_region
      %711 = dma.done [#allocation4], 256
    $region53: #{bert_for_qa.21} parent=1 // pred_fallthru
      _
    // Predicated region
    $region54: #{bert_for_qa.21} parent=1 // pred_check
      _
    $region55: #{bert_for_qa.21} parent=1 // pred_check_branch
      %713 = sbr.rel (0) target = $region57
    $region56: #{bert_for_qa.21} parent=1 // pred_region
      _
    $region57: #{bert_for_qa.21} parent=1 // pred_fallthru
      _
    %714 = vsyncpa [#allocation4], 1

</llo_original>
